<compile_context>
chip_gen: v5e
topology: v5e:2x2
jax: 0.10.0
libtpu: 0.0.40
codegen_flags: <defaults>
</compile_context>

<pallas_src>
import math
import functools

import numpy as np
import jax
import jax.numpy as jnp
from jax import lax
from jax.experimental import pallas as pl
from jax.experimental.pallas import tpu as pltpu

LN_EPS = 1e-5
NEG_BIG = -1e30   # large finite negative (avoid -inf arithmetic edge cases)


def _layernorm(v, w, b):
    # Single-pass: var = E[x^2] - E[x]^2 (saves one cross-lane reduction + subtract).
    mu = jnp.mean(v, axis=-1, keepdims=True)
    ms = jnp.mean(v * v, axis=-1, keepdims=True)
    var = ms - mu * mu
    return (v - mu) * lax.rsqrt(var + LN_EPS) * w + b


def _gelu_tanh(v):
    # Matches the module's custom GELU: 0.5*x*(1+tanh(sqrt(2/pi)*(x+0.044715*x^3)))
    c = math.sqrt(2.0 / math.pi)
    return 0.5 * v * (1.0 + jnp.tanh(c * (v + 0.044715 * v * v * v)))


def block_kernel(x_ref, n1w_ref, n1b_ref, qkvw_ref, batmask_ref, headmask_ref,
                 pw_ref, pb_ref, n2w_ref, n2b_ref, fc1w_ref, fc1b_ref,
                 dwmask_ref, dww_ref, dwb_ref, fc2w_ref, fc2b_ref, out_ref,
                 *, W, num_heads):
    x = x_ref[...]                                    # (B*N, C) f32
    BN, C = x.shape
    hd = C // num_heads

    # ---------------- Attention branch: x + proj(attn(norm1(x))) -------------
    xn = _layernorm(x, n1w_ref[...], n1b_ref[...])
    # Fused QKV projection; attention scale already folded into the Q columns.
    qkv = jnp.dot(xn, qkvw_ref[...], preferred_element_type=jnp.float32)   # (BN, 3C)
    q = qkv[:, 0 * C:1 * C]
    k = qkv[:, 1 * C:2 * C]
    v = qkv[:, 2 * C:3 * C]

    batmask = batmask_ref[...]                        # (BN, BN): 0 in-batch, -1e30 cross

    p_blocks = []
    v_blocks = []
    for h in range(num_heads):                        # small static loop (unrolled)
        sl = slice(h * hd, (h + 1) * hd)
        # Batch-merged scores: (BN, hd) x (hd, BN) -> (BN, BN)
        s = lax.dot_general(q[:, sl], k[:, sl], (((1,), (1,)), ((), ())),
                            preferred_element_type=jnp.float32)
        s = s + batmask                               # kill cross-batch attention
        s = s - jnp.max(s, axis=-1, keepdims=True)
        p = jnp.exp(s)
        p = p * pl.reciprocal(jnp.sum(p, axis=-1, keepdims=True), approx=True)
        p_blocks.append(p)
        # Block-diagonal V operand: only head-h columns survive in block h.
        v_blocks.append(v * headmask_ref[h:h + 1, :])                       # (BN, C)

    p_cat = jnp.concatenate(p_blocks, axis=1)         # (BN, nH*BN), 128-lane aligned
    v_blk = jnp.concatenate(v_blocks, axis=0)         # (nH*BN, C), 128-sublane aligned
    # Single K = num_heads*BN matmul; result is already head-concatenated.
    o = jnp.dot(p_cat, v_blk, preferred_element_type=jnp.float32)           # (BN, C)

    x1 = x + jnp.dot(o, pw_ref[...], preferred_element_type=jnp.float32) + pb_ref[...]

    # ---------------- MLP branch: x1 + fc2(gelu(dwconv(fc1(norm2(x1))))) -----
    xn2 = _layernorm(x1, n2w_ref[...], n2b_ref[...])
    h1 = jnp.dot(xn2, fc1w_ref[...], preferred_element_type=jnp.float32) + fc1b_ref[...]

    # Depthwise 3x3 conv (stride 1, pad 1): each tap is a static sublane roll
    # of the flattened token axis plus a precomputed 0/1 edge mask (handles the
    # zero padding and also prevents any cross-batch leakage at roll wraps).
    # Initialize from the center tap (its mask is all ones, no roll needed).
    conv = h1 * dww_ref[4:5, :]
    for t in range(9):
        if t == 4:
            continue
        dh, dw = t // 3 - 1, t % 3 - 1
        off = dh * W + dw                             # out[g] needs h1[g + off]
        rolled = pltpu.roll(h1, shift=(-off) % BN, axis=0)
        conv = conv + (rolled * dwmask_ref[:, t:t + 1]) * dww_ref[t:t + 1, :]
    conv = conv + dwb_ref[...]

    g = _gelu_tanh(conv)
    mlp = jnp.dot(g, fc2w_ref[...], preferred_element_type=jnp.float32) + fc2b_ref[...]

    out_ref[...] = (x1 + mlp).astype(out_ref.dtype)


def segformer_block(x, params, H, W, num_heads):
    B, N, C = x.shape
    BN = B * N
    kernel = functools.partial(block_kernel, W=W, num_heads=num_heads)

    def full_spec(a):
        nd = a.ndim
        return pl.BlockSpec(a.shape, lambda i, _nd=nd: (0,) * _nd)

    x2d = x.reshape(BN, C)                            # free contiguous reshape
    in_specs = [full_spec(x2d)] + [full_spec(p) for p in params]

    out = pl.pallas_call(
        kernel,
        out_shape=jax.ShapeDtypeStruct((BN, C), x.dtype),
        grid=(1,),
        in_specs=in_specs,
        out_specs=pl.BlockSpec((BN, C), lambda i: (0, 0)),
        compiler_params=pltpu.CompilerParams(dimension_semantics=("arbitrary",)),
    )(x2d, *params)
    return out.reshape(B, N, C)


if __name__ == "__main__":
    # Small shapes consistent with the module: dim=32, heads=4, H=W=8 -> N=64.
    B, H, W = 2, 8, 8
    C = 32
    num_heads = 4
    mlp_ratio = 4.0
    N = H * W
    BN = B * N
    hd = C // num_heads
    hidden = int(C * mlp_ratio)
    scale = float(hd) ** -0.5

    key = jax.random.PRNGKey(0)
    ks = jax.random.split(key, 10)

    def tn(k, shape, std=0.02):
        # deterministic stand-in for trunc_normal_(std=0.02)
        return jnp.clip(std * jax.random.normal(k, shape, jnp.float32), -2 * std, 2 * std)

    x = jax.random.normal(ks[0], (B, N, C), jnp.float32)

    # --- parameters (shapes follow Block.__init__; deterministic init) -------
    n1w = jnp.ones((1, C), jnp.float32);  n1b = jnp.zeros((1, C), jnp.float32)
    n2w = jnp.ones((1, C), jnp.float32);  n2b = jnp.zeros((1, C), jnp.float32)
    Wq = tn(ks[1], (C, C))                      # (in, out); torch weight transposed
    Wk = tn(ks[2], (C, C))
    Wv = tn(ks[3], (C, C))                      # Wk/Wv = split of the kv Linear(dim, 2*dim)
    Wproj = tn(ks[4], (C, C));  bproj = jnp.zeros((1, C), jnp.float32)
    Wfc1 = tn(ks[5], (C, hidden));  bfc1 = jnp.zeros((1, hidden), jnp.float32)
    Wfc2 = tn(ks[6], (hidden, C));  bfc2 = jnp.zeros((1, C), jnp.float32)
    # depthwise Conv2d(hidden, hidden, 3, groups=hidden): fan_out = 9
    dww = (math.sqrt(2.0 / 9.0)
           * jax.random.normal(ks[7], (9, hidden), jnp.float32))   # (kh*3+kw, channel)
    dwb = jnp.zeros((1, hidden), jnp.float32)

    # Fused QKV weight with the attention scale folded into the Q columns.
    Wqkv = jnp.concatenate([Wq * scale, Wk, Wv], axis=1)            # (C, 3C)

    # Cross-batch additive attention mask: 0 within batch, -1e30 across batches.
    bid = np.repeat(np.arange(B), N)
    batmask = jnp.asarray(
        np.where(bid[:, None] == bid[None, :], 0.0, NEG_BIG).astype(np.float32))

    # Per-head column masks used to build the block-diagonal V operand in-kernel.
    hm = np.zeros((num_heads, C), np.float32)
    for h in range(num_heads):
        hm[h, h * hd:(h + 1) * hd] = 1.0
    headmask = jnp.asarray(hm)

    # Per-token 0/1 validity masks for the 9 depthwise-conv taps (encode the
    # zero padding of the 3x3 conv); (B*N, 9) f32 -- linear in N, not N^2.
    mask_np = np.zeros((BN, 9), np.float32)
    for t in range(9):
        dh, dw = t // 3 - 1, t % 3 - 1
        for b in range(B):
            for r in range(H):
                for c in range(W):
                    if 0 <= r + dh < H and 0 <= c + dw < W:
                        mask_np[b * N + r * W + c, t] = 1.0
    dwmask = jnp.asarray(mask_np)

    params = (n1w, n1b, Wqkv, batmask, headmask, Wproj, bproj, n2w, n2b,
              Wfc1, bfc1, dwmask, dww, dwb, Wfc2, bfc2)

    out = segformer_block(x, params, H, W, num_heads)
    out = jax.block_until_ready(out)

    # --------------------- pure-JAX reference (cross-check) ------------------
    def reference(xin):
        def ln(v, w, b):
            mu = v.mean(-1, keepdims=True)
            var = ((v - mu) ** 2).mean(-1, keepdims=True)
            return (v - mu) / jnp.sqrt(var + LN_EPS) * w + b

        xn = ln(xin, n1w, n1b)
        q = xn @ Wq
        k = xn @ Wk
        v = xn @ Wv

        def split(t):
            return t.reshape(B, N, num_heads, hd).transpose(0, 2, 1, 3)

        qh, kh, vh = split(q), split(k), split(v)
        attn = jax.nn.softmax(jnp.einsum('bhnd,bhmd->bhnm', qh, kh) * scale, axis=-1)
        o = jnp.einsum('bhnm,bhmd->bhnd', attn, vh).transpose(0, 2, 1, 3).reshape(B, N, C)
        o = o @ Wproj + bproj
        x1 = xin + o

        xn2 = ln(x1, n2w, n2b)
        h1 = xn2 @ Wfc1 + bfc1
        img = h1.reshape(B, H, W, hidden)
        pad = jnp.pad(img, ((0, 0), (1, 1), (1, 1), (0, 0)))
        conv = jnp.zeros_like(img)
        for kh_ in range(3):
            for kw_ in range(3):
                conv = conv + pad[:, kh_:kh_ + H, kw_:kw_ + W, :] * dww[kh_ * 3 + kw_]
        conv = conv + dwb
        conv = conv.reshape(B, N, hidden)
        g = 0.5 * conv * (1.0 + jnp.tanh(math.sqrt(2.0 / math.pi)
                                         * (conv + 0.044715 * conv ** 3)))
        return x1 + g @ Wfc2 + bfc2

    ref = jax.block_until_ready(reference(x))
    err = float(jnp.max(jnp.abs(out - ref)))
    if not (err < 1e-3):
        raise AssertionError(f"Pallas kernel mismatch vs JAX reference, max abs err = {err}")

    print("KERNEL_OK")
</pallas_src>

<mosaic_0001>
module attributes {stable_mosaic.version = 11 : i64} {
  func.func @block_kernel(%arg0: i32, %arg1: memref<128x32xf32, #tpu.memory_space<vmem>>, %arg2: memref<1x32xf32, #tpu.memory_space<vmem>>, %arg3: memref<1x32xf32, #tpu.memory_space<vmem>>, %arg4: memref<32x96xf32, #tpu.memory_space<vmem>>, %arg5: memref<128x128xf32, #tpu.memory_space<vmem>>, %arg6: memref<4x32xf32, #tpu.memory_space<vmem>>, %arg7: memref<32x32xf32, #tpu.memory_space<vmem>>, %arg8: memref<1x32xf32, #tpu.memory_space<vmem>>, %arg9: memref<1x32xf32, #tpu.memory_space<vmem>>, %arg10: memref<1x32xf32, #tpu.memory_space<vmem>>, %arg11: memref<32x128xf32, #tpu.memory_space<vmem>>, %arg12: memref<1x128xf32, #tpu.memory_space<vmem>>, %arg13: memref<128x9xf32, #tpu.memory_space<vmem>>, %arg14: memref<9x128xf32, #tpu.memory_space<vmem>>, %arg15: memref<1x128xf32, #tpu.memory_space<vmem>>, %arg16: memref<128x32xf32, #tpu.memory_space<vmem>>, %arg17: memref<1x32xf32, #tpu.memory_space<vmem>>, %arg18: memref<128x32xf32, #tpu.memory_space<vmem>>) attributes {dimension_semantics = [#tpu.dimension_semantics<arbitrary>], iteration_bounds = array<i64: 1>, scalar_prefetch = 0 : i64, scratch_operands = 0 : i64, tpu.core_type = #tpu.core_type<tc>, window_params = [{pipeline_mode = #tpu.pipeline_mode<synchronous>, transform_indices = @transform_0, window_bounds = array<i64: 128, 32>}, {pipeline_mode = #tpu.pipeline_mode<synchronous>, transform_indices = @transform_1, window_bounds = array<i64: 1, 32>}, {pipeline_mode = #tpu.pipeline_mode<synchronous>, transform_indices = @transform_2, window_bounds = array<i64: 1, 32>}, {pipeline_mode = #tpu.pipeline_mode<synchronous>, transform_indices = @transform_3, window_bounds = array<i64: 32, 96>}, {pipeline_mode = #tpu.pipeline_mode<synchronous>, transform_indices = @transform_4, window_bounds = array<i64: 128, 128>}, {pipeline_mode = #tpu.pipeline_mode<synchronous>, transform_indices = @transform_5, window_bounds = array<i64: 4, 32>}, {pipeline_mode = #tpu.pipeline_mode<synchronous>, transform_indices = @transform_6, window_bounds = array<i64: 32, 32>}, {pipeline_mode = #tpu.pipeline_mode<synchronous>, transform_indices = @transform_7, window_bounds = array<i64: 1, 32>}, {pipeline_mode = #tpu.pipeline_mode<synchronous>, transform_indices = @transform_8, window_bounds = array<i64: 1, 32>}, {pipeline_mode = #tpu.pipeline_mode<synchronous>, transform_indices = @transform_9, window_bounds = array<i64: 1, 32>}, {pipeline_mode = #tpu.pipeline_mode<synchronous>, transform_indices = @transform_10, window_bounds = array<i64: 32, 128>}, {pipeline_mode = #tpu.pipeline_mode<synchronous>, transform_indices = @transform_11, window_bounds = array<i64: 1, 128>}, {pipeline_mode = #tpu.pipeline_mode<synchronous>, transform_indices = @transform_12, window_bounds = array<i64: 128, 9>}, {pipeline_mode = #tpu.pipeline_mode<synchronous>, transform_indices = @transform_13, window_bounds = array<i64: 9, 128>}, {pipeline_mode = #tpu.pipeline_mode<synchronous>, transform_indices = @transform_14, window_bounds = array<i64: 1, 128>}, {pipeline_mode = #tpu.pipeline_mode<synchronous>, transform_indices = @transform_15, window_bounds = array<i64: 128, 32>}, {pipeline_mode = #tpu.pipeline_mode<synchronous>, transform_indices = @transform_16, window_bounds = array<i64: 1, 32>}, {pipeline_mode = #tpu.pipeline_mode<synchronous>, transform_indices = @transform_17, window_bounds = array<i64: 128, 32>}]} {
    %c0 = arith.constant 0 : index
    %c0_0 = arith.constant 0 : index
    %0 = vector.load %arg1[%c0, %c0_0] : memref<128x32xf32, #tpu.memory_space<vmem>>, vector<128x32xf32>
    %c0_1 = arith.constant 0 : index
    %c0_2 = arith.constant 0 : index
    %1 = vector.load %arg2[%c0_1, %c0_2] : memref<1x32xf32, #tpu.memory_space<vmem>>, vector<1x32xf32>
    %c0_3 = arith.constant 0 : index
    %c0_4 = arith.constant 0 : index
    %2 = vector.load %arg3[%c0_3, %c0_4] : memref<1x32xf32, #tpu.memory_space<vmem>>, vector<1x32xf32>
    %cst = arith.constant dense<0.000000e+00> : vector<128xf32>
    %3 = vector.multi_reduction <add>, %0, %cst [1] : vector<128x32xf32> to vector<128xf32>
    %4 = vector.shape_cast %3 : vector<128xf32> to vector<128x1xf32>
    %cst_5 = arith.constant 3.200000e+01 : f32
    %5 = vector.broadcast %cst_5 : f32 to vector<128x1xf32>
    %6 = arith.divf %4, %5 : vector<128x1xf32>
    %7 = arith.mulf %0, %0 : vector<128x32xf32>
    %cst_6 = arith.constant dense<0.000000e+00> : vector<128xf32>
    %8 = vector.multi_reduction <add>, %7, %cst_6 [1] : vector<128x32xf32> to vector<128xf32>
    %9 = vector.shape_cast %8 : vector<128xf32> to vector<128x1xf32>
    %cst_7 = arith.constant 3.200000e+01 : f32
    %10 = vector.broadcast %cst_7 : f32 to vector<128x1xf32>
    %11 = arith.divf %9, %10 : vector<128x1xf32>
    %12 = arith.mulf %6, %6 : vector<128x1xf32>
    %13 = arith.subf %11, %12 : vector<128x1xf32>
    %14 = vector.broadcast %6 : vector<128x1xf32> to vector<128x32xf32>
    %15 = arith.subf %0, %14 : vector<128x32xf32>
    %cst_8 = arith.constant 9.99999974E-6 : f32
    %16 = vector.broadcast %cst_8 : f32 to vector<128x1xf32>
    %17 = arith.addf %13, %16 : vector<128x1xf32>
    %18 = math.rsqrt %17 : vector<128x1xf32>
    %19 = vector.broadcast %18 : vector<128x1xf32> to vector<128x32xf32>
    %20 = arith.mulf %15, %19 : vector<128x32xf32>
    %21 = vector.broadcast %1 : vector<1x32xf32> to vector<128x32xf32>
    %22 = arith.mulf %20, %21 : vector<128x32xf32>
    %23 = vector.broadcast %2 : vector<1x32xf32> to vector<128x32xf32>
    %24 = arith.addf %22, %23 : vector<128x32xf32>
    %c0_9 = arith.constant 0 : index
    %c0_10 = arith.constant 0 : index
    %25 = vector.load %arg4[%c0_9, %c0_10] : memref<32x96xf32, #tpu.memory_space<vmem>>, vector<32x96xf32>
    %cst_11 = arith.constant dense<0.000000e+00> : vector<128x96xf32>
    %26 = tpu.matmul %24, %25, %cst_11 {dimension_numbers = #tpu.dot_dimension_numbers<[1], [0], [0], [1], [0, 0, 1, 1], [], []>} : vector<128x32xf32>, vector<32x96xf32>, vector<128x96xf32> -> vector<128x96xf32>
    %27 = vector.extract_strided_slice %26 {offsets = [0, 0], sizes = [128, 32], strides = [1, 1]} : vector<128x96xf32> to vector<128x32xf32>
    %28 = vector.extract_strided_slice %26 {offsets = [0, 32], sizes = [128, 32], strides = [1, 1]} : vector<128x96xf32> to vector<128x32xf32>
    %29 = vector.extract_strided_slice %26 {offsets = [0, 64], sizes = [128, 32], strides = [1, 1]} : vector<128x96xf32> to vector<128x32xf32>
    %c0_12 = arith.constant 0 : index
    %c0_13 = arith.constant 0 : index
    %30 = vector.load %arg5[%c0_12, %c0_13] : memref<128x128xf32, #tpu.memory_space<vmem>>, vector<128x128xf32>
    %31 = vector.extract_strided_slice %27 {offsets = [0, 0], sizes = [128, 8], strides = [1, 1]} : vector<128x32xf32> to vector<128x8xf32>
    %32 = vector.extract_strided_slice %28 {offsets = [0, 0], sizes = [128, 8], strides = [1, 1]} : vector<128x32xf32> to vector<128x8xf32>
    %cst_14 = arith.constant dense<0.000000e+00> : vector<128x128xf32>
    %33 = tpu.matmul %31, %32, %cst_14 {dimension_numbers = #tpu.dot_dimension_numbers<[1], [1], [0], [0], [0, 0, 1, 0], [], []>} : vector<128x8xf32>, vector<128x8xf32>, vector<128x128xf32> -> vector<128x128xf32>
    %34 = arith.addf %33, %30 : vector<128x128xf32>
    %cst_15 = arith.constant dense<0xFF800000> : vector<128xf32>
    %35 = vector.multi_reduction <maximumf>, %34, %cst_15 [1] : vector<128x128xf32> to vector<128xf32>
    %36 = vector.shape_cast %35 : vector<128xf32> to vector<128x1xf32>
    %37 = vector.broadcast %36 : vector<128x1xf32> to vector<128x128xf32>
    %38 = arith.subf %34, %37 : vector<128x128xf32>
    %39 = math.exp %38 : vector<128x128xf32>
    %cst_16 = arith.constant dense<0.000000e+00> : vector<128xf32>
    %40 = vector.multi_reduction <add>, %39, %cst_16 [1] : vector<128x128xf32> to vector<128xf32>
    %41 = vector.shape_cast %40 : vector<128xf32> to vector<128x1xf32>
    %42 = tpu.reciprocal %41 {approx = true} : vector<128x1xf32> -> vector<128x1xf32>
    %43 = vector.broadcast %42 : vector<128x1xf32> to vector<128x128xf32>
    %44 = arith.mulf %39, %43 : vector<128x128xf32>
    %c0_17 = arith.constant 0 : index
    %c0_18 = arith.constant 0 : index
    %45 = vector.load %arg6[%c0_17, %c0_18] : memref<4x32xf32, #tpu.memory_space<vmem>>, vector<1x32xf32>
    %46 = vector.broadcast %45 : vector<1x32xf32> to vector<128x32xf32>
    %47 = arith.mulf %29, %46 : vector<128x32xf32>
    %48 = vector.extract_strided_slice %27 {offsets = [0, 8], sizes = [128, 8], strides = [1, 1]} : vector<128x32xf32> to vector<128x8xf32>
    %49 = vector.extract_strided_slice %28 {offsets = [0, 8], sizes = [128, 8], strides = [1, 1]} : vector<128x32xf32> to vector<128x8xf32>
    %cst_19 = arith.constant dense<0.000000e+00> : vector<128x128xf32>
    %50 = tpu.matmul %48, %49, %cst_19 {dimension_numbers = #tpu.dot_dimension_numbers<[1], [1], [0], [0], [0, 0, 1, 0], [], []>} : vector<128x8xf32>, vector<128x8xf32>, vector<128x128xf32> -> vector<128x128xf32>
    %51 = arith.addf %50, %30 : vector<128x128xf32>
    %cst_20 = arith.constant dense<0xFF800000> : vector<128xf32>
    %52 = vector.multi_reduction <maximumf>, %51, %cst_20 [1] : vector<128x128xf32> to vector<128xf32>
    %53 = vector.shape_cast %52 : vector<128xf32> to vector<128x1xf32>
    %54 = vector.broadcast %53 : vector<128x1xf32> to vector<128x128xf32>
    %55 = arith.subf %51, %54 : vector<128x128xf32>
    %56 = math.exp %55 : vector<128x128xf32>
    %cst_21 = arith.constant dense<0.000000e+00> : vector<128xf32>
    %57 = vector.multi_reduction <add>, %56, %cst_21 [1] : vector<128x128xf32> to vector<128xf32>
    %58 = vector.shape_cast %57 : vector<128xf32> to vector<128x1xf32>
    %59 = tpu.reciprocal %58 {approx = true} : vector<128x1xf32> -> vector<128x1xf32>
    %60 = vector.broadcast %59 : vector<128x1xf32> to vector<128x128xf32>
    %61 = arith.mulf %56, %60 : vector<128x128xf32>
    %c1 = arith.constant 1 : index
    %c0_22 = arith.constant 0 : index
    %62 = vector.load %arg6[%c1, %c0_22] : memref<4x32xf32, #tpu.memory_space<vmem>>, vector<1x32xf32>
    %63 = vector.broadcast %62 : vector<1x32xf32> to vector<128x32xf32>
    %64 = arith.mulf %29, %63 : vector<128x32xf32>
    %65 = vector.extract_strided_slice %27 {offsets = [0, 16], sizes = [128, 8], strides = [1, 1]} : vector<128x32xf32> to vector<128x8xf32>
    %66 = vector.extract_strided_slice %28 {offsets = [0, 16], sizes = [128, 8], strides = [1, 1]} : vector<128x32xf32> to vector<128x8xf32>
    %cst_23 = arith.constant dense<0.000000e+00> : vector<128x128xf32>
    %67 = tpu.matmul %65, %66, %cst_23 {dimension_numbers = #tpu.dot_dimension_numbers<[1], [1], [0], [0], [0, 0, 1, 0], [], []>} : vector<128x8xf32>, vector<128x8xf32>, vector<128x128xf32> -> vector<128x128xf32>
    %68 = arith.addf %67, %30 : vector<128x128xf32>
    %cst_24 = arith.constant dense<0xFF800000> : vector<128xf32>
    %69 = vector.multi_reduction <maximumf>, %68, %cst_24 [1] : vector<128x128xf32> to vector<128xf32>
    %70 = vector.shape_cast %69 : vector<128xf32> to vector<128x1xf32>
    %71 = vector.broadcast %70 : vector<128x1xf32> to vector<128x128xf32>
    %72 = arith.subf %68, %71 : vector<128x128xf32>
    %73 = math.exp %72 : vector<128x128xf32>
    %cst_25 = arith.constant dense<0.000000e+00> : vector<128xf32>
    %74 = vector.multi_reduction <add>, %73, %cst_25 [1] : vector<128x128xf32> to vector<128xf32>
    %75 = vector.shape_cast %74 : vector<128xf32> to vector<128x1xf32>
    %76 = tpu.reciprocal %75 {approx = true} : vector<128x1xf32> -> vector<128x1xf32>
    %77 = vector.broadcast %76 : vector<128x1xf32> to vector<128x128xf32>
    %78 = arith.mulf %73, %77 : vector<128x128xf32>
    %c2 = arith.constant 2 : index
    %c0_26 = arith.constant 0 : index
    %79 = vector.load %arg6[%c2, %c0_26] : memref<4x32xf32, #tpu.memory_space<vmem>>, vector<1x32xf32>
    %80 = vector.broadcast %79 : vector<1x32xf32> to vector<128x32xf32>
    %81 = arith.mulf %29, %80 : vector<128x32xf32>
    %82 = vector.extract_strided_slice %27 {offsets = [0, 24], sizes = [128, 8], strides = [1, 1]} : vector<128x32xf32> to vector<128x8xf32>
    %83 = vector.extract_strided_slice %28 {offsets = [0, 24], sizes = [128, 8], strides = [1, 1]} : vector<128x32xf32> to vector<128x8xf32>
    %cst_27 = arith.constant dense<0.000000e+00> : vector<128x128xf32>
    %84 = tpu.matmul %82, %83, %cst_27 {dimension_numbers = #tpu.dot_dimension_numbers<[1], [1], [0], [0], [0, 0, 1, 0], [], []>} : vector<128x8xf32>, vector<128x8xf32>, vector<128x128xf32> -> vector<128x128xf32>
    %85 = arith.addf %84, %30 : vector<128x128xf32>
    %cst_28 = arith.constant dense<0xFF800000> : vector<128xf32>
    %86 = vector.multi_reduction <maximumf>, %85, %cst_28 [1] : vector<128x128xf32> to vector<128xf32>
    %87 = vector.shape_cast %86 : vector<128xf32> to vector<128x1xf32>
    %88 = vector.broadcast %87 : vector<128x1xf32> to vector<128x128xf32>
    %89 = arith.subf %85, %88 : vector<128x128xf32>
    %90 = math.exp %89 : vector<128x128xf32>
    %cst_29 = arith.constant dense<0.000000e+00> : vector<128xf32>
    %91 = vector.multi_reduction <add>, %90, %cst_29 [1] : vector<128x128xf32> to vector<128xf32>
    %92 = vector.shape_cast %91 : vector<128xf32> to vector<128x1xf32>
    %93 = tpu.reciprocal %92 {approx = true} : vector<128x1xf32> -> vector<128x1xf32>
    %94 = vector.broadcast %93 : vector<128x1xf32> to vector<128x128xf32>
    %95 = arith.mulf %90, %94 : vector<128x128xf32>
    %c3 = arith.constant 3 : index
    %c0_30 = arith.constant 0 : index
    %96 = vector.load %arg6[%c3, %c0_30] : memref<4x32xf32, #tpu.memory_space<vmem>>, vector<1x32xf32>
    %97 = vector.broadcast %96 : vector<1x32xf32> to vector<128x32xf32>
    %98 = arith.mulf %29, %97 : vector<128x32xf32>
    %99 = tpu.concatenate %44, %61, %78, %95 in 1 : vector<128x128xf32>, vector<128x128xf32>, vector<128x128xf32>, vector<128x128xf32> -> vector<128x512xf32>
    %100 = tpu.concatenate %47, %64, %81, %98 in 0 : vector<128x32xf32>, vector<128x32xf32>, vector<128x32xf32>, vector<128x32xf32> -> vector<512x32xf32>
    %cst_31 = arith.constant dense<0.000000e+00> : vector<128x32xf32>
    %101 = tpu.matmul %99, %100, %cst_31 {dimension_numbers = #tpu.dot_dimension_numbers<[1], [0], [0], [1], [0, 0, 1, 1], [], []>} : vector<128x512xf32>, vector<512x32xf32>, vector<128x32xf32> -> vector<128x32xf32>
    %c0_32 = arith.constant 0 : index
    %c0_33 = arith.constant 0 : index
    %102 = vector.load %arg7[%c0_32, %c0_33] : memref<32x32xf32, #tpu.memory_space<vmem>>, vector<32x32xf32>
    %cst_34 = arith.constant dense<0.000000e+00> : vector<128x32xf32>
    %103 = tpu.matmul %101, %102, %cst_34 {dimension_numbers = #tpu.dot_dimension_numbers<[1], [0], [0], [1], [0, 0, 1, 1], [], []>} : vector<128x32xf32>, vector<32x32xf32>, vector<128x32xf32> -> vector<128x32xf32>
    %104 = arith.addf %0, %103 : vector<128x32xf32>
    %c0_35 = arith.constant 0 : index
    %c0_36 = arith.constant 0 : index
    %105 = vector.load %arg8[%c0_35, %c0_36] : memref<1x32xf32, #tpu.memory_space<vmem>>, vector<1x32xf32>
    %106 = vector.broadcast %105 : vector<1x32xf32> to vector<128x32xf32>
    %107 = arith.addf %104, %106 : vector<128x32xf32>
    %c0_37 = arith.constant 0 : index
    %c0_38 = arith.constant 0 : index
    %108 = vector.load %arg9[%c0_37, %c0_38] : memref<1x32xf32, #tpu.memory_space<vmem>>, vector<1x32xf32>
    %c0_39 = arith.constant 0 : index
    %c0_40 = arith.constant 0 : index
    %109 = vector.load %arg10[%c0_39, %c0_40] : memref<1x32xf32, #tpu.memory_space<vmem>>, vector<1x32xf32>
    %cst_41 = arith.constant dense<0.000000e+00> : vector<128xf32>
    %110 = vector.multi_reduction <add>, %107, %cst_41 [1] : vector<128x32xf32> to vector<128xf32>
    %111 = vector.shape_cast %110 : vector<128xf32> to vector<128x1xf32>
    %cst_42 = arith.constant 3.200000e+01 : f32
    %112 = vector.broadcast %cst_42 : f32 to vector<128x1xf32>
    %113 = arith.divf %111, %112 : vector<128x1xf32>
    %114 = arith.mulf %107, %107 : vector<128x32xf32>
    %cst_43 = arith.constant dense<0.000000e+00> : vector<128xf32>
    %115 = vector.multi_reduction <add>, %114, %cst_43 [1] : vector<128x32xf32> to vector<128xf32>
    %116 = vector.shape_cast %115 : vector<128xf32> to vector<128x1xf32>
    %cst_44 = arith.constant 3.200000e+01 : f32
    %117 = vector.broadcast %cst_44 : f32 to vector<128x1xf32>
    %118 = arith.divf %116, %117 : vector<128x1xf32>
    %119 = arith.mulf %113, %113 : vector<128x1xf32>
    %120 = arith.subf %118, %119 : vector<128x1xf32>
    %121 = vector.broadcast %113 : vector<128x1xf32> to vector<128x32xf32>
    %122 = arith.subf %107, %121 : vector<128x32xf32>
    %cst_45 = arith.constant 9.99999974E-6 : f32
    %123 = vector.broadcast %cst_45 : f32 to vector<128x1xf32>
    %124 = arith.addf %120, %123 : vector<128x1xf32>
    %125 = math.rsqrt %124 : vector<128x1xf32>
    %126 = vector.broadcast %125 : vector<128x1xf32> to vector<128x32xf32>
    %127 = arith.mulf %122, %126 : vector<128x32xf32>
    %128 = vector.broadcast %108 : vector<1x32xf32> to vector<128x32xf32>
    %129 = arith.mulf %127, %128 : vector<128x32xf32>
    %130 = vector.broadcast %109 : vector<1x32xf32> to vector<128x32xf32>
    %131 = arith.addf %129, %130 : vector<128x32xf32>
    %c0_46 = arith.constant 0 : index
    %c0_47 = arith.constant 0 : index
    %132 = vector.load %arg11[%c0_46, %c0_47] : memref<32x128xf32, #tpu.memory_space<vmem>>, vector<32x128xf32>
    %cst_48 = arith.constant dense<0.000000e+00> : vector<128x128xf32>
    %133 = tpu.matmul %131, %132, %cst_48 {dimension_numbers = #tpu.dot_dimension_numbers<[1], [0], [0], [1], [0, 0, 1, 1], [], []>} : vector<128x32xf32>, vector<32x128xf32>, vector<128x128xf32> -> vector<128x128xf32>
    %c0_49 = arith.constant 0 : index
    %c0_50 = arith.constant 0 : index
    %134 = vector.load %arg12[%c0_49, %c0_50] : memref<1x128xf32, #tpu.memory_space<vmem>>, vector<1x128xf32>
    %135 = vector.broadcast %134 : vector<1x128xf32> to vector<128x128xf32>
    %136 = arith.addf %133, %135 : vector<128x128xf32>
    %c4 = arith.constant 4 : index
    %c0_51 = arith.constant 0 : index
    %137 = vector.load %arg14[%c4, %c0_51] : memref<9x128xf32, #tpu.memory_space<vmem>>, vector<1x128xf32>
    %138 = vector.broadcast %137 : vector<1x128xf32> to vector<128x128xf32>
    %139 = arith.mulf %136, %138 : vector<128x128xf32>
    %c9_i32 = arith.constant 9 : i32
    %140 = tpu.dynamic_rotate %136 by %c9_i32 dim 0 : vector<128x128xf32>, i32 -> vector<128x128xf32>
    %c0_52 = arith.constant 0 : index
    %c0_53 = arith.constant 0 : index
    %141 = vector.load %arg13[%c0_52, %c0_53] : memref<128x9xf32, #tpu.memory_space<vmem>>, vector<128x1xf32>
    %142 = vector.broadcast %141 : vector<128x1xf32> to vector<128x128xf32>
    %143 = arith.mulf %140, %142 : vector<128x128xf32>
    %c0_54 = arith.constant 0 : index
    %c0_55 = arith.constant 0 : index
    %144 = vector.load %arg14[%c0_54, %c0_55] : memref<9x128xf32, #tpu.memory_space<vmem>>, vector<1x128xf32>
    %145 = vector.broadcast %144 : vector<1x128xf32> to vector<128x128xf32>
    %146 = arith.mulf %143, %145 : vector<128x128xf32>
    %147 = arith.addf %139, %146 : vector<128x128xf32>
    %c8_i32 = arith.constant 8 : i32
    %148 = tpu.dynamic_rotate %136 by %c8_i32 dim 0 : vector<128x128xf32>, i32 -> vector<128x128xf32>
    %c0_56 = arith.constant 0 : index
    %c1_57 = arith.constant 1 : index
    %149 = vector.load %arg13[%c0_56, %c1_57] : memref<128x9xf32, #tpu.memory_space<vmem>>, vector<128x1xf32>
    %150 = vector.broadcast %149 : vector<128x1xf32> to vector<128x128xf32>
    %151 = arith.mulf %148, %150 : vector<128x128xf32>
    %c1_58 = arith.constant 1 : index
    %c0_59 = arith.constant 0 : index
    %152 = vector.load %arg14[%c1_58, %c0_59] : memref<9x128xf32, #tpu.memory_space<vmem>>, vector<1x128xf32>
    %153 = vector.broadcast %152 : vector<1x128xf32> to vector<128x128xf32>
    %154 = arith.mulf %151, %153 : vector<128x128xf32>
    %155 = arith.addf %147, %154 : vector<128x128xf32>
    %c7_i32 = arith.constant 7 : i32
    %156 = tpu.dynamic_rotate %136 by %c7_i32 dim 0 : vector<128x128xf32>, i32 -> vector<128x128xf32>
    %c0_60 = arith.constant 0 : index
    %c2_61 = arith.constant 2 : index
    %157 = vector.load %arg13[%c0_60, %c2_61] : memref<128x9xf32, #tpu.memory_space<vmem>>, vector<128x1xf32>
    %158 = vector.broadcast %157 : vector<128x1xf32> to vector<128x128xf32>
    %159 = arith.mulf %156, %158 : vector<128x128xf32>
    %c2_62 = arith.constant 2 : index
    %c0_63 = arith.constant 0 : index
    %160 = vector.load %arg14[%c2_62, %c0_63] : memref<9x128xf32, #tpu.memory_space<vmem>>, vector<1x128xf32>
    %161 = vector.broadcast %160 : vector<1x128xf32> to vector<128x128xf32>
    %162 = arith.mulf %159, %161 : vector<128x128xf32>
    %163 = arith.addf %155, %162 : vector<128x128xf32>
    %c1_i32 = arith.constant 1 : i32
    %164 = tpu.dynamic_rotate %136 by %c1_i32 dim 0 : vector<128x128xf32>, i32 -> vector<128x128xf32>
    %c0_64 = arith.constant 0 : index
    %c3_65 = arith.constant 3 : index
    %165 = vector.load %arg13[%c0_64, %c3_65] : memref<128x9xf32, #tpu.memory_space<vmem>>, vector<128x1xf32>
    %166 = vector.broadcast %165 : vector<128x1xf32> to vector<128x128xf32>
    %167 = arith.mulf %164, %166 : vector<128x128xf32>
    %c3_66 = arith.constant 3 : index
    %c0_67 = arith.constant 0 : index
    %168 = vector.load %arg14[%c3_66, %c0_67] : memref<9x128xf32, #tpu.memory_space<vmem>>, vector<1x128xf32>
    %169 = vector.broadcast %168 : vector<1x128xf32> to vector<128x128xf32>
    %170 = arith.mulf %167, %169 : vector<128x128xf32>
    %171 = arith.addf %163, %170 : vector<128x128xf32>
    %c127_i32 = arith.constant 127 : i32
    %172 = tpu.dynamic_rotate %136 by %c127_i32 dim 0 : vector<128x128xf32>, i32 -> vector<128x128xf32>
    %c0_68 = arith.constant 0 : index
    %c5 = arith.constant 5 : index
    %173 = vector.load %arg13[%c0_68, %c5] : memref<128x9xf32, #tpu.memory_space<vmem>>, vector<128x1xf32>
    %174 = vector.broadcast %173 : vector<128x1xf32> to vector<128x128xf32>
    %175 = arith.mulf %172, %174 : vector<128x128xf32>
    %c5_69 = arith.constant 5 : index
    %c0_70 = arith.constant 0 : index
    %176 = vector.load %arg14[%c5_69, %c0_70] : memref<9x128xf32, #tpu.memory_space<vmem>>, vector<1x128xf32>
    %177 = vector.broadcast %176 : vector<1x128xf32> to vector<128x128xf32>
    %178 = arith.mulf %175, %177 : vector<128x128xf32>
    %179 = arith.addf %171, %178 : vector<128x128xf32>
    %c121_i32 = arith.constant 121 : i32
    %180 = tpu.dynamic_rotate %136 by %c121_i32 dim 0 : vector<128x128xf32>, i32 -> vector<128x128xf32>
    %c0_71 = arith.constant 0 : index
    %c6 = arith.constant 6 : index
    %181 = vector.load %arg13[%c0_71, %c6] : memref<128x9xf32, #tpu.memory_space<vmem>>, vector<128x1xf32>
    %182 = vector.broadcast %181 : vector<128x1xf32> to vector<128x128xf32>
    %183 = arith.mulf %180, %182 : vector<128x128xf32>
    %c6_72 = arith.constant 6 : index
    %c0_73 = arith.constant 0 : index
    %184 = vector.load %arg14[%c6_72, %c0_73] : memref<9x128xf32, #tpu.memory_space<vmem>>, vector<1x128xf32>
    %185 = vector.broadcast %184 : vector<1x128xf32> to vector<128x128xf32>
    %186 = arith.mulf %183, %185 : vector<128x128xf32>
    %187 = arith.addf %179, %186 : vector<128x128xf32>
    %c120_i32 = arith.constant 120 : i32
    %188 = tpu.dynamic_rotate %136 by %c120_i32 dim 0 : vector<128x128xf32>, i32 -> vector<128x128xf32>
    %c0_74 = arith.constant 0 : index
    %c7 = arith.constant 7 : index
    %189 = vector.load %arg13[%c0_74, %c7] : memref<128x9xf32, #tpu.memory_space<vmem>>, vector<128x1xf32>
    %190 = vector.broadcast %189 : vector<128x1xf32> to vector<128x128xf32>
    %191 = arith.mulf %188, %190 : vector<128x128xf32>
    %c7_75 = arith.constant 7 : index
    %c0_76 = arith.constant 0 : index
    %192 = vector.load %arg14[%c7_75, %c0_76] : memref<9x128xf32, #tpu.memory_space<vmem>>, vector<1x128xf32>
    %193 = vector.broadcast %192 : vector<1x128xf32> to vector<128x128xf32>
    %194 = arith.mulf %191, %193 : vector<128x128xf32>
    %195 = arith.addf %187, %194 : vector<128x128xf32>
    %c119_i32 = arith.constant 119 : i32
    %196 = tpu.dynamic_rotate %136 by %c119_i32 dim 0 : vector<128x128xf32>, i32 -> vector<128x128xf32>
    %c0_77 = arith.constant 0 : index
    %c8 = arith.constant 8 : index
    %197 = vector.load %arg13[%c0_77, %c8] : memref<128x9xf32, #tpu.memory_space<vmem>>, vector<128x1xf32>
    %198 = vector.broadcast %197 : vector<128x1xf32> to vector<128x128xf32>
    %199 = arith.mulf %196, %198 : vector<128x128xf32>
    %c8_78 = arith.constant 8 : index
    %c0_79 = arith.constant 0 : index
    %200 = vector.load %arg14[%c8_78, %c0_79] : memref<9x128xf32, #tpu.memory_space<vmem>>, vector<1x128xf32>
    %201 = vector.broadcast %200 : vector<1x128xf32> to vector<128x128xf32>
    %202 = arith.mulf %199, %201 : vector<128x128xf32>
    %203 = arith.addf %195, %202 : vector<128x128xf32>
    %c0_80 = arith.constant 0 : index
    %c0_81 = arith.constant 0 : index
    %204 = vector.load %arg15[%c0_80, %c0_81] : memref<1x128xf32, #tpu.memory_space<vmem>>, vector<1x128xf32>
    %205 = vector.broadcast %204 : vector<1x128xf32> to vector<128x128xf32>
    %206 = arith.addf %203, %205 : vector<128x128xf32>
    %cst_82 = arith.constant 5.000000e-01 : f32
    %207 = vector.broadcast %cst_82 : f32 to vector<128x128xf32>
    %208 = arith.mulf %207, %206 : vector<128x128xf32>
    %cst_83 = arith.constant 4.471500e-02 : f32
    %209 = vector.broadcast %cst_83 : f32 to vector<128x128xf32>
    %210 = arith.mulf %209, %206 : vector<128x128xf32>
    %211 = arith.mulf %210, %206 : vector<128x128xf32>
    %212 = arith.mulf %211, %206 : vector<128x128xf32>
    %213 = arith.addf %206, %212 : vector<128x128xf32>
    %cst_84 = arith.constant 0.797884583 : f32
    %214 = vector.broadcast %cst_84 : f32 to vector<128x128xf32>
    %215 = arith.mulf %214, %213 : vector<128x128xf32>
    %216 = math.tanh %215 : vector<128x128xf32>
    %cst_85 = arith.constant 1.000000e+00 : f32
    %217 = vector.broadcast %cst_85 : f32 to vector<128x128xf32>
    %218 = arith.addf %217, %216 : vector<128x128xf32>
    %219 = arith.mulf %208, %218 : vector<128x128xf32>
    %c0_86 = arith.constant 0 : index
    %c0_87 = arith.constant 0 : index
    %220 = vector.load %arg16[%c0_86, %c0_87] : memref<128x32xf32, #tpu.memory_space<vmem>>, vector<128x32xf32>
    %cst_88 = arith.constant dense<0.000000e+00> : vector<128x32xf32>
    %221 = tpu.matmul %219, %220, %cst_88 {dimension_numbers = #tpu.dot_dimension_numbers<[1], [0], [0], [1], [0, 0, 1, 1], [], []>} : vector<128x128xf32>, vector<128x32xf32>, vector<128x32xf32> -> vector<128x32xf32>
    %c0_89 = arith.constant 0 : index
    %c0_90 = arith.constant 0 : index
    %222 = vector.load %arg17[%c0_89, %c0_90] : memref<1x32xf32, #tpu.memory_space<vmem>>, vector<1x32xf32>
    %223 = vector.broadcast %222 : vector<1x32xf32> to vector<128x32xf32>
    %224 = arith.addf %221, %223 : vector<128x32xf32>
    %225 = arith.addf %107, %224 : vector<128x32xf32>
    %c0_91 = arith.constant 0 : index
    %c0_92 = arith.constant 0 : index
    %226 = vector.load %arg18[%c0_91, %c0_92] : memref<128x32xf32, #tpu.memory_space<vmem>>, vector<128x32xf32>
    tpu.vector_store %arg18[%c0_91, %c0_92], %225 {strides = array<i32>} : memref<128x32xf32, #tpu.memory_space<vmem>>, vector<128x32xf32>,
    return
  }
  func.func @transform_0(%arg0: i32) -> (i32, i32) {
    %c0_i32 = arith.constant 0 : i32
    %c0_i32_0 = arith.constant 0 : i32
    %c0_i32_1 = arith.constant 0 : i32
    return %c0_i32, %c0_i32_0 : i32, i32
  }
  func.func @transform_1(%arg0: i32) -> (i32, i32) {
    %c0_i32 = arith.constant 0 : i32
    %c0_i32_0 = arith.constant 0 : i32
    %c0_i32_1 = arith.constant 0 : i32
    return %c0_i32, %c0_i32_0 : i32, i32
  }
  func.func @transform_2(%arg0: i32) -> (i32, i32) {
    %c0_i32 = arith.constant 0 : i32
    %c0_i32_0 = arith.constant 0 : i32
    %c0_i32_1 = arith.constant 0 : i32
    return %c0_i32, %c0_i32_0 : i32, i32
  }
  func.func @transform_3(%arg0: i32) -> (i32, i32) {
    %c0_i32 = arith.constant 0 : i32
    %c0_i32_0 = arith.constant 0 : i32
    %c0_i32_1 = arith.constant 0 : i32
    return %c0_i32, %c0_i32_0 : i32, i32
  }
  func.func @transform_4(%arg0: i32) -> (i32, i32) {
    %c0_i32 = arith.constant 0 : i32
    %c0_i32_0 = arith.constant 0 : i32
    %c0_i32_1 = arith.constant 0 : i32
    return %c0_i32, %c0_i32_0 : i32, i32
  }
  func.func @transform_5(%arg0: i32) -> (i32, i32) {
    %c0_i32 = arith.constant 0 : i32
    %c0_i32_0 = arith.constant 0 : i32
    %c0_i32_1 = arith.constant 0 : i32
    return %c0_i32, %c0_i32_0 : i32, i32
  }
  func.func @transform_6(%arg0: i32) -> (i32, i32) {
    %c0_i32 = arith.constant 0 : i32
    %c0_i32_0 = arith.constant 0 : i32
    %c0_i32_1 = arith.constant 0 : i32
    return %c0_i32, %c0_i32_0 : i32, i32
  }
  func.func @transform_7(%arg0: i32) -> (i32, i32) {
    %c0_i32 = arith.constant 0 : i32
    %c0_i32_0 = arith.constant 0 : i32
    %c0_i32_1 = arith.constant 0 : i32
    return %c0_i32, %c0_i32_0 : i32, i32
  }
  func.func @transform_8(%arg0: i32) -> (i32, i32) {
    %c0_i32 = arith.constant 0 : i32
    %c0_i32_0 = arith.constant 0 : i32
    %c0_i32_1 = arith.constant 0 : i32
    return %c0_i32, %c0_i32_0 : i32, i32
  }
  func.func @transform_9(%arg0: i32) -> (i32, i32) {
    %c0_i32 = arith.constant 0 : i32
    %c0_i32_0 = arith.constant 0 : i32
    %c0_i32_1 = arith.constant 0 : i32
    return %c0_i32, %c0_i32_0 : i32, i32
  }
  func.func @transform_10(%arg0: i32) -> (i32, i32) {
    %c0_i32 = arith.constant 0 : i32
    %c0_i32_0 = arith.constant 0 : i32
    %c0_i32_1 = arith.constant 0 : i32
    return %c0_i32, %c0_i32_0 : i32, i32
  }
  func.func @transform_11(%arg0: i32) -> (i32, i32) {
    %c0_i32 = arith.constant 0 : i32
    %c0_i32_0 = arith.constant 0 : i32
    %c0_i32_1 = arith.constant 0 : i32
    return %c0_i32, %c0_i32_0 : i32, i32
  }
  func.func @transform_12(%arg0: i32) -> (i32, i32) {
    %c0_i32 = arith.constant 0 : i32
    %c0_i32_0 = arith.constant 0 : i32
    %c0_i32_1 = arith.constant 0 : i32
    return %c0_i32, %c0_i32_0 : i32, i32
  }
  func.func @transform_13(%arg0: i32) -> (i32, i32) {
    %c0_i32 = arith.constant 0 : i32
    %c0_i32_0 = arith.constant 0 : i32
    %c0_i32_1 = arith.constant 0 : i32
    return %c0_i32, %c0_i32_0 : i32, i32
  }
  func.func @transform_14(%arg0: i32) -> (i32, i32) {
    %c0_i32 = arith.constant 0 : i32
    %c0_i32_0 = arith.constant 0 : i32
    %c0_i32_1 = arith.constant 0 : i32
    return %c0_i32, %c0_i32_0 : i32, i32
  }
  func.func @transform_15(%arg0: i32) -> (i32, i32) {
    %c0_i32 = arith.constant 0 : i32
    %c0_i32_0 = arith.constant 0 : i32
    %c0_i32_1 = arith.constant 0 : i32
    return %c0_i32, %c0_i32_0 : i32, i32
  }
  func.func @transform_16(%arg0: i32) -> (i32, i32) {
    %c0_i32 = arith.constant 0 : i32
    %c0_i32_0 = arith.constant 0 : i32
    %c0_i32_1 = arith.constant 0 : i32
    return %c0_i32, %c0_i32_0 : i32, i32
  }
  func.func @transform_17(%arg0: i32) -> (i32, i32) {
    %c0_i32 = arith.constant 0 : i32
    %c0_i32_0 = arith.constant 0 : i32
    %c0_i32_1 = arith.constant 0 : i32
    return %c0_i32, %c0_i32_0 : i32, i32
  }
}

</mosaic_0001>

<llo_original>
// kernel: tpu_custom_call.1
$region0: #{tpu_custom_call.1}
  #allocation0 [shape = 'u32[]', space=smem, size = 0x4, offset = 0x4, fixed_abs, tag = 'smem constant byte address 0x4 - core index']
  #allocation1 [shape = 'u32[72,128]{1,0:T(1,128)}', space=vmem, size = 0x9000, scoped, tag = 'internal scratch']
  %s0 = inlined_call_operand.vmem [shape: f32[128,32], index: 0, kind: input, shape index: {}]
  %s1 = inlined_call_operand.vmem [shape: f32[1,32], index: 1, kind: input, shape index: {}]
  %s2 = inlined_call_operand.vmem [shape: f32[1,32], index: 2, kind: input, shape index: {}]
  %s3 = inlined_call_operand.vmem [shape: f32[32,96], index: 3, kind: input, shape index: {}]
  %s4 = inlined_call_operand.vmem [shape: f32[128,128], index: 4, kind: input, shape index: {}]
  %s5 = inlined_call_operand.vmem [shape: f32[4,32], index: 5, kind: input, shape index: {}]
  %s6 = inlined_call_operand.vmem [shape: f32[32,32], index: 6, kind: input, shape index: {}]
  %s7 = inlined_call_operand.vmem [shape: f32[1,32], index: 7, kind: input, shape index: {}]
  %s8 = inlined_call_operand.vmem [shape: f32[1,32], index: 8, kind: input, shape index: {}]
  %s9 = inlined_call_operand.vmem [shape: f32[1,32], index: 9, kind: input, shape index: {}]
  %s10 = inlined_call_operand.vmem [shape: f32[32,128], index: 10, kind: input, shape index: {}]
  %s11 = inlined_call_operand.vmem [shape: f32[1,128], index: 11, kind: input, shape index: {}]
  %s12 = inlined_call_operand.vmem [shape: f32[128,9], index: 12, kind: input, shape index: {}]
  %s13 = inlined_call_operand.vmem [shape: f32[9,128], index: 13, kind: input, shape index: {}]
  %s14 = inlined_call_operand.vmem [shape: f32[1,128], index: 14, kind: input, shape index: {}]
  %s15 = inlined_call_operand.vmem [shape: f32[128,32], index: 15, kind: input, shape index: {}]
  %s16 = inlined_call_operand.vmem [shape: f32[1,32], index: 16, kind: input, shape index: {}]
  %s17 = inlined_call_operand.vmem [shape: f32[128,32], index: 17, kind: output, shape index: {}]
  %s18 = sld [smem:[#allocation0]]
  $region78: #{tpu_custom_call.1} parent=0
    _
  %s20 = ssub.s32 1, %s18
  %s21 = scalar_select 0, %s20, %s18
  // Predicated region
  $region2: #{tpu_custom_call.1} parent=0 // pred_check
    _
  $region3: #{tpu_custom_call.1} parent=0 // pred_check_branch
    %23 = sbr.rel (0) target = $region5
  $region4: #{tpu_custom_call.1} parent=0 // pred_region
    _
  $region5: #{tpu_custom_call.1} parent=0 // pred_fallthru
    _
  // Predicated region
  $region6: #{tpu_custom_call.1} parent=0 // pred_check
    _
  $region7: #{tpu_custom_call.1} parent=0 // pred_check_branch
    %25 = sbr.rel (0) target = $region9
  $region8: #{tpu_custom_call.1} parent=0 // pred_region
    _
  $region9: #{tpu_custom_call.1} parent=0 // pred_fallthru
    _
  // Predicated region
  $region10: #{tpu_custom_call.1} parent=0 // pred_check
    _
  $region11: #{tpu_custom_call.1} parent=0 // pred_check_branch
    %27 = sbr.rel (0) target = $region13
  $region12: #{tpu_custom_call.1} parent=0 // pred_region
    _
  $region13: #{tpu_custom_call.1} parent=0 // pred_fallthru
    _
  // Predicated region
  $region14: #{tpu_custom_call.1} parent=0 // pred_check
    _
  $region15: #{tpu_custom_call.1} parent=0 // pred_check_branch
    %29 = sbr.rel (0) target = $region17
  $region16: #{tpu_custom_call.1} parent=0 // pred_region
    _
  $region17: #{tpu_custom_call.1} parent=0 // pred_fallthru
    _
  // Predicated region
  $region18: #{tpu_custom_call.1} parent=0 // pred_check
    _
  $region19: #{tpu_custom_call.1} parent=0 // pred_check_branch
    %31 = sbr.rel (0) target = $region21
  $region20: #{tpu_custom_call.1} parent=0 // pred_region
    _
  $region21: #{tpu_custom_call.1} parent=0 // pred_fallthru
    _
  // Predicated region
  $region22: #{tpu_custom_call.1} parent=0 // pred_check
    _
  $region23: #{tpu_custom_call.1} parent=0 // pred_check_branch
    %33 = sbr.rel (0) target = $region25
  $region24: #{tpu_custom_call.1} parent=0 // pred_region
    _
  $region25: #{tpu_custom_call.1} parent=0 // pred_fallthru
    _
  // Predicated region
  $region26: #{tpu_custom_call.1} parent=0 // pred_check
    _
  $region27: #{tpu_custom_call.1} parent=0 // pred_check_branch
    %35 = sbr.rel (0) target = $region29
  $region28: #{tpu_custom_call.1} parent=0 // pred_region
    _
  $region29: #{tpu_custom_call.1} parent=0 // pred_fallthru
    _
  // Predicated region
  $region30: #{tpu_custom_call.1} parent=0 // pred_check
    _
  $region31: #{tpu_custom_call.1} parent=0 // pred_check_branch
    %37 = sbr.rel (0) target = $region33
  $region32: #{tpu_custom_call.1} parent=0 // pred_region
    _
  $region33: #{tpu_custom_call.1} parent=0 // pred_fallthru
    _
  // Predicated region
  $region34: #{tpu_custom_call.1} parent=0 // pred_check
    _
  $region35: #{tpu_custom_call.1} parent=0 // pred_check_branch
    %39 = sbr.rel (0) target = $region37
  $region36: #{tpu_custom_call.1} parent=0 // pred_region
    _
  $region37: #{tpu_custom_call.1} parent=0 // pred_fallthru
    _
  // Predicated region
  $region38: #{tpu_custom_call.1} parent=0 // pred_check
    _
  $region39: #{tpu_custom_call.1} parent=0 // pred_check_branch
    %41 = sbr.rel (0) target = $region41
  $region40: #{tpu_custom_call.1} parent=0 // pred_region
    _
  $region41: #{tpu_custom_call.1} parent=0 // pred_fallthru
    _
  // Predicated region
  $region42: #{tpu_custom_call.1} parent=0 // pred_check
    _
  $region43: #{tpu_custom_call.1} parent=0 // pred_check_branch
    %43 = sbr.rel (0) target = $region45
  $region44: #{tpu_custom_call.1} parent=0 // pred_region
    _
  $region45: #{tpu_custom_call.1} parent=0 // pred_fallthru
    _
  // Predicated region
  $region46: #{tpu_custom_call.1} parent=0 // pred_check
    _
  $region47: #{tpu_custom_call.1} parent=0 // pred_check_branch
    %45 = sbr.rel (0) target = $region49
  $region48: #{tpu_custom_call.1} parent=0 // pred_region
    _
  $region49: #{tpu_custom_call.1} parent=0 // pred_fallthru
    _
  // Predicated region
  $region50: #{tpu_custom_call.1} parent=0 // pred_check
    _
  $region51: #{tpu_custom_call.1} parent=0 // pred_check_branch
    %47 = sbr.rel (0) target = $region53
  $region52: #{tpu_custom_call.1} parent=0 // pred_region
    _
  $region53: #{tpu_custom_call.1} parent=0 // pred_fallthru
    _
  // Predicated region
  $region54: #{tpu_custom_call.1} parent=0 // pred_check
    _
  $region55: #{tpu_custom_call.1} parent=0 // pred_check_branch
    %49 = sbr.rel (0) target = $region57
  $region56: #{tpu_custom_call.1} parent=0 // pred_region
    _
  $region57: #{tpu_custom_call.1} parent=0 // pred_fallthru
    _
  // Predicated region
  $region58: #{tpu_custom_call.1} parent=0 // pred_check
    _
  $region59: #{tpu_custom_call.1} parent=0 // pred_check_branch
    %51 = sbr.rel (0) target = $region61
  $region60: #{tpu_custom_call.1} parent=0 // pred_region
    _
  $region61: #{tpu_custom_call.1} parent=0 // pred_fallthru
    _
  // Predicated region
  $region62: #{tpu_custom_call.1} parent=0 // pred_check
    _
  $region63: #{tpu_custom_call.1} parent=0 // pred_check_branch
    %53 = sbr.rel (0) target = $region65
  $region64: #{tpu_custom_call.1} parent=0 // pred_region
    _
  $region65: #{tpu_custom_call.1} parent=0 // pred_fallthru
    _
  // Predicated region
  $region66: #{tpu_custom_call.1} parent=0 // pred_check
    _
  $region67: #{tpu_custom_call.1} parent=0 // pred_check_branch
    %55 = sbr.rel (0) target = $region69
  $region68: #{tpu_custom_call.1} parent=0 // pred_region
    _
  $region69: #{tpu_custom_call.1} parent=0 // pred_fallthru
    _
  %v56 = vld [vmem:[%s0] sm:$0xff]
  %v57 = vld [vmem:[%s0 + $0x8] sm:$0xff]
  %v58 = vld [vmem:[%s0 + $0x10] sm:$0xff]
  %v59 = vld [vmem:[%s0 + $0x18] sm:$0xff]
  %v60 = vld [vmem:[%s0 + $0x20] sm:$0xff]
  %v61 = vld [vmem:[%s0 + $0x28] sm:$0xff]
  %v62 = vld [vmem:[%s0 + $0x30] sm:$0xff]
  %v63 = vld [vmem:[%s0 + $0x38] sm:$0xff]
  %v64 = vld [vmem:[%s0 + $0x40] sm:$0xff]
  %v65 = vld [vmem:[%s0 + $0x48] sm:$0xff]
  %v66 = vld [vmem:[%s0 + $0x50] sm:$0xff]
  %v67 = vld [vmem:[%s0 + $0x58] sm:$0xff]
  %v68 = vld [vmem:[%s0 + $0x60] sm:$0xff]
  %v69 = vld [vmem:[%s0 + $0x68] sm:$0xff]
  %v70 = vld [vmem:[%s0 + $0x70] sm:$0xff]
  %v71 = vld [vmem:[%s0 + $0x78] sm:$0xff]
  %v72 = vld [vmem:[%s1] sm:$0x1]
  %v73 = vld [vmem:[%s2] sm:$0x1]
  %vm74 = vcmask 261120
  %v75 = vsel %vm74, %v56, 0.0
  %76 = vadd.xlane.f32.xlu0 %v75
  %v77 = vpop.xlane.xlu0 %76
  %v78 = vsel %vm74, %v57, 0.0
  %79 = vadd.xlane.f32.xlu0 %v78
  %v80 = vpop.xlane.xlu0 %79
  %v81 = vsel %vm74, %v58, 0.0
  %82 = vadd.xlane.f32.xlu0 %v81
  %v83 = vpop.xlane.xlu0 %82
  %v84 = vsel %vm74, %v59, 0.0
  %85 = vadd.xlane.f32.xlu0 %v84
  %v86 = vpop.xlane.xlu0 %85
  %v87 = vsel %vm74, %v60, 0.0
  %88 = vadd.xlane.f32.xlu0 %v87
  %v89 = vpop.xlane.xlu0 %88
  %v90 = vsel %vm74, %v61, 0.0
  %91 = vadd.xlane.f32.xlu0 %v90
  %v92 = vpop.xlane.xlu0 %91
  %v93 = vsel %vm74, %v62, 0.0
  %94 = vadd.xlane.f32.xlu0 %v93
  %v95 = vpop.xlane.xlu0 %94
  %v96 = vsel %vm74, %v63, 0.0
  %97 = vadd.xlane.f32.xlu0 %v96
  %v98 = vpop.xlane.xlu0 %97
  %v99 = vsel %vm74, %v64, 0.0
  %100 = vadd.xlane.f32.xlu0 %v99
  %v101 = vpop.xlane.xlu0 %100
  %v102 = vsel %vm74, %v65, 0.0
  %103 = vadd.xlane.f32.xlu0 %v102
  %v104 = vpop.xlane.xlu0 %103
  %v105 = vsel %vm74, %v66, 0.0
  %106 = vadd.xlane.f32.xlu0 %v105
  %v107 = vpop.xlane.xlu0 %106
  %v108 = vsel %vm74, %v67, 0.0
  %109 = vadd.xlane.f32.xlu0 %v108
  %v110 = vpop.xlane.xlu0 %109
  %v111 = vsel %vm74, %v68, 0.0
  %112 = vadd.xlane.f32.xlu0 %v111
  %v113 = vpop.xlane.xlu0 %112
  %v114 = vsel %vm74, %v69, 0.0
  %115 = vadd.xlane.f32.xlu0 %v114
  %v116 = vpop.xlane.xlu0 %115
  %v117 = vsel %vm74, %v70, 0.0
  %118 = vadd.xlane.f32.xlu0 %v117
  %v119 = vpop.xlane.xlu0 %118
  %v120 = vsel %vm74, %v71, 0.0
  %121 = vadd.xlane.f32.xlu0 %v120
  %v122 = vpop.xlane.xlu0 %121
  %v123 = vrcp.pop 32.0
  %v124 = vmul.f32 32.0, %v123
  %v125 = vsub.f32 1.0, %v124
  %v126 = vmul.f32 %v123, %v125
  %v127 = vadd.f32 %v123, %v126
  %vm128 = vweird.f32 %v123
  %v129 = vsel %vm128, %v123, %v127
  %v130 = vmul.f32 %v77, %v129
  %v131 = vmul.f32 %v80, %v129
  %v132 = vmul.f32 %v83, %v129
  %v133 = vmul.f32 %v86, %v129
  %v134 = vmul.f32 %v89, %v129
  %v135 = vmul.f32 %v92, %v129
  %v136 = vmul.f32 %v95, %v129
  %v137 = vmul.f32 %v98, %v129
  %v138 = vmul.f32 %v101, %v129
  %v139 = vmul.f32 %v104, %v129
  %v140 = vmul.f32 %v107, %v129
  %v141 = vmul.f32 %v110, %v129
  %v142 = vmul.f32 %v113, %v129
  %v143 = vmul.f32 %v116, %v129
  %v144 = vmul.f32 %v119, %v129
  %v145 = vmul.f32 %v122, %v129
  %v146 = vmul.f32 %v56, %v56
  %v147 = vmul.f32 %v57, %v57
  %v148 = vmul.f32 %v58, %v58
  %v149 = vmul.f32 %v59, %v59
  %v150 = vmul.f32 %v60, %v60
  %v151 = vmul.f32 %v61, %v61
  %v152 = vmul.f32 %v62, %v62
  %v153 = vmul.f32 %v63, %v63
  %v154 = vmul.f32 %v64, %v64
  %v155 = vmul.f32 %v65, %v65
  %v156 = vmul.f32 %v66, %v66
  %v157 = vmul.f32 %v67, %v67
  %v158 = vmul.f32 %v68, %v68
  %v159 = vmul.f32 %v69, %v69
  %v160 = vmul.f32 %v70, %v70
  %v161 = vmul.f32 %v71, %v71
  %v162 = vsel %vm74, %v146, 0.0
  %163 = vadd.xlane.f32.xlu0 %v162
  %v164 = vpop.xlane.xlu0 %163
  %v165 = vsel %vm74, %v147, 0.0
  %166 = vadd.xlane.f32.xlu0 %v165
  %v167 = vpop.xlane.xlu0 %166
  %v168 = vsel %vm74, %v148, 0.0
  %169 = vadd.xlane.f32.xlu0 %v168
  %v170 = vpop.xlane.xlu0 %169
  %v171 = vsel %vm74, %v149, 0.0
  %172 = vadd.xlane.f32.xlu0 %v171
  %v173 = vpop.xlane.xlu0 %172
  %v174 = vsel %vm74, %v150, 0.0
  %175 = vadd.xlane.f32.xlu0 %v174
  %v176 = vpop.xlane.xlu0 %175
  %v177 = vsel %vm74, %v151, 0.0
  %178 = vadd.xlane.f32.xlu0 %v177
  %v179 = vpop.xlane.xlu0 %178
  %v180 = vsel %vm74, %v152, 0.0
  %181 = vadd.xlane.f32.xlu0 %v180
  %v182 = vpop.xlane.xlu0 %181
  %v183 = vsel %vm74, %v153, 0.0
  %184 = vadd.xlane.f32.xlu0 %v183
  %v185 = vpop.xlane.xlu0 %184
  %v186 = vsel %vm74, %v154, 0.0
  %187 = vadd.xlane.f32.xlu0 %v186
  %v188 = vpop.xlane.xlu0 %187
  %v189 = vsel %vm74, %v155, 0.0
  %190 = vadd.xlane.f32.xlu0 %v189
  %v191 = vpop.xlane.xlu0 %190
  %v192 = vsel %vm74, %v156, 0.0
  %193 = vadd.xlane.f32.xlu0 %v192
  %v194 = vpop.xlane.xlu0 %193
  %v195 = vsel %vm74, %v157, 0.0
  %196 = vadd.xlane.f32.xlu0 %v195
  %v197 = vpop.xlane.xlu0 %196
  %v198 = vsel %vm74, %v158, 0.0
  %199 = vadd.xlane.f32.xlu0 %v198
  %v200 = vpop.xlane.xlu0 %199
  %v201 = vsel %vm74, %v159, 0.0
  %202 = vadd.xlane.f32.xlu0 %v201
  %v203 = vpop.xlane.xlu0 %202
  %v204 = vsel %vm74, %v160, 0.0
  %205 = vadd.xlane.f32.xlu0 %v204
  %v206 = vpop.xlane.xlu0 %205
  %v207 = vsel %vm74, %v161, 0.0
  %208 = vadd.xlane.f32.xlu0 %v207
  %v209 = vpop.xlane.xlu0 %208
  %v210 = vmul.f32 %v164, %v129
  %v211 = vmul.f32 %v167, %v129
  %v212 = vmul.f32 %v170, %v129
  %v213 = vmul.f32 %v173, %v129
  %v214 = vmul.f32 %v176, %v129
  %v215 = vmul.f32 %v179, %v129
  %v216 = vmul.f32 %v182, %v129
  %v217 = vmul.f32 %v185, %v129
  %v218 = vmul.f32 %v188, %v129
  %v219 = vmul.f32 %v191, %v129
  %v220 = vmul.f32 %v194, %v129
  %v221 = vmul.f32 %v197, %v129
  %v222 = vmul.f32 %v200, %v129
  %v223 = vmul.f32 %v203, %v129
  %v224 = vmul.f32 %v206, %v129
  %v225 = vmul.f32 %v209, %v129
  %v226 = vmul.f32 %v130, %v130
  %v227 = vmul.f32 %v131, %v131
  %v228 = vmul.f32 %v132, %v132
  %v229 = vmul.f32 %v133, %v133
  %v230 = vmul.f32 %v134, %v134
  %v231 = vmul.f32 %v135, %v135
  %v232 = vmul.f32 %v136, %v136
  %v233 = vmul.f32 %v137, %v137
  %v234 = vmul.f32 %v138, %v138
  %v235 = vmul.f32 %v139, %v139
  %v236 = vmul.f32 %v140, %v140
  %v237 = vmul.f32 %v141, %v141
  %v238 = vmul.f32 %v142, %v142
  %v239 = vmul.f32 %v143, %v143
  %v240 = vmul.f32 %v144, %v144
  %v241 = vmul.f32 %v145, %v145
  %v242 = vsub.f32 %v210, %v226
  %v243 = vsub.f32 %v211, %v227
  %v244 = vsub.f32 %v212, %v228
  %v245 = vsub.f32 %v213, %v229
  %v246 = vsub.f32 %v214, %v230
  %v247 = vsub.f32 %v215, %v231
  %v248 = vsub.f32 %v216, %v232
  %v249 = vsub.f32 %v217, %v233
  %v250 = vsub.f32 %v218, %v234
  %v251 = vsub.f32 %v219, %v235
  %v252 = vsub.f32 %v220, %v236
  %v253 = vsub.f32 %v221, %v237
  %v254 = vsub.f32 %v222, %v238
  %v255 = vsub.f32 %v223, %v239
  %v256 = vsub.f32 %v224, %v240
  %v257 = vsub.f32 %v225, %v241
  %v258 = vsub.f32 %v56, %v130
  %v259 = vsub.f32 %v57, %v131
  %v260 = vsub.f32 %v58, %v132
  %v261 = vsub.f32 %v59, %v133
  %v262 = vsub.f32 %v60, %v134
  %v263 = vsub.f32 %v61, %v135
  %v264 = vsub.f32 %v62, %v136
  %v265 = vsub.f32 %v63, %v137
  %v266 = vsub.f32 %v64, %v138
  %v267 = vsub.f32 %v65, %v139
  %v268 = vsub.f32 %v66, %v140
  %v269 = vsub.f32 %v67, %v141
  %v270 = vsub.f32 %v68, %v142
  %v271 = vsub.f32 %v69, %v143
  %v272 = vsub.f32 %v70, %v144
  %v273 = vsub.f32 %v71, %v145
  %v274 = vadd.f32 %v242, 1e-05
  %v275 = vadd.f32 %v243, 1e-05
  %v276 = vadd.f32 %v244, 1e-05
  %v277 = vadd.f32 %v245, 1e-05
  %v278 = vadd.f32 %v246, 1e-05
  %v279 = vadd.f32 %v247, 1e-05
  %v280 = vadd.f32 %v248, 1e-05
  %v281 = vadd.f32 %v249, 1e-05
  %v282 = vadd.f32 %v250, 1e-05
  %v283 = vadd.f32 %v251, 1e-05
  %v284 = vadd.f32 %v252, 1e-05
  %v285 = vadd.f32 %v253, 1e-05
  %v286 = vadd.f32 %v254, 1e-05
  %v287 = vadd.f32 %v255, 1e-05
  %v288 = vadd.f32 %v256, 1e-05
  %v289 = vadd.f32 %v257, 1e-05
  %v290 = vrsqrt.pop %v274
  %v291 = vmul.f32 %v290, %v274
  %v292 = vmul.f32 %v291, %v290
  %v293 = vmul.f32 0.5, %v292
  %v294 = vsub.f32 1.5, %v293
  %v295 = vmul.f32 %v290, %v294
  %vm296 = vweird.f32 %v274
  %vm297 = vweird.f32 %v290
  %vm298 = vmor %vm296, %vm297
  %v299 = vsel %vm298, %v290, %v295
  %v300 = vrsqrt.pop %v275
  %v301 = vmul.f32 %v300, %v275
  %v302 = vmul.f32 %v301, %v300
  %v303 = vmul.f32 0.5, %v302
  %v304 = vsub.f32 1.5, %v303
  %v305 = vmul.f32 %v300, %v304
  %vm306 = vweird.f32 %v275
  %vm307 = vweird.f32 %v300
  %vm308 = vmor %vm306, %vm307
  %v309 = vsel %vm308, %v300, %v305
  %v310 = vrsqrt.pop %v276
  %v311 = vmul.f32 %v310, %v276
  %v312 = vmul.f32 %v311, %v310
  %v313 = vmul.f32 0.5, %v312
  %v314 = vsub.f32 1.5, %v313
  %v315 = vmul.f32 %v310, %v314
  %vm316 = vweird.f32 %v276
  %vm317 = vweird.f32 %v310
  %vm318 = vmor %vm316, %vm317
  %v319 = vsel %vm318, %v310, %v315
  %v320 = vrsqrt.pop %v277
  %v321 = vmul.f32 %v320, %v277
  %v322 = vmul.f32 %v321, %v320
  %v323 = vmul.f32 0.5, %v322
  %v324 = vsub.f32 1.5, %v323
  %v325 = vmul.f32 %v320, %v324
  %vm326 = vweird.f32 %v277
  %vm327 = vweird.f32 %v320
  %vm328 = vmor %vm326, %vm327
  %v329 = vsel %vm328, %v320, %v325
  %v330 = vrsqrt.pop %v278
  %v331 = vmul.f32 %v330, %v278
  %v332 = vmul.f32 %v331, %v330
  %v333 = vmul.f32 0.5, %v332
  %v334 = vsub.f32 1.5, %v333
  %v335 = vmul.f32 %v330, %v334
  %vm336 = vweird.f32 %v278
  %vm337 = vweird.f32 %v330
  %vm338 = vmor %vm336, %vm337
  %v339 = vsel %vm338, %v330, %v335
  %v340 = vrsqrt.pop %v279
  %v341 = vmul.f32 %v340, %v279
  %v342 = vmul.f32 %v341, %v340
  %v343 = vmul.f32 0.5, %v342
  %v344 = vsub.f32 1.5, %v343
  %v345 = vmul.f32 %v340, %v344
  %vm346 = vweird.f32 %v279
  %vm347 = vweird.f32 %v340
  %vm348 = vmor %vm346, %vm347
  %v349 = vsel %vm348, %v340, %v345
  %v350 = vrsqrt.pop %v280
  %v351 = vmul.f32 %v350, %v280
  %v352 = vmul.f32 %v351, %v350
  %v353 = vmul.f32 0.5, %v352
  %v354 = vsub.f32 1.5, %v353
  %v355 = vmul.f32 %v350, %v354
  %vm356 = vweird.f32 %v280
  %vm357 = vweird.f32 %v350
  %vm358 = vmor %vm356, %vm357
  %v359 = vsel %vm358, %v350, %v355
  %v360 = vrsqrt.pop %v281
  %v361 = vmul.f32 %v360, %v281
  %v362 = vmul.f32 %v361, %v360
  %v363 = vmul.f32 0.5, %v362
  %v364 = vsub.f32 1.5, %v363
  %v365 = vmul.f32 %v360, %v364
  %vm366 = vweird.f32 %v281
  %vm367 = vweird.f32 %v360
  %vm368 = vmor %vm366, %vm367
  %v369 = vsel %vm368, %v360, %v365
  %v370 = vrsqrt.pop %v282
  %v371 = vmul.f32 %v370, %v282
  %v372 = vmul.f32 %v371, %v370
  %v373 = vmul.f32 0.5, %v372
  %v374 = vsub.f32 1.5, %v373
  %v375 = vmul.f32 %v370, %v374
  %vm376 = vweird.f32 %v282
  %vm377 = vweird.f32 %v370
  %vm378 = vmor %vm376, %vm377
  %v379 = vsel %vm378, %v370, %v375
  %v380 = vrsqrt.pop %v283
  %v381 = vmul.f32 %v380, %v283
  %v382 = vmul.f32 %v381, %v380
  %v383 = vmul.f32 0.5, %v382
  %v384 = vsub.f32 1.5, %v383
  %v385 = vmul.f32 %v380, %v384
  %vm386 = vweird.f32 %v283
  %vm387 = vweird.f32 %v380
  %vm388 = vmor %vm386, %vm387
  %v389 = vsel %vm388, %v380, %v385
  %v390 = vrsqrt.pop %v284
  %v391 = vmul.f32 %v390, %v284
  %v392 = vmul.f32 %v391, %v390
  %v393 = vmul.f32 0.5, %v392
  %v394 = vsub.f32 1.5, %v393
  %v395 = vmul.f32 %v390, %v394
  %vm396 = vweird.f32 %v284
  %vm397 = vweird.f32 %v390
  %vm398 = vmor %vm396, %vm397
  %v399 = vsel %vm398, %v390, %v395
  %v400 = vrsqrt.pop %v285
  %v401 = vmul.f32 %v400, %v285
  %v402 = vmul.f32 %v401, %v400
  %v403 = vmul.f32 0.5, %v402
  %v404 = vsub.f32 1.5, %v403
  %v405 = vmul.f32 %v400, %v404
  %vm406 = vweird.f32 %v285
  %vm407 = vweird.f32 %v400
  %vm408 = vmor %vm406, %vm407
  %v409 = vsel %vm408, %v400, %v405
  %v410 = vrsqrt.pop %v286
  %v411 = vmul.f32 %v410, %v286
  %v412 = vmul.f32 %v411, %v410
  %v413 = vmul.f32 0.5, %v412
  %v414 = vsub.f32 1.5, %v413
  %v415 = vmul.f32 %v410, %v414
  %vm416 = vweird.f32 %v286
  %vm417 = vweird.f32 %v410
  %vm418 = vmor %vm416, %vm417
  %v419 = vsel %vm418, %v410, %v415
  %v420 = vrsqrt.pop %v287
  %v421 = vmul.f32 %v420, %v287
  %v422 = vmul.f32 %v421, %v420
  %v423 = vmul.f32 0.5, %v422
  %v424 = vsub.f32 1.5, %v423
  %v425 = vmul.f32 %v420, %v424
  %vm426 = vweird.f32 %v287
  %vm427 = vweird.f32 %v420
  %vm428 = vmor %vm426, %vm427
  %v429 = vsel %vm428, %v420, %v425
  %v430 = vrsqrt.pop %v288
  %v431 = vmul.f32 %v430, %v288
  %v432 = vmul.f32 %v431, %v430
  %v433 = vmul.f32 0.5, %v432
  %v434 = vsub.f32 1.5, %v433
  %v435 = vmul.f32 %v430, %v434
  %vm436 = vweird.f32 %v288
  %vm437 = vweird.f32 %v430
  %vm438 = vmor %vm436, %vm437
  %v439 = vsel %vm438, %v430, %v435
  %v440 = vrsqrt.pop %v289
  %v441 = vmul.f32 %v440, %v289
  %v442 = vmul.f32 %v441, %v440
  %v443 = vmul.f32 0.5, %v442
  %v444 = vsub.f32 1.5, %v443
  %v445 = vmul.f32 %v440, %v444
  %vm446 = vweird.f32 %v289
  %vm447 = vweird.f32 %v440
  %vm448 = vmor %vm446, %vm447
  %v449 = vsel %vm448, %v440, %v445
  %v450 = vmul.f32 %v258, %v299
  %v451 = vmul.f32 %v259, %v309
  %v452 = vmul.f32 %v260, %v319
  %v453 = vmul.f32 %v261, %v329
  %v454 = vmul.f32 %v262, %v339
  %v455 = vmul.f32 %v263, %v349
  %v456 = vmul.f32 %v264, %v359
  %v457 = vmul.f32 %v265, %v369
  %v458 = vmul.f32 %v266, %v379
  %v459 = vmul.f32 %v267, %v389
  %v460 = vmul.f32 %v268, %v399
  %v461 = vmul.f32 %v269, %v409
  %v462 = vmul.f32 %v270, %v419
  %v463 = vmul.f32 %v271, %v429
  %v464 = vmul.f32 %v272, %v439
  %v465 = vmul.f32 %v273, %v449
  %v467 = vperm.slane %v72, 0
  %v469 = vmul.f32 %v450, %v467
  %v470 = vmul.f32 %v451, %v467
  %v471 = vmul.f32 %v452, %v467
  %v472 = vmul.f32 %v453, %v467
  %v473 = vmul.f32 %v454, %v467
  %v474 = vmul.f32 %v455, %v467
  %v475 = vmul.f32 %v456, %v467
  %v476 = vmul.f32 %v457, %v467
  %v477 = vmul.f32 %v458, %v467
  %v478 = vmul.f32 %v459, %v467
  %v479 = vmul.f32 %v460, %v467
  %v480 = vmul.f32 %v461, %v467
  %v481 = vmul.f32 %v462, %v467
  %v482 = vmul.f32 %v463, %v467
  %v483 = vmul.f32 %v464, %v467
  %v484 = vmul.f32 %v465, %v467
  %v486 = vperm.slane %v73, 0
  %v488 = vadd.f32 %v469, %v486
  %v489 = vadd.f32 %v470, %v486
  %v490 = vadd.f32 %v471, %v486
  %v491 = vadd.f32 %v472, %v486
  %v492 = vadd.f32 %v473, %v486
  %v493 = vadd.f32 %v474, %v486
  %v494 = vadd.f32 %v475, %v486
  %v495 = vadd.f32 %v476, %v486
  %v496 = vadd.f32 %v477, %v486
  %v497 = vadd.f32 %v478, %v486
  %v498 = vadd.f32 %v479, %v486
  %v499 = vadd.f32 %v480, %v486
  %v500 = vadd.f32 %v481, %v486
  %v501 = vadd.f32 %v482, %v486
  %v502 = vadd.f32 %v483, %v486
  %v503 = vadd.f32 %v484, %v486
  %v504 = vld [vmem:[%s3] sm:$0xff]
  %v505 = vld [vmem:[%s3 + $0x8] sm:$0xff]
  %v506 = vld [vmem:[%s3 + $0x10] sm:$0xff]
  %v507 = vld [vmem:[%s3 + $0x18] sm:$0xff]
  %v509 = vsel %vm74, %v488, 0
  %v512 = vsel %vm74, %v489, 0
  %v515 = vsel %vm74, %v490, 0
  %v518 = vsel %vm74, %v491, 0
  %v521 = vsel %vm74, %v492, 0
  %v524 = vsel %vm74, %v493, 0
  %v527 = vsel %vm74, %v494, 0
  %v530 = vsel %vm74, %v495, 0
  %v533 = vsel %vm74, %v496, 0
  %v536 = vsel %vm74, %v497, 0
  %v539 = vsel %vm74, %v498, 0
  %v542 = vsel %vm74, %v499, 0
  %v545 = vsel %vm74, %v500, 0
  %v548 = vsel %vm74, %v501, 0
  %v551 = vsel %vm74, %v502, 0
  %v554 = vsel %vm74, %v503, 0
  %556 = vmatpush.msra.mxu0 0.0
  %557 = vmatpush.msra.mxu0 0.0
  %558 = vmatpush.msra.mxu0 0.0
  %559 = vmatpush.msra.mxu0 0.0
  %560 = vmatpush.msra.mxu0 0.0
  %561 = vmatpush.msra.mxu0 0.0
  %562 = vmatpush.msra.mxu0 0.0
  %563 = vmatpush.msra.mxu0 0.0
  %564 = vmatpush.msra.mxu0 0.0
  %565 = vmatpush.msra.mxu0 0.0
  %566 = vmatpush.msra.mxu0 0.0
  %567 = vmatpush.msra.mxu0 0.0
  %568 = vmatpush.msra.mxu0 %v507
  %569 = vmatpush.msra.mxu0 %v506
  %570 = vmatpush.msra.mxu0 %v505
  %571 = vmatpush.msra.mxu0 %v504
  %572 = vmatmul.f32.gmra.mxu0 %v509
  %v573 = vpop.f32.mrf.mxu0
  %v574 = vadd.f32 0.0, %v573
  %575 = vmatmul.f32.gmra.mxu0 %v512
  %v576 = vpop.f32.mrf.mxu0
  %v577 = vadd.f32 0.0, %v576
  %578 = vmatmul.f32.gmra.mxu0 %v515
  %v579 = vpop.f32.mrf.mxu0
  %v580 = vadd.f32 0.0, %v579
  %581 = vmatmul.f32.gmra.mxu0 %v518
  %v582 = vpop.f32.mrf.mxu0
  %v583 = vadd.f32 0.0, %v582
  %584 = vmatmul.f32.gmra.mxu0 %v521
  %v585 = vpop.f32.mrf.mxu0
  %v586 = vadd.f32 0.0, %v585
  %587 = vmatmul.f32.gmra.mxu0 %v524
  %v588 = vpop.f32.mrf.mxu0
  %v589 = vadd.f32 0.0, %v588
  %590 = vmatmul.f32.gmra.mxu0 %v527
  %v591 = vpop.f32.mrf.mxu0
  %v592 = vadd.f32 0.0, %v591
  %593 = vmatmul.f32.gmra.mxu0 %v530
  %v594 = vpop.f32.mrf.mxu0
  %v595 = vadd.f32 0.0, %v594
  %596 = vmatmul.f32.gmra.mxu0 %v533
  %v597 = vpop.f32.mrf.mxu0
  %v598 = vadd.f32 0.0, %v597
  %599 = vmatmul.f32.gmra.mxu0 %v536
  %v600 = vpop.f32.mrf.mxu0
  %v601 = vadd.f32 0.0, %v600
  %602 = vmatmul.f32.gmra.mxu0 %v539
  %v603 = vpop.f32.mrf.mxu0
  %v604 = vadd.f32 0.0, %v603
  %605 = vmatmul.f32.gmra.mxu0 %v542
  %v606 = vpop.f32.mrf.mxu0
  %v607 = vadd.f32 0.0, %v606
  %608 = vmatmul.f32.gmra.mxu0 %v545
  %v609 = vpop.f32.mrf.mxu0
  %v610 = vadd.f32 0.0, %v609
  %611 = vmatmul.f32.gmra.mxu0 %v548
  %v612 = vpop.f32.mrf.mxu0
  %v613 = vadd.f32 0.0, %v612
  %614 = vmatmul.f32.gmra.mxu0 %v551
  %v615 = vpop.f32.mrf.mxu0
  %v616 = vadd.f32 0.0, %v615
  %617 = vmatmul.f32.gmra.mxu0 %v554
  %v618 = vpop.f32.mrf.mxu0
  %v619 = vadd.f32 0.0, %v618
  %620 = vdwg.mxu0
  %v621 = vld [vmem:[%s4] sm:$0xff]
  %v622 = vld [vmem:[%s4 + $0x8] sm:$0xff]
  %v623 = vld [vmem:[%s4 + $0x10] sm:$0xff]
  %v624 = vld [vmem:[%s4 + $0x18] sm:$0xff]
  %v625 = vld [vmem:[%s4 + $0x20] sm:$0xff]
  %v626 = vld [vmem:[%s4 + $0x28] sm:$0xff]
  %v627 = vld [vmem:[%s4 + $0x30] sm:$0xff]
  %v628 = vld [vmem:[%s4 + $0x38] sm:$0xff]
  %v629 = vld [vmem:[%s4 + $0x40] sm:$0xff]
  %v630 = vld [vmem:[%s4 + $0x48] sm:$0xff]
  %v631 = vld [vmem:[%s4 + $0x50] sm:$0xff]
  %v632 = vld [vmem:[%s4 + $0x58] sm:$0xff]
  %v633 = vld [vmem:[%s4 + $0x60] sm:$0xff]
  %v634 = vld [vmem:[%s4 + $0x68] sm:$0xff]
  %v635 = vld [vmem:[%s4 + $0x70] sm:$0xff]
  %v636 = vld [vmem:[%s4 + $0x78] sm:$0xff]
  %653 = vrot.lane.b32.xlu0 %v574, 96
  %v654 = vpop.permute.xlu0 %653
  %655 = vrot.lane.b32.xlu0 %v577, 96
  %v656 = vpop.permute.xlu0 %655
  %657 = vrot.lane.b32.xlu0 %v580, 96
  %v658 = vpop.permute.xlu0 %657
  %659 = vrot.lane.b32.xlu0 %v583, 96
  %v660 = vpop.permute.xlu0 %659
  %661 = vrot.lane.b32.xlu0 %v586, 96
  %v662 = vpop.permute.xlu0 %661
  %663 = vrot.lane.b32.xlu0 %v589, 96
  %v664 = vpop.permute.xlu0 %663
  %665 = vrot.lane.b32.xlu0 %v592, 96
  %v666 = vpop.permute.xlu0 %665
  %667 = vrot.lane.b32.xlu0 %v595, 96
  %v668 = vpop.permute.xlu0 %667
  %669 = vrot.lane.b32.xlu0 %v598, 96
  %v670 = vpop.permute.xlu0 %669
  %671 = vrot.lane.b32.xlu0 %v601, 96
  %v672 = vpop.permute.xlu0 %671
  %673 = vrot.lane.b32.xlu0 %v604, 96
  %v674 = vpop.permute.xlu0 %673
  %675 = vrot.lane.b32.xlu0 %v607, 96
  %v676 = vpop.permute.xlu0 %675
  %677 = vrot.lane.b32.xlu0 %v610, 96
  %v678 = vpop.permute.xlu0 %677
  %679 = vrot.lane.b32.xlu0 %v613, 96
  %v680 = vpop.permute.xlu0 %679
  %681 = vrot.lane.b32.xlu0 %v616, 96
  %v682 = vpop.permute.xlu0 %681
  %683 = vrot.lane.b32.xlu0 %v619, 96
  %v684 = vpop.permute.xlu0 %683
  %vm685 = vcmask 64512
  %v686 = vsel %vm685, %v574, 0
  %v688 = vsel %vm685, %v577, 0
  %v690 = vsel %vm685, %v580, 0
  %v692 = vsel %vm685, %v583, 0
  %v694 = vsel %vm685, %v586, 0
  %v696 = vsel %vm685, %v589, 0
  %v698 = vsel %vm685, %v592, 0
  %v700 = vsel %vm685, %v595, 0
  %v702 = vsel %vm685, %v598, 0
  %v704 = vsel %vm685, %v601, 0
  %v706 = vsel %vm685, %v604, 0
  %v708 = vsel %vm685, %v607, 0
  %v710 = vsel %vm685, %v610, 0
  %v712 = vsel %vm685, %v613, 0
  %v714 = vsel %vm685, %v616, 0
  %v716 = vsel %vm685, %v619, 0
  %v718 = vsel %vm685, %v654, 0
  %v720 = vsel %vm685, %v656, 0
  %v722 = vsel %vm685, %v658, 0
  %v724 = vsel %vm685, %v660, 0
  %v726 = vsel %vm685, %v662, 0
  %v728 = vsel %vm685, %v664, 0
  %v730 = vsel %vm685, %v666, 0
  %v732 = vsel %vm685, %v668, 0
  %v734 = vsel %vm685, %v670, 0
  %v736 = vsel %vm685, %v672, 0
  %v738 = vsel %vm685, %v674, 0
  %v740 = vsel %vm685, %v676, 0
  %v742 = vsel %vm685, %v678, 0
  %v744 = vsel %vm685, %v680, 0
  %v746 = vsel %vm685, %v682, 0
  %v748 = vsel %vm685, %v684, 0
  %750 = vmatpush.xpose.msra.mxu0 %v748
  %751 = vmatpush.xpose.msra.mxu0 %v746
  %752 = vmatpush.xpose.msra.mxu0 %v744
  %753 = vmatpush.xpose.msra.mxu0 %v742
  %754 = vmatpush.xpose.msra.mxu0 %v740
  %755 = vmatpush.xpose.msra.mxu0 %v738
  %756 = vmatpush.xpose.msra.mxu0 %v736
  %757 = vmatpush.xpose.msra.mxu0 %v734
  %758 = vmatpush.xpose.msra.mxu0 %v732
  %759 = vmatpush.xpose.msra.mxu0 %v730
  %760 = vmatpush.xpose.msra.mxu0 %v728
  %761 = vmatpush.xpose.msra.mxu0 %v726
  %762 = vmatpush.xpose.msra.mxu0 %v724
  %763 = vmatpush.xpose.msra.mxu0 %v722
  %764 = vmatpush.xpose.msra.mxu0 %v720
  %765 = vmatpush.xpose.msra.mxu0 %v718
  %766 = vmatmul.f32.gmra.mxu0 %v686
  %v767 = vpop.f32.mrf.mxu0
  %v768 = vadd.f32 %v621, %v767
  %769 = vmatmul.f32.gmra.mxu0 %v688
  %v770 = vpop.f32.mrf.mxu0
  %v771 = vadd.f32 %v622, %v770
  %772 = vmatmul.f32.gmra.mxu0 %v690
  %v773 = vpop.f32.mrf.mxu0
  %v774 = vadd.f32 %v623, %v773
  %775 = vmatmul.f32.gmra.mxu0 %v692
  %v776 = vpop.f32.mrf.mxu0
  %v777 = vadd.f32 %v624, %v776
  %778 = vmatmul.f32.gmra.mxu0 %v694
  %v779 = vpop.f32.mrf.mxu0
  %v780 = vadd.f32 %v625, %v779
  %781 = vmatmul.f32.gmra.mxu0 %v696
  %v782 = vpop.f32.mrf.mxu0
  %v783 = vadd.f32 %v626, %v782
  %784 = vmatmul.f32.gmra.mxu0 %v698
  %v785 = vpop.f32.mrf.mxu0
  %v786 = vadd.f32 %v627, %v785
  %787 = vmatmul.f32.gmra.mxu0 %v700
  %v788 = vpop.f32.mrf.mxu0
  %v789 = vadd.f32 %v628, %v788
  %790 = vmatmul.f32.gmra.mxu0 %v702
  %v791 = vpop.f32.mrf.mxu0
  %v792 = vadd.f32 %v629, %v791
  %793 = vmatmul.f32.gmra.mxu0 %v704
  %v794 = vpop.f32.mrf.mxu0
  %v795 = vadd.f32 %v630, %v794
  %796 = vmatmul.f32.gmra.mxu0 %v706
  %v797 = vpop.f32.mrf.mxu0
  %v798 = vadd.f32 %v631, %v797
  %799 = vmatmul.f32.gmra.mxu0 %v708
  %v800 = vpop.f32.mrf.mxu0
  %v801 = vadd.f32 %v632, %v800
  %802 = vmatmul.f32.gmra.mxu0 %v710
  %v803 = vpop.f32.mrf.mxu0
  %v804 = vadd.f32 %v633, %v803
  %805 = vmatmul.f32.gmra.mxu0 %v712
  %v806 = vpop.f32.mrf.mxu0
  %v807 = vadd.f32 %v634, %v806
  %808 = vmatmul.f32.gmra.mxu0 %v714
  %v809 = vpop.f32.mrf.mxu0
  %v810 = vadd.f32 %v635, %v809
  %811 = vmatmul.f32.gmra.mxu0 %v716
  %v812 = vpop.f32.mrf.mxu0
  %v813 = vadd.f32 %v636, %v812
  %814 = vdwg.mxu0
  %815 = vmax.xlane.f32.xlu0 %v768
  %v816 = vpop.xlane.xlu0 %815
  %817 = vmax.xlane.f32.xlu0 %v771
  %v818 = vpop.xlane.xlu0 %817
  %819 = vmax.xlane.f32.xlu0 %v774
  %v820 = vpop.xlane.xlu0 %819
  %821 = vmax.xlane.f32.xlu0 %v777
  %v822 = vpop.xlane.xlu0 %821
  %823 = vmax.xlane.f32.xlu0 %v780
  %v824 = vpop.xlane.xlu0 %823
  %825 = vmax.xlane.f32.xlu0 %v783
  %v826 = vpop.xlane.xlu0 %825
  %827 = vmax.xlane.f32.xlu0 %v786
  %v828 = vpop.xlane.xlu0 %827
  %829 = vmax.xlane.f32.xlu0 %v789
  %v830 = vpop.xlane.xlu0 %829
  %831 = vmax.xlane.f32.xlu0 %v792
  %v832 = vpop.xlane.xlu0 %831
  %833 = vmax.xlane.f32.xlu0 %v795
  %v834 = vpop.xlane.xlu0 %833
  %835 = vmax.xlane.f32.xlu0 %v798
  %v836 = vpop.xlane.xlu0 %835
  %837 = vmax.xlane.f32.xlu0 %v801
  %v838 = vpop.xlane.xlu0 %837
  %839 = vmax.xlane.f32.xlu0 %v804
  %v840 = vpop.xlane.xlu0 %839
  %841 = vmax.xlane.f32.xlu0 %v807
  %v842 = vpop.xlane.xlu0 %841
  %843 = vmax.xlane.f32.xlu0 %v810
  %v844 = vpop.xlane.xlu0 %843
  %845 = vmax.xlane.f32.xlu0 %v813
  %v846 = vpop.xlane.xlu0 %845
  %v847 = vsub.f32 %v768, %v816
  %v848 = vsub.f32 %v771, %v818
  %v849 = vsub.f32 %v774, %v820
  %v850 = vsub.f32 %v777, %v822
  %v851 = vsub.f32 %v780, %v824
  %v852 = vsub.f32 %v783, %v826
  %v853 = vsub.f32 %v786, %v828
  %v854 = vsub.f32 %v789, %v830
  %v855 = vsub.f32 %v792, %v832
  %v856 = vsub.f32 %v795, %v834
  %v857 = vsub.f32 %v798, %v836
  %v858 = vsub.f32 %v801, %v838
  %v859 = vsub.f32 %v804, %v840
  %v860 = vsub.f32 %v807, %v842
  %v861 = vsub.f32 %v810, %v844
  %v862 = vsub.f32 %v813, %v846
  %v863 = vmul.f32 %v847, 1.442695
  %v864 = vpow.pop %v863
  %v865 = vmul.f32 %v848, 1.442695
  %v866 = vpow.pop %v865
  %v867 = vmul.f32 %v849, 1.442695
  %v868 = vpow.pop %v867
  %v869 = vmul.f32 %v850, 1.442695
  %v870 = vpow.pop %v869
  %v871 = vmul.f32 %v851, 1.442695
  %v872 = vpow.pop %v871
  %v873 = vmul.f32 %v852, 1.442695
  %v874 = vpow.pop %v873
  %v875 = vmul.f32 %v853, 1.442695
  %v876 = vpow.pop %v875
  %v877 = vmul.f32 %v854, 1.442695
  %v878 = vpow.pop %v877
  %v879 = vmul.f32 %v855, 1.442695
  %v880 = vpow.pop %v879
  %v881 = vmul.f32 %v856, 1.442695
  %v882 = vpow.pop %v881
  %v883 = vmul.f32 %v857, 1.442695
  %v884 = vpow.pop %v883
  %v885 = vmul.f32 %v858, 1.442695
  %v886 = vpow.pop %v885
  %v887 = vmul.f32 %v859, 1.442695
  %v888 = vpow.pop %v887
  %v889 = vmul.f32 %v860, 1.442695
  %v890 = vpow.pop %v889
  %v891 = vmul.f32 %v861, 1.442695
  %v892 = vpow.pop %v891
  %v893 = vmul.f32 %v862, 1.442695
  %v894 = vpow.pop %v893
  %895 = vadd.xlane.f32.xlu0 %v864
  %v896 = vpop.xlane.xlu0 %895
  %897 = vadd.xlane.f32.xlu0 %v866
  %v898 = vpop.xlane.xlu0 %897
  %899 = vadd.xlane.f32.xlu0 %v868
  %v900 = vpop.xlane.xlu0 %899
  %901 = vadd.xlane.f32.xlu0 %v870
  %v902 = vpop.xlane.xlu0 %901
  %903 = vadd.xlane.f32.xlu0 %v872
  %v904 = vpop.xlane.xlu0 %903
  %905 = vadd.xlane.f32.xlu0 %v874
  %v906 = vpop.xlane.xlu0 %905
  %907 = vadd.xlane.f32.xlu0 %v876
  %v908 = vpop.xlane.xlu0 %907
  %909 = vadd.xlane.f32.xlu0 %v878
  %v910 = vpop.xlane.xlu0 %909
  %911 = vadd.xlane.f32.xlu0 %v880
  %v912 = vpop.xlane.xlu0 %911
  %913 = vadd.xlane.f32.xlu0 %v882
  %v914 = vpop.xlane.xlu0 %913
  %915 = vadd.xlane.f32.xlu0 %v884
  %v916 = vpop.xlane.xlu0 %915
  %917 = vadd.xlane.f32.xlu0 %v886
  %v918 = vpop.xlane.xlu0 %917
  %919 = vadd.xlane.f32.xlu0 %v888
  %v920 = vpop.xlane.xlu0 %919
  %921 = vadd.xlane.f32.xlu0 %v890
  %v922 = vpop.xlane.xlu0 %921
  %923 = vadd.xlane.f32.xlu0 %v892
  %v924 = vpop.xlane.xlu0 %923
  %925 = vadd.xlane.f32.xlu0 %v894
  %v926 = vpop.xlane.xlu0 %925
  %v927 = vrcp.pop %v896
  %v928 = vrcp.pop %v898
  %v929 = vrcp.pop %v900
  %v930 = vrcp.pop %v902
  %v931 = vrcp.pop %v904
  %v932 = vrcp.pop %v906
  %v933 = vrcp.pop %v908
  %v934 = vrcp.pop %v910
  %v935 = vrcp.pop %v912
  %v936 = vrcp.pop %v914
  %v937 = vrcp.pop %v916
  %v938 = vrcp.pop %v918
  %v939 = vrcp.pop %v920
  %v940 = vrcp.pop %v922
  %v941 = vrcp.pop %v924
  %v942 = vrcp.pop %v926
  %v943 = vmul.f32 %v864, %v927
  %v944 = vmul.f32 %v866, %v928
  %v945 = vmul.f32 %v868, %v929
  %v946 = vmul.f32 %v870, %v930
  %v947 = vmul.f32 %v872, %v931
  %v948 = vmul.f32 %v874, %v932
  %v949 = vmul.f32 %v876, %v933
  %v950 = vmul.f32 %v878, %v934
  %v951 = vmul.f32 %v880, %v935
  %v952 = vmul.f32 %v882, %v936
  %v953 = vmul.f32 %v884, %v937
  %v954 = vmul.f32 %v886, %v938
  %v955 = vmul.f32 %v888, %v939
  %v956 = vmul.f32 %v890, %v940
  %v957 = vmul.f32 %v892, %v941
  %v958 = vmul.f32 %v894, %v942
  %v959 = vld [vmem:[%s5] sm:$0x1]
  %v960 = vperm.slane %v959, 0
  %962 = vrot.lane.b32.xlu0 %v960, 64
  %v963 = vpop.permute.xlu0 %962
  %v965 = vmul.f32 %v574, %v963
  %v966 = vmul.f32 %v577, %v963
  %v967 = vmul.f32 %v580, %v963
  %v968 = vmul.f32 %v583, %v963
  %v969 = vmul.f32 %v586, %v963
  %v970 = vmul.f32 %v589, %v963
  %v971 = vmul.f32 %v592, %v963
  %v972 = vmul.f32 %v595, %v963
  %v973 = vmul.f32 %v598, %v963
  %v974 = vmul.f32 %v601, %v963
  %v975 = vmul.f32 %v604, %v963
  %v976 = vmul.f32 %v607, %v963
  %v977 = vmul.f32 %v610, %v963
  %v978 = vmul.f32 %v613, %v963
  %v979 = vmul.f32 %v616, %v963
  %v980 = vmul.f32 %v619, %v963
  %981 = vrot.lane.b32.xlu0 %v574, 120
  %v982 = vpop.permute.xlu0 %981
  %983 = vrot.lane.b32.xlu0 %v577, 120
  %v984 = vpop.permute.xlu0 %983
  %985 = vrot.lane.b32.xlu0 %v580, 120
  %v986 = vpop.permute.xlu0 %985
  %987 = vrot.lane.b32.xlu0 %v583, 120
  %v988 = vpop.permute.xlu0 %987
  %989 = vrot.lane.b32.xlu0 %v586, 120
  %v990 = vpop.permute.xlu0 %989
  %991 = vrot.lane.b32.xlu0 %v589, 120
  %v992 = vpop.permute.xlu0 %991
  %993 = vrot.lane.b32.xlu0 %v592, 120
  %v994 = vpop.permute.xlu0 %993
  %995 = vrot.lane.b32.xlu0 %v595, 120
  %v996 = vpop.permute.xlu0 %995
  %997 = vrot.lane.b32.xlu0 %v598, 120
  %v998 = vpop.permute.xlu0 %997
  %999 = vrot.lane.b32.xlu0 %v601, 120
  %v1000 = vpop.permute.xlu0 %999
  %1001 = vrot.lane.b32.xlu0 %v604, 120
  %v1002 = vpop.permute.xlu0 %1001
  %1003 = vrot.lane.b32.xlu0 %v607, 120
  %v1004 = vpop.permute.xlu0 %1003
  %1005 = vrot.lane.b32.xlu0 %v610, 120
  %v1006 = vpop.permute.xlu0 %1005
  %1007 = vrot.lane.b32.xlu0 %v613, 120
  %v1008 = vpop.permute.xlu0 %1007
  %1009 = vrot.lane.b32.xlu0 %v616, 120
  %v1010 = vpop.permute.xlu0 %1009
  %1011 = vrot.lane.b32.xlu0 %v619, 120
  %v1012 = vpop.permute.xlu0 %1011
  %1013 = vrot.lane.b32.xlu0 %v574, 88
  %v1014 = vpop.permute.xlu0 %1013
  %1015 = vrot.lane.b32.xlu0 %v577, 88
  %v1016 = vpop.permute.xlu0 %1015
  %1017 = vrot.lane.b32.xlu0 %v580, 88
  %v1018 = vpop.permute.xlu0 %1017
  %1019 = vrot.lane.b32.xlu0 %v583, 88
  %v1020 = vpop.permute.xlu0 %1019
  %1021 = vrot.lane.b32.xlu0 %v586, 88
  %v1022 = vpop.permute.xlu0 %1021
  %1023 = vrot.lane.b32.xlu0 %v589, 88
  %v1024 = vpop.permute.xlu0 %1023
  %1025 = vrot.lane.b32.xlu0 %v592, 88
  %v1026 = vpop.permute.xlu0 %1025
  %1027 = vrot.lane.b32.xlu0 %v595, 88
  %v1028 = vpop.permute.xlu0 %1027
  %1029 = vrot.lane.b32.xlu0 %v598, 88
  %v1030 = vpop.permute.xlu0 %1029
  %1031 = vrot.lane.b32.xlu0 %v601, 88
  %v1032 = vpop.permute.xlu0 %1031
  %1033 = vrot.lane.b32.xlu0 %v604, 88
  %v1034 = vpop.permute.xlu0 %1033
  %1035 = vrot.lane.b32.xlu0 %v607, 88
  %v1036 = vpop.permute.xlu0 %1035
  %1037 = vrot.lane.b32.xlu0 %v610, 88
  %v1038 = vpop.permute.xlu0 %1037
  %1039 = vrot.lane.b32.xlu0 %v613, 88
  %v1040 = vpop.permute.xlu0 %1039
  %1041 = vrot.lane.b32.xlu0 %v616, 88
  %v1042 = vpop.permute.xlu0 %1041
  %1043 = vrot.lane.b32.xlu0 %v619, 88
  %v1044 = vpop.permute.xlu0 %1043
  %v1045 = vsel %vm685, %v982, 0
  %v1047 = vsel %vm685, %v984, 0
  %v1049 = vsel %vm685, %v986, 0
  %v1051 = vsel %vm685, %v988, 0
  %v1053 = vsel %vm685, %v990, 0
  %v1055 = vsel %vm685, %v992, 0
  %v1057 = vsel %vm685, %v994, 0
  %v1059 = vsel %vm685, %v996, 0
  %v1061 = vsel %vm685, %v998, 0
  %v1063 = vsel %vm685, %v1000, 0
  %v1065 = vsel %vm685, %v1002, 0
  %v1067 = vsel %vm685, %v1004, 0
  %v1069 = vsel %vm685, %v1006, 0
  %v1071 = vsel %vm685, %v1008, 0
  %v1073 = vsel %vm685, %v1010, 0
  %v1075 = vsel %vm685, %v1012, 0
  %v1077 = vsel %vm685, %v1014, 0
  %v1079 = vsel %vm685, %v1016, 0
  %v1081 = vsel %vm685, %v1018, 0
  %v1083 = vsel %vm685, %v1020, 0
  %v1085 = vsel %vm685, %v1022, 0
  %v1087 = vsel %vm685, %v1024, 0
  %v1089 = vsel %vm685, %v1026, 0
  %v1091 = vsel %vm685, %v1028, 0
  %v1093 = vsel %vm685, %v1030, 0
  %v1095 = vsel %vm685, %v1032, 0
  %v1097 = vsel %vm685, %v1034, 0
  %v1099 = vsel %vm685, %v1036, 0
  %v1101 = vsel %vm685, %v1038, 0
  %v1103 = vsel %vm685, %v1040, 0
  %v1105 = vsel %vm685, %v1042, 0
  %v1107 = vsel %vm685, %v1044, 0
  %1109 = vmatpush.xpose.msra.mxu0 %v1107
  %1110 = vmatpush.xpose.msra.mxu0 %v1105
  %1111 = vmatpush.xpose.msra.mxu0 %v1103
  %1112 = vmatpush.xpose.msra.mxu0 %v1101
  %1113 = vmatpush.xpose.msra.mxu0 %v1099
  %1114 = vmatpush.xpose.msra.mxu0 %v1097
  %1115 = vmatpush.xpose.msra.mxu0 %v1095
  %1116 = vmatpush.xpose.msra.mxu0 %v1093
  %1117 = vmatpush.xpose.msra.mxu0 %v1091
  %1118 = vmatpush.xpose.msra.mxu0 %v1089
  %1119 = vmatpush.xpose.msra.mxu0 %v1087
  %1120 = vmatpush.xpose.msra.mxu0 %v1085
  %1121 = vmatpush.xpose.msra.mxu0 %v1083
  %1122 = vmatpush.xpose.msra.mxu0 %v1081
  %1123 = vmatpush.xpose.msra.mxu0 %v1079
  %1124 = vmatpush.xpose.msra.mxu0 %v1077
  %1125 = vmatmul.f32.gmra.mxu0 %v1045
  %v1126 = vpop.f32.mrf.mxu0
  %v1127 = vadd.f32 %v621, %v1126
  %1128 = vmatmul.f32.gmra.mxu0 %v1047
  %v1129 = vpop.f32.mrf.mxu0
  %v1130 = vadd.f32 %v622, %v1129
  %1131 = vmatmul.f32.gmra.mxu0 %v1049
  %v1132 = vpop.f32.mrf.mxu0
  %v1133 = vadd.f32 %v623, %v1132
  %1134 = vmatmul.f32.gmra.mxu0 %v1051
  %v1135 = vpop.f32.mrf.mxu0
  %v1136 = vadd.f32 %v624, %v1135
  %1137 = vmatmul.f32.gmra.mxu0 %v1053
  %v1138 = vpop.f32.mrf.mxu0
  %v1139 = vadd.f32 %v625, %v1138
  %1140 = vmatmul.f32.gmra.mxu0 %v1055
  %v1141 = vpop.f32.mrf.mxu0
  %v1142 = vadd.f32 %v626, %v1141
  %1143 = vmatmul.f32.gmra.mxu0 %v1057
  %v1144 = vpop.f32.mrf.mxu0
  %v1145 = vadd.f32 %v627, %v1144
  %1146 = vmatmul.f32.gmra.mxu0 %v1059
  %v1147 = vpop.f32.mrf.mxu0
  %v1148 = vadd.f32 %v628, %v1147
  %1149 = vmatmul.f32.gmra.mxu0 %v1061
  %v1150 = vpop.f32.mrf.mxu0
  %v1151 = vadd.f32 %v629, %v1150
  %1152 = vmatmul.f32.gmra.mxu0 %v1063
  %v1153 = vpop.f32.mrf.mxu0
  %v1154 = vadd.f32 %v630, %v1153
  %1155 = vmatmul.f32.gmra.mxu0 %v1065
  %v1156 = vpop.f32.mrf.mxu0
  %v1157 = vadd.f32 %v631, %v1156
  %1158 = vmatmul.f32.gmra.mxu0 %v1067
  %v1159 = vpop.f32.mrf.mxu0
  %v1160 = vadd.f32 %v632, %v1159
  %1161 = vmatmul.f32.gmra.mxu0 %v1069
  %v1162 = vpop.f32.mrf.mxu0
  %v1163 = vadd.f32 %v633, %v1162
  %1164 = vmatmul.f32.gmra.mxu0 %v1071
  %v1165 = vpop.f32.mrf.mxu0
  %v1166 = vadd.f32 %v634, %v1165
  %1167 = vmatmul.f32.gmra.mxu0 %v1073
  %v1168 = vpop.f32.mrf.mxu0
  %v1169 = vadd.f32 %v635, %v1168
  %1170 = vmatmul.f32.gmra.mxu0 %v1075
  %v1171 = vpop.f32.mrf.mxu0
  %v1172 = vadd.f32 %v636, %v1171
  %1173 = vdwg.mxu0
  %1174 = vmax.xlane.f32.xlu0 %v1127
  %v1175 = vpop.xlane.xlu0 %1174
  %1176 = vmax.xlane.f32.xlu0 %v1130
  %v1177 = vpop.xlane.xlu0 %1176
  %1178 = vmax.xlane.f32.xlu0 %v1133
  %v1179 = vpop.xlane.xlu0 %1178
  %1180 = vmax.xlane.f32.xlu0 %v1136
  %v1181 = vpop.xlane.xlu0 %1180
  %1182 = vmax.xlane.f32.xlu0 %v1139
  %v1183 = vpop.xlane.xlu0 %1182
  %1184 = vmax.xlane.f32.xlu0 %v1142
  %v1185 = vpop.xlane.xlu0 %1184
  %1186 = vmax.xlane.f32.xlu0 %v1145
  %v1187 = vpop.xlane.xlu0 %1186
  %1188 = vmax.xlane.f32.xlu0 %v1148
  %v1189 = vpop.xlane.xlu0 %1188
  %1190 = vmax.xlane.f32.xlu0 %v1151
  %v1191 = vpop.xlane.xlu0 %1190
  %1192 = vmax.xlane.f32.xlu0 %v1154
  %v1193 = vpop.xlane.xlu0 %1192
  %1194 = vmax.xlane.f32.xlu0 %v1157
  %v1195 = vpop.xlane.xlu0 %1194
  %1196 = vmax.xlane.f32.xlu0 %v1160
  %v1197 = vpop.xlane.xlu0 %1196
  %1198 = vmax.xlane.f32.xlu0 %v1163
  %v1199 = vpop.xlane.xlu0 %1198
  %1200 = vmax.xlane.f32.xlu0 %v1166
  %v1201 = vpop.xlane.xlu0 %1200
  %1202 = vmax.xlane.f32.xlu0 %v1169
  %v1203 = vpop.xlane.xlu0 %1202
  %1204 = vmax.xlane.f32.xlu0 %v1172
  %v1205 = vpop.xlane.xlu0 %1204
  %v1206 = vsub.f32 %v1127, %v1175
  %v1207 = vsub.f32 %v1130, %v1177
  %v1208 = vsub.f32 %v1133, %v1179
  %v1209 = vsub.f32 %v1136, %v1181
  %v1210 = vsub.f32 %v1139, %v1183
  %v1211 = vsub.f32 %v1142, %v1185
  %v1212 = vsub.f32 %v1145, %v1187
  %v1213 = vsub.f32 %v1148, %v1189
  %v1214 = vsub.f32 %v1151, %v1191
  %v1215 = vsub.f32 %v1154, %v1193
  %v1216 = vsub.f32 %v1157, %v1195
  %v1217 = vsub.f32 %v1160, %v1197
  %v1218 = vsub.f32 %v1163, %v1199
  %v1219 = vsub.f32 %v1166, %v1201
  %v1220 = vsub.f32 %v1169, %v1203
  %v1221 = vsub.f32 %v1172, %v1205
  %v1222 = vmul.f32 %v1206, 1.442695
  %v1223 = vpow.pop %v1222
  %v1224 = vmul.f32 %v1207, 1.442695
  %v1225 = vpow.pop %v1224
  %v1226 = vmul.f32 %v1208, 1.442695
  %v1227 = vpow.pop %v1226
  %v1228 = vmul.f32 %v1209, 1.442695
  %v1229 = vpow.pop %v1228
  %v1230 = vmul.f32 %v1210, 1.442695
  %v1231 = vpow.pop %v1230
  %v1232 = vmul.f32 %v1211, 1.442695
  %v1233 = vpow.pop %v1232
  %v1234 = vmul.f32 %v1212, 1.442695
  %v1235 = vpow.pop %v1234
  %v1236 = vmul.f32 %v1213, 1.442695
  %v1237 = vpow.pop %v1236
  %v1238 = vmul.f32 %v1214, 1.442695
  %v1239 = vpow.pop %v1238
  %v1240 = vmul.f32 %v1215, 1.442695
  %v1241 = vpow.pop %v1240
  %v1242 = vmul.f32 %v1216, 1.442695
  %v1243 = vpow.pop %v1242
  %v1244 = vmul.f32 %v1217, 1.442695
  %v1245 = vpow.pop %v1244
  %v1246 = vmul.f32 %v1218, 1.442695
  %v1247 = vpow.pop %v1246
  %v1248 = vmul.f32 %v1219, 1.442695
  %v1249 = vpow.pop %v1248
  %v1250 = vmul.f32 %v1220, 1.442695
  %v1251 = vpow.pop %v1250
  %v1252 = vmul.f32 %v1221, 1.442695
  %v1253 = vpow.pop %v1252
  %1254 = vadd.xlane.f32.xlu0 %v1223
  %v1255 = vpop.xlane.xlu0 %1254
  %1256 = vadd.xlane.f32.xlu0 %v1225
  %v1257 = vpop.xlane.xlu0 %1256
  %1258 = vadd.xlane.f32.xlu0 %v1227
  %v1259 = vpop.xlane.xlu0 %1258
  %1260 = vadd.xlane.f32.xlu0 %v1229
  %v1261 = vpop.xlane.xlu0 %1260
  %1262 = vadd.xlane.f32.xlu0 %v1231
  %v1263 = vpop.xlane.xlu0 %1262
  %1264 = vadd.xlane.f32.xlu0 %v1233
  %v1265 = vpop.xlane.xlu0 %1264
  %1266 = vadd.xlane.f32.xlu0 %v1235
  %v1267 = vpop.xlane.xlu0 %1266
  %1268 = vadd.xlane.f32.xlu0 %v1237
  %v1269 = vpop.xlane.xlu0 %1268
  %1270 = vadd.xlane.f32.xlu0 %v1239
  %v1271 = vpop.xlane.xlu0 %1270
  %1272 = vadd.xlane.f32.xlu0 %v1241
  %v1273 = vpop.xlane.xlu0 %1272
  %1274 = vadd.xlane.f32.xlu0 %v1243
  %v1275 = vpop.xlane.xlu0 %1274
  %1276 = vadd.xlane.f32.xlu0 %v1245
  %v1277 = vpop.xlane.xlu0 %1276
  %1278 = vadd.xlane.f32.xlu0 %v1247
  %v1279 = vpop.xlane.xlu0 %1278
  %1280 = vadd.xlane.f32.xlu0 %v1249
  %v1281 = vpop.xlane.xlu0 %1280
  %1282 = vadd.xlane.f32.xlu0 %v1251
  %v1283 = vpop.xlane.xlu0 %1282
  %1284 = vadd.xlane.f32.xlu0 %v1253
  %v1285 = vpop.xlane.xlu0 %1284
  %v1286 = vrcp.pop %v1255
  %v1287 = vrcp.pop %v1257
  %v1288 = vrcp.pop %v1259
  %v1289 = vrcp.pop %v1261
  %v1290 = vrcp.pop %v1263
  %v1291 = vrcp.pop %v1265
  %v1292 = vrcp.pop %v1267
  %v1293 = vrcp.pop %v1269
  %v1294 = vrcp.pop %v1271
  %v1295 = vrcp.pop %v1273
  %v1296 = vrcp.pop %v1275
  %v1297 = vrcp.pop %v1277
  %v1298 = vrcp.pop %v1279
  %v1299 = vrcp.pop %v1281
  %v1300 = vrcp.pop %v1283
  %v1301 = vrcp.pop %v1285
  %v1302 = vmul.f32 %v1223, %v1286
  %v1303 = vmul.f32 %v1225, %v1287
  %v1304 = vmul.f32 %v1227, %v1288
  %v1305 = vmul.f32 %v1229, %v1289
  %v1306 = vmul.f32 %v1231, %v1290
  %v1307 = vmul.f32 %v1233, %v1291
  %v1308 = vmul.f32 %v1235, %v1292
  %v1309 = vmul.f32 %v1237, %v1293
  %v1310 = vmul.f32 %v1239, %v1294
  %v1311 = vmul.f32 %v1241, %v1295
  %v1312 = vmul.f32 %v1243, %v1296
  %v1313 = vmul.f32 %v1245, %v1297
  %v1314 = vmul.f32 %v1247, %v1298
  %v1315 = vmul.f32 %v1249, %v1299
  %v1316 = vmul.f32 %v1251, %v1300
  %v1317 = vmul.f32 %v1253, %v1301
  %v1318 = vld [vmem:[%s5 + $0x1] sm:$0x1]
  %v1319 = vperm.slane %v1318, 0
  %1321 = vrot.lane.b32.xlu0 %v1319, 64
  %v1322 = vpop.permute.xlu0 %1321
  %v1324 = vmul.f32 %v574, %v1322
  %v1325 = vmul.f32 %v577, %v1322
  %v1326 = vmul.f32 %v580, %v1322
  %v1327 = vmul.f32 %v583, %v1322
  %v1328 = vmul.f32 %v586, %v1322
  %v1329 = vmul.f32 %v589, %v1322
  %v1330 = vmul.f32 %v592, %v1322
  %v1331 = vmul.f32 %v595, %v1322
  %v1332 = vmul.f32 %v598, %v1322
  %v1333 = vmul.f32 %v601, %v1322
  %v1334 = vmul.f32 %v604, %v1322
  %v1335 = vmul.f32 %v607, %v1322
  %v1336 = vmul.f32 %v610, %v1322
  %v1337 = vmul.f32 %v613, %v1322
  %v1338 = vmul.f32 %v616, %v1322
  %v1339 = vmul.f32 %v619, %v1322
  %1340 = vrot.lane.b32.xlu0 %v574, 112
  %v1341 = vpop.permute.xlu0 %1340
  %1342 = vrot.lane.b32.xlu0 %v577, 112
  %v1343 = vpop.permute.xlu0 %1342
  %1344 = vrot.lane.b32.xlu0 %v580, 112
  %v1345 = vpop.permute.xlu0 %1344
  %1346 = vrot.lane.b32.xlu0 %v583, 112
  %v1347 = vpop.permute.xlu0 %1346
  %1348 = vrot.lane.b32.xlu0 %v586, 112
  %v1349 = vpop.permute.xlu0 %1348
  %1350 = vrot.lane.b32.xlu0 %v589, 112
  %v1351 = vpop.permute.xlu0 %1350
  %1352 = vrot.lane.b32.xlu0 %v592, 112
  %v1353 = vpop.permute.xlu0 %1352
  %1354 = vrot.lane.b32.xlu0 %v595, 112
  %v1355 = vpop.permute.xlu0 %1354
  %1356 = vrot.lane.b32.xlu0 %v598, 112
  %v1357 = vpop.permute.xlu0 %1356
  %1358 = vrot.lane.b32.xlu0 %v601, 112
  %v1359 = vpop.permute.xlu0 %1358
  %1360 = vrot.lane.b32.xlu0 %v604, 112
  %v1361 = vpop.permute.xlu0 %1360
  %1362 = vrot.lane.b32.xlu0 %v607, 112
  %v1363 = vpop.permute.xlu0 %1362
  %1364 = vrot.lane.b32.xlu0 %v610, 112
  %v1365 = vpop.permute.xlu0 %1364
  %1366 = vrot.lane.b32.xlu0 %v613, 112
  %v1367 = vpop.permute.xlu0 %1366
  %1368 = vrot.lane.b32.xlu0 %v616, 112
  %v1369 = vpop.permute.xlu0 %1368
  %1370 = vrot.lane.b32.xlu0 %v619, 112
  %v1371 = vpop.permute.xlu0 %1370
  %1372 = vrot.lane.b32.xlu0 %v574, 80
  %v1373 = vpop.permute.xlu0 %1372
  %1374 = vrot.lane.b32.xlu0 %v577, 80
  %v1375 = vpop.permute.xlu0 %1374
  %1376 = vrot.lane.b32.xlu0 %v580, 80
  %v1377 = vpop.permute.xlu0 %1376
  %1378 = vrot.lane.b32.xlu0 %v583, 80
  %v1379 = vpop.permute.xlu0 %1378
  %1380 = vrot.lane.b32.xlu0 %v586, 80
  %v1381 = vpop.permute.xlu0 %1380
  %1382 = vrot.lane.b32.xlu0 %v589, 80
  %v1383 = vpop.permute.xlu0 %1382
  %1384 = vrot.lane.b32.xlu0 %v592, 80
  %v1385 = vpop.permute.xlu0 %1384
  %1386 = vrot.lane.b32.xlu0 %v595, 80
  %v1387 = vpop.permute.xlu0 %1386
  %1388 = vrot.lane.b32.xlu0 %v598, 80
  %v1389 = vpop.permute.xlu0 %1388
  %1390 = vrot.lane.b32.xlu0 %v601, 80
  %v1391 = vpop.permute.xlu0 %1390
  %1392 = vrot.lane.b32.xlu0 %v604, 80
  %v1393 = vpop.permute.xlu0 %1392
  %1394 = vrot.lane.b32.xlu0 %v607, 80
  %v1395 = vpop.permute.xlu0 %1394
  %1396 = vrot.lane.b32.xlu0 %v610, 80
  %v1397 = vpop.permute.xlu0 %1396
  %1398 = vrot.lane.b32.xlu0 %v613, 80
  %v1399 = vpop.permute.xlu0 %1398
  %1400 = vrot.lane.b32.xlu0 %v616, 80
  %v1401 = vpop.permute.xlu0 %1400
  %1402 = vrot.lane.b32.xlu0 %v619, 80
  %v1403 = vpop.permute.xlu0 %1402
  %v1404 = vsel %vm685, %v1341, 0
  %v1406 = vsel %vm685, %v1343, 0
  %v1408 = vsel %vm685, %v1345, 0
  %v1410 = vsel %vm685, %v1347, 0
  %v1412 = vsel %vm685, %v1349, 0
  %v1414 = vsel %vm685, %v1351, 0
  %v1416 = vsel %vm685, %v1353, 0
  %v1418 = vsel %vm685, %v1355, 0
  %v1420 = vsel %vm685, %v1357, 0
  %v1422 = vsel %vm685, %v1359, 0
  %v1424 = vsel %vm685, %v1361, 0
  %v1426 = vsel %vm685, %v1363, 0
  %v1428 = vsel %vm685, %v1365, 0
  %v1430 = vsel %vm685, %v1367, 0
  %v1432 = vsel %vm685, %v1369, 0
  %v1434 = vsel %vm685, %v1371, 0
  %v1436 = vsel %vm685, %v1373, 0
  %v1438 = vsel %vm685, %v1375, 0
  %v1440 = vsel %vm685, %v1377, 0
  %v1442 = vsel %vm685, %v1379, 0
  %v1444 = vsel %vm685, %v1381, 0
  %v1446 = vsel %vm685, %v1383, 0
  %v1448 = vsel %vm685, %v1385, 0
  %v1450 = vsel %vm685, %v1387, 0
  %v1452 = vsel %vm685, %v1389, 0
  %v1454 = vsel %vm685, %v1391, 0
  %v1456 = vsel %vm685, %v1393, 0
  %v1458 = vsel %vm685, %v1395, 0
  %v1460 = vsel %vm685, %v1397, 0
  %v1462 = vsel %vm685, %v1399, 0
  %v1464 = vsel %vm685, %v1401, 0
  %v1466 = vsel %vm685, %v1403, 0
  %1468 = vmatpush.xpose.msra.mxu0 %v1466
  %1469 = vmatpush.xpose.msra.mxu0 %v1464
  %1470 = vmatpush.xpose.msra.mxu0 %v1462
  %1471 = vmatpush.xpose.msra.mxu0 %v1460
  %1472 = vmatpush.xpose.msra.mxu0 %v1458
  %1473 = vmatpush.xpose.msra.mxu0 %v1456
  %1474 = vmatpush.xpose.msra.mxu0 %v1454
  %1475 = vmatpush.xpose.msra.mxu0 %v1452
  %1476 = vmatpush.xpose.msra.mxu0 %v1450
  %1477 = vmatpush.xpose.msra.mxu0 %v1448
  %1478 = vmatpush.xpose.msra.mxu0 %v1446
  %1479 = vmatpush.xpose.msra.mxu0 %v1444
  %1480 = vmatpush.xpose.msra.mxu0 %v1442
  %1481 = vmatpush.xpose.msra.mxu0 %v1440
  %1482 = vmatpush.xpose.msra.mxu0 %v1438
  %1483 = vmatpush.xpose.msra.mxu0 %v1436
  %1484 = vmatmul.f32.gmra.mxu0 %v1404
  %v1485 = vpop.f32.mrf.mxu0
  %v1486 = vadd.f32 %v621, %v1485
  %1487 = vmatmul.f32.gmra.mxu0 %v1406
  %v1488 = vpop.f32.mrf.mxu0
  %v1489 = vadd.f32 %v622, %v1488
  %1490 = vmatmul.f32.gmra.mxu0 %v1408
  %v1491 = vpop.f32.mrf.mxu0
  %v1492 = vadd.f32 %v623, %v1491
  %1493 = vmatmul.f32.gmra.mxu0 %v1410
  %v1494 = vpop.f32.mrf.mxu0
  %v1495 = vadd.f32 %v624, %v1494
  %1496 = vmatmul.f32.gmra.mxu0 %v1412
  %v1497 = vpop.f32.mrf.mxu0
  %v1498 = vadd.f32 %v625, %v1497
  %1499 = vmatmul.f32.gmra.mxu0 %v1414
  %v1500 = vpop.f32.mrf.mxu0
  %v1501 = vadd.f32 %v626, %v1500
  %1502 = vmatmul.f32.gmra.mxu0 %v1416
  %v1503 = vpop.f32.mrf.mxu0
  %v1504 = vadd.f32 %v627, %v1503
  %1505 = vmatmul.f32.gmra.mxu0 %v1418
  %v1506 = vpop.f32.mrf.mxu0
  %v1507 = vadd.f32 %v628, %v1506
  %1508 = vmatmul.f32.gmra.mxu0 %v1420
  %v1509 = vpop.f32.mrf.mxu0
  %v1510 = vadd.f32 %v629, %v1509
  %1511 = vmatmul.f32.gmra.mxu0 %v1422
  %v1512 = vpop.f32.mrf.mxu0
  %v1513 = vadd.f32 %v630, %v1512
  %1514 = vmatmul.f32.gmra.mxu0 %v1424
  %v1515 = vpop.f32.mrf.mxu0
  %v1516 = vadd.f32 %v631, %v1515
  %1517 = vmatmul.f32.gmra.mxu0 %v1426
  %v1518 = vpop.f32.mrf.mxu0
  %v1519 = vadd.f32 %v632, %v1518
  %1520 = vmatmul.f32.gmra.mxu0 %v1428
  %v1521 = vpop.f32.mrf.mxu0
  %v1522 = vadd.f32 %v633, %v1521
  %1523 = vmatmul.f32.gmra.mxu0 %v1430
  %v1524 = vpop.f32.mrf.mxu0
  %v1525 = vadd.f32 %v634, %v1524
  %1526 = vmatmul.f32.gmra.mxu0 %v1432
  %v1527 = vpop.f32.mrf.mxu0
  %v1528 = vadd.f32 %v635, %v1527
  %1529 = vmatmul.f32.gmra.mxu0 %v1434
  %v1530 = vpop.f32.mrf.mxu0
  %v1531 = vadd.f32 %v636, %v1530
  %1532 = vdwg.mxu0
  %1533 = vmax.xlane.f32.xlu0 %v1486
  %v1534 = vpop.xlane.xlu0 %1533
  %1535 = vmax.xlane.f32.xlu0 %v1489
  %v1536 = vpop.xlane.xlu0 %1535
  %1537 = vmax.xlane.f32.xlu0 %v1492
  %v1538 = vpop.xlane.xlu0 %1537
  %1539 = vmax.xlane.f32.xlu0 %v1495
  %v1540 = vpop.xlane.xlu0 %1539
  %1541 = vmax.xlane.f32.xlu0 %v1498
  %v1542 = vpop.xlane.xlu0 %1541
  %1543 = vmax.xlane.f32.xlu0 %v1501
  %v1544 = vpop.xlane.xlu0 %1543
  %1545 = vmax.xlane.f32.xlu0 %v1504
  %v1546 = vpop.xlane.xlu0 %1545
  %1547 = vmax.xlane.f32.xlu0 %v1507
  %v1548 = vpop.xlane.xlu0 %1547
  %1549 = vmax.xlane.f32.xlu0 %v1510
  %v1550 = vpop.xlane.xlu0 %1549
  %1551 = vmax.xlane.f32.xlu0 %v1513
  %v1552 = vpop.xlane.xlu0 %1551
  %1553 = vmax.xlane.f32.xlu0 %v1516
  %v1554 = vpop.xlane.xlu0 %1553
  %1555 = vmax.xlane.f32.xlu0 %v1519
  %v1556 = vpop.xlane.xlu0 %1555
  %1557 = vmax.xlane.f32.xlu0 %v1522
  %v1558 = vpop.xlane.xlu0 %1557
  %1559 = vmax.xlane.f32.xlu0 %v1525
  %v1560 = vpop.xlane.xlu0 %1559
  %1561 = vmax.xlane.f32.xlu0 %v1528
  %v1562 = vpop.xlane.xlu0 %1561
  %1563 = vmax.xlane.f32.xlu0 %v1531
  %v1564 = vpop.xlane.xlu0 %1563
  %v1565 = vsub.f32 %v1486, %v1534
  %v1566 = vsub.f32 %v1489, %v1536
  %v1567 = vsub.f32 %v1492, %v1538
  %v1568 = vsub.f32 %v1495, %v1540
  %v1569 = vsub.f32 %v1498, %v1542
  %v1570 = vsub.f32 %v1501, %v1544
  %v1571 = vsub.f32 %v1504, %v1546
  %v1572 = vsub.f32 %v1507, %v1548
  %v1573 = vsub.f32 %v1510, %v1550
  %v1574 = vsub.f32 %v1513, %v1552
  %v1575 = vsub.f32 %v1516, %v1554
  %v1576 = vsub.f32 %v1519, %v1556
  %v1577 = vsub.f32 %v1522, %v1558
  %v1578 = vsub.f32 %v1525, %v1560
  %v1579 = vsub.f32 %v1528, %v1562
  %v1580 = vsub.f32 %v1531, %v1564
  %v1581 = vmul.f32 %v1565, 1.442695
  %v1582 = vpow.pop %v1581
  %v1583 = vmul.f32 %v1566, 1.442695
  %v1584 = vpow.pop %v1583
  %v1585 = vmul.f32 %v1567, 1.442695
  %v1586 = vpow.pop %v1585
  %v1587 = vmul.f32 %v1568, 1.442695
  %v1588 = vpow.pop %v1587
  %v1589 = vmul.f32 %v1569, 1.442695
  %v1590 = vpow.pop %v1589
  %v1591 = vmul.f32 %v1570, 1.442695
  %v1592 = vpow.pop %v1591
  %v1593 = vmul.f32 %v1571, 1.442695
  %v1594 = vpow.pop %v1593
  %v1595 = vmul.f32 %v1572, 1.442695
  %v1596 = vpow.pop %v1595
  %v1597 = vmul.f32 %v1573, 1.442695
  %v1598 = vpow.pop %v1597
  %v1599 = vmul.f32 %v1574, 1.442695
  %v1600 = vpow.pop %v1599
  %v1601 = vmul.f32 %v1575, 1.442695
  %v1602 = vpow.pop %v1601
  %v1603 = vmul.f32 %v1576, 1.442695
  %v1604 = vpow.pop %v1603
  %v1605 = vmul.f32 %v1577, 1.442695
  %v1606 = vpow.pop %v1605
  %v1607 = vmul.f32 %v1578, 1.442695
  %v1608 = vpow.pop %v1607
  %v1609 = vmul.f32 %v1579, 1.442695
  %v1610 = vpow.pop %v1609
  %v1611 = vmul.f32 %v1580, 1.442695
  %v1612 = vpow.pop %v1611
  %1613 = vadd.xlane.f32.xlu0 %v1582
  %v1614 = vpop.xlane.xlu0 %1613
  %1615 = vadd.xlane.f32.xlu0 %v1584
  %v1616 = vpop.xlane.xlu0 %1615
  %1617 = vadd.xlane.f32.xlu0 %v1586
  %v1618 = vpop.xlane.xlu0 %1617
  %1619 = vadd.xlane.f32.xlu0 %v1588
  %v1620 = vpop.xlane.xlu0 %1619
  %1621 = vadd.xlane.f32.xlu0 %v1590
  %v1622 = vpop.xlane.xlu0 %1621
  %1623 = vadd.xlane.f32.xlu0 %v1592
  %v1624 = vpop.xlane.xlu0 %1623
  %1625 = vadd.xlane.f32.xlu0 %v1594
  %v1626 = vpop.xlane.xlu0 %1625
  %1627 = vadd.xlane.f32.xlu0 %v1596
  %v1628 = vpop.xlane.xlu0 %1627
  %1629 = vadd.xlane.f32.xlu0 %v1598
  %v1630 = vpop.xlane.xlu0 %1629
  %1631 = vadd.xlane.f32.xlu0 %v1600
  %v1632 = vpop.xlane.xlu0 %1631
  %1633 = vadd.xlane.f32.xlu0 %v1602
  %v1634 = vpop.xlane.xlu0 %1633
  %1635 = vadd.xlane.f32.xlu0 %v1604
  %v1636 = vpop.xlane.xlu0 %1635
  %1637 = vadd.xlane.f32.xlu0 %v1606
  %v1638 = vpop.xlane.xlu0 %1637
  %1639 = vadd.xlane.f32.xlu0 %v1608
  %v1640 = vpop.xlane.xlu0 %1639
  %1641 = vadd.xlane.f32.xlu0 %v1610
  %v1642 = vpop.xlane.xlu0 %1641
  %1643 = vadd.xlane.f32.xlu0 %v1612
  %v1644 = vpop.xlane.xlu0 %1643
  %v1645 = vrcp.pop %v1614
  %v1646 = vrcp.pop %v1616
  %v1647 = vrcp.pop %v1618
  %v1648 = vrcp.pop %v1620
  %v1649 = vrcp.pop %v1622
  %v1650 = vrcp.pop %v1624
  %v1651 = vrcp.pop %v1626
  %v1652 = vrcp.pop %v1628
  %v1653 = vrcp.pop %v1630
  %v1654 = vrcp.pop %v1632
  %v1655 = vrcp.pop %v1634
  %v1656 = vrcp.pop %v1636
  %v1657 = vrcp.pop %v1638
  %v1658 = vrcp.pop %v1640
  %v1659 = vrcp.pop %v1642
  %v1660 = vrcp.pop %v1644
  %v1661 = vmul.f32 %v1582, %v1645
  %v1662 = vmul.f32 %v1584, %v1646
  %v1663 = vmul.f32 %v1586, %v1647
  %v1664 = vmul.f32 %v1588, %v1648
  %v1665 = vmul.f32 %v1590, %v1649
  %v1666 = vmul.f32 %v1592, %v1650
  %v1667 = vmul.f32 %v1594, %v1651
  %v1668 = vmul.f32 %v1596, %v1652
  %v1669 = vmul.f32 %v1598, %v1653
  %v1670 = vmul.f32 %v1600, %v1654
  %v1671 = vmul.f32 %v1602, %v1655
  %v1672 = vmul.f32 %v1604, %v1656
  %v1673 = vmul.f32 %v1606, %v1657
  %v1674 = vmul.f32 %v1608, %v1658
  %v1675 = vmul.f32 %v1610, %v1659
  %v1676 = vmul.f32 %v1612, %v1660
  %v1677 = vld [vmem:[%s5 + $0x2] sm:$0x1]
  %v1678 = vperm.slane %v1677, 0
  %1680 = vrot.lane.b32.xlu0 %v1678, 64
  %v1681 = vpop.permute.xlu0 %1680
  %v1683 = vmul.f32 %v574, %v1681
  %v1684 = vmul.f32 %v577, %v1681
  %v1685 = vmul.f32 %v580, %v1681
  %v1686 = vmul.f32 %v583, %v1681
  %v1687 = vmul.f32 %v586, %v1681
  %v1688 = vmul.f32 %v589, %v1681
  %v1689 = vmul.f32 %v592, %v1681
  %v1690 = vmul.f32 %v595, %v1681
  %v1691 = vmul.f32 %v598, %v1681
  %v1692 = vmul.f32 %v601, %v1681
  %v1693 = vmul.f32 %v604, %v1681
  %v1694 = vmul.f32 %v607, %v1681
  %v1695 = vmul.f32 %v610, %v1681
  %v1696 = vmul.f32 %v613, %v1681
  %v1697 = vmul.f32 %v616, %v1681
  %v1698 = vmul.f32 %v619, %v1681
  %1699 = vrot.lane.b32.xlu0 %v574, 104
  %v1700 = vpop.permute.xlu0 %1699
  %1701 = vrot.lane.b32.xlu0 %v577, 104
  %v1702 = vpop.permute.xlu0 %1701
  %1703 = vrot.lane.b32.xlu0 %v580, 104
  %v1704 = vpop.permute.xlu0 %1703
  %1705 = vrot.lane.b32.xlu0 %v583, 104
  %v1706 = vpop.permute.xlu0 %1705
  %1707 = vrot.lane.b32.xlu0 %v586, 104
  %v1708 = vpop.permute.xlu0 %1707
  %1709 = vrot.lane.b32.xlu0 %v589, 104
  %v1710 = vpop.permute.xlu0 %1709
  %1711 = vrot.lane.b32.xlu0 %v592, 104
  %v1712 = vpop.permute.xlu0 %1711
  %1713 = vrot.lane.b32.xlu0 %v595, 104
  %v1714 = vpop.permute.xlu0 %1713
  %1715 = vrot.lane.b32.xlu0 %v598, 104
  %v1716 = vpop.permute.xlu0 %1715
  %1717 = vrot.lane.b32.xlu0 %v601, 104
  %v1718 = vpop.permute.xlu0 %1717
  %1719 = vrot.lane.b32.xlu0 %v604, 104
  %v1720 = vpop.permute.xlu0 %1719
  %1721 = vrot.lane.b32.xlu0 %v607, 104
  %v1722 = vpop.permute.xlu0 %1721
  %1723 = vrot.lane.b32.xlu0 %v610, 104
  %v1724 = vpop.permute.xlu0 %1723
  %1725 = vrot.lane.b32.xlu0 %v613, 104
  %v1726 = vpop.permute.xlu0 %1725
  %1727 = vrot.lane.b32.xlu0 %v616, 104
  %v1728 = vpop.permute.xlu0 %1727
  %1729 = vrot.lane.b32.xlu0 %v619, 104
  %v1730 = vpop.permute.xlu0 %1729
  %1731 = vrot.lane.b32.xlu0 %v574, 72
  %v1732 = vpop.permute.xlu0 %1731
  %1733 = vrot.lane.b32.xlu0 %v577, 72
  %v1734 = vpop.permute.xlu0 %1733
  %1735 = vrot.lane.b32.xlu0 %v580, 72
  %v1736 = vpop.permute.xlu0 %1735
  %1737 = vrot.lane.b32.xlu0 %v583, 72
  %v1738 = vpop.permute.xlu0 %1737
  %1739 = vrot.lane.b32.xlu0 %v586, 72
  %v1740 = vpop.permute.xlu0 %1739
  %1741 = vrot.lane.b32.xlu0 %v589, 72
  %v1742 = vpop.permute.xlu0 %1741
  %1743 = vrot.lane.b32.xlu0 %v592, 72
  %v1744 = vpop.permute.xlu0 %1743
  %1745 = vrot.lane.b32.xlu0 %v595, 72
  %v1746 = vpop.permute.xlu0 %1745
  %1747 = vrot.lane.b32.xlu0 %v598, 72
  %v1748 = vpop.permute.xlu0 %1747
  %1749 = vrot.lane.b32.xlu0 %v601, 72
  %v1750 = vpop.permute.xlu0 %1749
  %1751 = vrot.lane.b32.xlu0 %v604, 72
  %v1752 = vpop.permute.xlu0 %1751
  %1753 = vrot.lane.b32.xlu0 %v607, 72
  %v1754 = vpop.permute.xlu0 %1753
  %1755 = vrot.lane.b32.xlu0 %v610, 72
  %v1756 = vpop.permute.xlu0 %1755
  %1757 = vrot.lane.b32.xlu0 %v613, 72
  %v1758 = vpop.permute.xlu0 %1757
  %1759 = vrot.lane.b32.xlu0 %v616, 72
  %v1760 = vpop.permute.xlu0 %1759
  %1761 = vrot.lane.b32.xlu0 %v619, 72
  %v1762 = vpop.permute.xlu0 %1761
  %v1763 = vsel %vm685, %v1700, 0
  %v1765 = vsel %vm685, %v1702, 0
  %v1767 = vsel %vm685, %v1704, 0
  %v1769 = vsel %vm685, %v1706, 0
  %v1771 = vsel %vm685, %v1708, 0
  %v1773 = vsel %vm685, %v1710, 0
  %v1775 = vsel %vm685, %v1712, 0
  %v1777 = vsel %vm685, %v1714, 0
  %v1779 = vsel %vm685, %v1716, 0
  %v1781 = vsel %vm685, %v1718, 0
  %v1783 = vsel %vm685, %v1720, 0
  %v1785 = vsel %vm685, %v1722, 0
  %v1787 = vsel %vm685, %v1724, 0
  %v1789 = vsel %vm685, %v1726, 0
  %v1791 = vsel %vm685, %v1728, 0
  %v1793 = vsel %vm685, %v1730, 0
  %v1795 = vsel %vm685, %v1732, 0
  %v1797 = vsel %vm685, %v1734, 0
  %v1799 = vsel %vm685, %v1736, 0
  %v1801 = vsel %vm685, %v1738, 0
  %v1803 = vsel %vm685, %v1740, 0
  %v1805 = vsel %vm685, %v1742, 0
  %v1807 = vsel %vm685, %v1744, 0
  %v1809 = vsel %vm685, %v1746, 0
  %v1811 = vsel %vm685, %v1748, 0
  %v1813 = vsel %vm685, %v1750, 0
  %v1815 = vsel %vm685, %v1752, 0
  %v1817 = vsel %vm685, %v1754, 0
  %v1819 = vsel %vm685, %v1756, 0
  %v1821 = vsel %vm685, %v1758, 0
  %v1823 = vsel %vm685, %v1760, 0
  %v1825 = vsel %vm685, %v1762, 0
  %1827 = vmatpush.xpose.msra.mxu0 %v1825
  %1828 = vmatpush.xpose.msra.mxu0 %v1823
  %1829 = vmatpush.xpose.msra.mxu0 %v1821
  %1830 = vmatpush.xpose.msra.mxu0 %v1819
  %1831 = vmatpush.xpose.msra.mxu0 %v1817
  %1832 = vmatpush.xpose.msra.mxu0 %v1815
  %1833 = vmatpush.xpose.msra.mxu0 %v1813
  %1834 = vmatpush.xpose.msra.mxu0 %v1811
  %1835 = vmatpush.xpose.msra.mxu0 %v1809
  %1836 = vmatpush.xpose.msra.mxu0 %v1807
  %1837 = vmatpush.xpose.msra.mxu0 %v1805
  %1838 = vmatpush.xpose.msra.mxu0 %v1803
  %1839 = vmatpush.xpose.msra.mxu0 %v1801
  %1840 = vmatpush.xpose.msra.mxu0 %v1799
  %1841 = vmatpush.xpose.msra.mxu0 %v1797
  %1842 = vmatpush.xpose.msra.mxu0 %v1795
  %1843 = vmatmul.f32.gmra.mxu0 %v1763
  %v1844 = vpop.f32.mrf.mxu0
  %v1845 = vadd.f32 %v621, %v1844
  %1846 = vmatmul.f32.gmra.mxu0 %v1765
  %v1847 = vpop.f32.mrf.mxu0
  %v1848 = vadd.f32 %v622, %v1847
  %1849 = vmatmul.f32.gmra.mxu0 %v1767
  %v1850 = vpop.f32.mrf.mxu0
  %v1851 = vadd.f32 %v623, %v1850
  %1852 = vmatmul.f32.gmra.mxu0 %v1769
  %v1853 = vpop.f32.mrf.mxu0
  %v1854 = vadd.f32 %v624, %v1853
  %1855 = vmatmul.f32.gmra.mxu0 %v1771
  %v1856 = vpop.f32.mrf.mxu0
  %v1857 = vadd.f32 %v625, %v1856
  %1858 = vmatmul.f32.gmra.mxu0 %v1773
  %v1859 = vpop.f32.mrf.mxu0
  %v1860 = vadd.f32 %v626, %v1859
  %1861 = vmatmul.f32.gmra.mxu0 %v1775
  %v1862 = vpop.f32.mrf.mxu0
  %v1863 = vadd.f32 %v627, %v1862
  %1864 = vmatmul.f32.gmra.mxu0 %v1777
  %v1865 = vpop.f32.mrf.mxu0
  %v1866 = vadd.f32 %v628, %v1865
  %1867 = vmatmul.f32.gmra.mxu0 %v1779
  %v1868 = vpop.f32.mrf.mxu0
  %v1869 = vadd.f32 %v629, %v1868
  %1870 = vmatmul.f32.gmra.mxu0 %v1781
  %v1871 = vpop.f32.mrf.mxu0
  %v1872 = vadd.f32 %v630, %v1871
  %1873 = vmatmul.f32.gmra.mxu0 %v1783
  %v1874 = vpop.f32.mrf.mxu0
  %v1875 = vadd.f32 %v631, %v1874
  %1876 = vmatmul.f32.gmra.mxu0 %v1785
  %v1877 = vpop.f32.mrf.mxu0
  %v1878 = vadd.f32 %v632, %v1877
  %1879 = vmatmul.f32.gmra.mxu0 %v1787
  %v1880 = vpop.f32.mrf.mxu0
  %v1881 = vadd.f32 %v633, %v1880
  %1882 = vmatmul.f32.gmra.mxu0 %v1789
  %v1883 = vpop.f32.mrf.mxu0
  %v1884 = vadd.f32 %v634, %v1883
  %1885 = vmatmul.f32.gmra.mxu0 %v1791
  %v1886 = vpop.f32.mrf.mxu0
  %v1887 = vadd.f32 %v635, %v1886
  %1888 = vmatmul.f32.gmra.mxu0 %v1793
  %v1889 = vpop.f32.mrf.mxu0
  %v1890 = vadd.f32 %v636, %v1889
  %1891 = vdwg.mxu0
  %1892 = vmax.xlane.f32.xlu0 %v1845
  %v1893 = vpop.xlane.xlu0 %1892
  %1894 = vmax.xlane.f32.xlu0 %v1848
  %v1895 = vpop.xlane.xlu0 %1894
  %1896 = vmax.xlane.f32.xlu0 %v1851
  %v1897 = vpop.xlane.xlu0 %1896
  %1898 = vmax.xlane.f32.xlu0 %v1854
  %v1899 = vpop.xlane.xlu0 %1898
  %1900 = vmax.xlane.f32.xlu0 %v1857
  %v1901 = vpop.xlane.xlu0 %1900
  %1902 = vmax.xlane.f32.xlu0 %v1860
  %v1903 = vpop.xlane.xlu0 %1902
  %1904 = vmax.xlane.f32.xlu0 %v1863
  %v1905 = vpop.xlane.xlu0 %1904
  %1906 = vmax.xlane.f32.xlu0 %v1866
  %v1907 = vpop.xlane.xlu0 %1906
  %1908 = vmax.xlane.f32.xlu0 %v1869
  %v1909 = vpop.xlane.xlu0 %1908
  %1910 = vmax.xlane.f32.xlu0 %v1872
  %v1911 = vpop.xlane.xlu0 %1910
  %1912 = vmax.xlane.f32.xlu0 %v1875
  %v1913 = vpop.xlane.xlu0 %1912
  %1914 = vmax.xlane.f32.xlu0 %v1878
  %v1915 = vpop.xlane.xlu0 %1914
  %1916 = vmax.xlane.f32.xlu0 %v1881
  %v1917 = vpop.xlane.xlu0 %1916
  %1918 = vmax.xlane.f32.xlu0 %v1884
  %v1919 = vpop.xlane.xlu0 %1918
  %1920 = vmax.xlane.f32.xlu0 %v1887
  %v1921 = vpop.xlane.xlu0 %1920
  %1922 = vmax.xlane.f32.xlu0 %v1890
  %v1923 = vpop.xlane.xlu0 %1922
  %v1924 = vsub.f32 %v1845, %v1893
  %v1925 = vsub.f32 %v1848, %v1895
  %v1926 = vsub.f32 %v1851, %v1897
  %v1927 = vsub.f32 %v1854, %v1899
  %v1928 = vsub.f32 %v1857, %v1901
  %v1929 = vsub.f32 %v1860, %v1903
  %v1930 = vsub.f32 %v1863, %v1905
  %v1931 = vsub.f32 %v1866, %v1907
  %v1932 = vsub.f32 %v1869, %v1909
  %v1933 = vsub.f32 %v1872, %v1911
  %v1934 = vsub.f32 %v1875, %v1913
  %v1935 = vsub.f32 %v1878, %v1915
  %v1936 = vsub.f32 %v1881, %v1917
  %v1937 = vsub.f32 %v1884, %v1919
  %v1938 = vsub.f32 %v1887, %v1921
  %v1939 = vsub.f32 %v1890, %v1923
  %v1940 = vmul.f32 %v1924, 1.442695
  %v1941 = vpow.pop %v1940
  %v1942 = vmul.f32 %v1925, 1.442695
  %v1943 = vpow.pop %v1942
  %v1944 = vmul.f32 %v1926, 1.442695
  %v1945 = vpow.pop %v1944
  %v1946 = vmul.f32 %v1927, 1.442695
  %v1947 = vpow.pop %v1946
  %v1948 = vmul.f32 %v1928, 1.442695
  %v1949 = vpow.pop %v1948
  %v1950 = vmul.f32 %v1929, 1.442695
  %v1951 = vpow.pop %v1950
  %v1952 = vmul.f32 %v1930, 1.442695
  %v1953 = vpow.pop %v1952
  %v1954 = vmul.f32 %v1931, 1.442695
  %v1955 = vpow.pop %v1954
  %v1956 = vmul.f32 %v1932, 1.442695
  %v1957 = vpow.pop %v1956
  %v1958 = vmul.f32 %v1933, 1.442695
  %v1959 = vpow.pop %v1958
  %v1960 = vmul.f32 %v1934, 1.442695
  %v1961 = vpow.pop %v1960
  %v1962 = vmul.f32 %v1935, 1.442695
  %v1963 = vpow.pop %v1962
  %v1964 = vmul.f32 %v1936, 1.442695
  %v1965 = vpow.pop %v1964
  %v1966 = vmul.f32 %v1937, 1.442695
  %v1967 = vpow.pop %v1966
  %v1968 = vmul.f32 %v1938, 1.442695
  %v1969 = vpow.pop %v1968
  %v1970 = vmul.f32 %v1939, 1.442695
  %v1971 = vpow.pop %v1970
  %1972 = vadd.xlane.f32.xlu0 %v1941
  %v1973 = vpop.xlane.xlu0 %1972
  %1974 = vadd.xlane.f32.xlu0 %v1943
  %v1975 = vpop.xlane.xlu0 %1974
  %1976 = vadd.xlane.f32.xlu0 %v1945
  %v1977 = vpop.xlane.xlu0 %1976
  %1978 = vadd.xlane.f32.xlu0 %v1947
  %v1979 = vpop.xlane.xlu0 %1978
  %1980 = vadd.xlane.f32.xlu0 %v1949
  %v1981 = vpop.xlane.xlu0 %1980
  %1982 = vadd.xlane.f32.xlu0 %v1951
  %v1983 = vpop.xlane.xlu0 %1982
  %1984 = vadd.xlane.f32.xlu0 %v1953
  %v1985 = vpop.xlane.xlu0 %1984
  %1986 = vadd.xlane.f32.xlu0 %v1955
  %v1987 = vpop.xlane.xlu0 %1986
  %1988 = vadd.xlane.f32.xlu0 %v1957
  %v1989 = vpop.xlane.xlu0 %1988
  %1990 = vadd.xlane.f32.xlu0 %v1959
  %v1991 = vpop.xlane.xlu0 %1990
  %1992 = vadd.xlane.f32.xlu0 %v1961
  %v1993 = vpop.xlane.xlu0 %1992
  %1994 = vadd.xlane.f32.xlu0 %v1963
  %v1995 = vpop.xlane.xlu0 %1994
  %1996 = vadd.xlane.f32.xlu0 %v1965
  %v1997 = vpop.xlane.xlu0 %1996
  %1998 = vadd.xlane.f32.xlu0 %v1967
  %v1999 = vpop.xlane.xlu0 %1998
  %2000 = vadd.xlane.f32.xlu0 %v1969
  %v2001 = vpop.xlane.xlu0 %2000
  %2002 = vadd.xlane.f32.xlu0 %v1971
  %v2003 = vpop.xlane.xlu0 %2002
  %v2004 = vrcp.pop %v1973
  %v2005 = vrcp.pop %v1975
  %v2006 = vrcp.pop %v1977
  %v2007 = vrcp.pop %v1979
  %v2008 = vrcp.pop %v1981
  %v2009 = vrcp.pop %v1983
  %v2010 = vrcp.pop %v1985
  %v2011 = vrcp.pop %v1987
  %v2012 = vrcp.pop %v1989
  %v2013 = vrcp.pop %v1991
  %v2014 = vrcp.pop %v1993
  %v2015 = vrcp.pop %v1995
  %v2016 = vrcp.pop %v1997
  %v2017 = vrcp.pop %v1999
  %v2018 = vrcp.pop %v2001
  %v2019 = vrcp.pop %v2003
  %v2020 = vmul.f32 %v1941, %v2004
  %v2021 = vmul.f32 %v1943, %v2005
  %v2022 = vmul.f32 %v1945, %v2006
  %v2023 = vmul.f32 %v1947, %v2007
  %v2024 = vmul.f32 %v1949, %v2008
  %v2025 = vmul.f32 %v1951, %v2009
  %v2026 = vmul.f32 %v1953, %v2010
  %v2027 = vmul.f32 %v1955, %v2011
  %v2028 = vmul.f32 %v1957, %v2012
  %v2029 = vmul.f32 %v1959, %v2013
  %v2030 = vmul.f32 %v1961, %v2014
  %v2031 = vmul.f32 %v1963, %v2015
  %v2032 = vmul.f32 %v1965, %v2016
  %v2033 = vmul.f32 %v1967, %v2017
  %v2034 = vmul.f32 %v1969, %v2018
  %v2035 = vmul.f32 %v1971, %v2019
  %v2036 = vld [vmem:[%s5 + $0x3] sm:$0x1]
  %v2037 = vperm.slane %v2036, 0
  %2039 = vrot.lane.b32.xlu0 %v2037, 64
  %v2040 = vpop.permute.xlu0 %2039
  %v2042 = vmul.f32 %v574, %v2040
  %v2043 = vmul.f32 %v577, %v2040
  %v2044 = vmul.f32 %v580, %v2040
  %v2045 = vmul.f32 %v583, %v2040
  %v2046 = vmul.f32 %v586, %v2040
  %v2047 = vmul.f32 %v589, %v2040
  %v2048 = vmul.f32 %v592, %v2040
  %v2049 = vmul.f32 %v595, %v2040
  %v2050 = vmul.f32 %v598, %v2040
  %v2051 = vmul.f32 %v601, %v2040
  %v2052 = vmul.f32 %v604, %v2040
  %v2053 = vmul.f32 %v607, %v2040
  %v2054 = vmul.f32 %v610, %v2040
  %v2055 = vmul.f32 %v613, %v2040
  %v2056 = vmul.f32 %v616, %v2040
  %v2057 = vmul.f32 %v619, %v2040
  %2122 = vrot.lane.b32.xlu0 %v965, 64
  %v2123 = vpop.permute.xlu0 %2122
  %2124 = vrot.lane.b32.xlu0 %v966, 64
  %v2125 = vpop.permute.xlu0 %2124
  %2126 = vrot.lane.b32.xlu0 %v967, 64
  %v2127 = vpop.permute.xlu0 %2126
  %2128 = vrot.lane.b32.xlu0 %v968, 64
  %v2129 = vpop.permute.xlu0 %2128
  %2130 = vrot.lane.b32.xlu0 %v969, 64
  %v2131 = vpop.permute.xlu0 %2130
  %2132 = vrot.lane.b32.xlu0 %v970, 64
  %v2133 = vpop.permute.xlu0 %2132
  %2134 = vrot.lane.b32.xlu0 %v971, 64
  %v2135 = vpop.permute.xlu0 %2134
  %2136 = vrot.lane.b32.xlu0 %v972, 64
  %v2137 = vpop.permute.xlu0 %2136
  %2138 = vrot.lane.b32.xlu0 %v973, 64
  %v2139 = vpop.permute.xlu0 %2138
  %2140 = vrot.lane.b32.xlu0 %v974, 64
  %v2141 = vpop.permute.xlu0 %2140
  %2142 = vrot.lane.b32.xlu0 %v975, 64
  %v2143 = vpop.permute.xlu0 %2142
  %2144 = vrot.lane.b32.xlu0 %v976, 64
  %v2145 = vpop.permute.xlu0 %2144
  %2146 = vrot.lane.b32.xlu0 %v977, 64
  %v2147 = vpop.permute.xlu0 %2146
  %2148 = vrot.lane.b32.xlu0 %v978, 64
  %v2149 = vpop.permute.xlu0 %2148
  %2150 = vrot.lane.b32.xlu0 %v979, 64
  %v2151 = vpop.permute.xlu0 %2150
  %2152 = vrot.lane.b32.xlu0 %v980, 64
  %v2153 = vpop.permute.xlu0 %2152
  %2154 = vrot.lane.b32.xlu0 %v1324, 64
  %v2155 = vpop.permute.xlu0 %2154
  %2156 = vrot.lane.b32.xlu0 %v1325, 64
  %v2157 = vpop.permute.xlu0 %2156
  %2158 = vrot.lane.b32.xlu0 %v1326, 64
  %v2159 = vpop.permute.xlu0 %2158
  %2160 = vrot.lane.b32.xlu0 %v1327, 64
  %v2161 = vpop.permute.xlu0 %2160
  %2162 = vrot.lane.b32.xlu0 %v1328, 64
  %v2163 = vpop.permute.xlu0 %2162
  %2164 = vrot.lane.b32.xlu0 %v1329, 64
  %v2165 = vpop.permute.xlu0 %2164
  %2166 = vrot.lane.b32.xlu0 %v1330, 64
  %v2167 = vpop.permute.xlu0 %2166
  %2168 = vrot.lane.b32.xlu0 %v1331, 64
  %v2169 = vpop.permute.xlu0 %2168
  %2170 = vrot.lane.b32.xlu0 %v1332, 64
  %v2171 = vpop.permute.xlu0 %2170
  %2172 = vrot.lane.b32.xlu0 %v1333, 64
  %v2173 = vpop.permute.xlu0 %2172
  %2174 = vrot.lane.b32.xlu0 %v1334, 64
  %v2175 = vpop.permute.xlu0 %2174
  %2176 = vrot.lane.b32.xlu0 %v1335, 64
  %v2177 = vpop.permute.xlu0 %2176
  %2178 = vrot.lane.b32.xlu0 %v1336, 64
  %v2179 = vpop.permute.xlu0 %2178
  %2180 = vrot.lane.b32.xlu0 %v1337, 64
  %v2181 = vpop.permute.xlu0 %2180
  %2182 = vrot.lane.b32.xlu0 %v1338, 64
  %v2183 = vpop.permute.xlu0 %2182
  %2184 = vrot.lane.b32.xlu0 %v1339, 64
  %v2185 = vpop.permute.xlu0 %2184
  %2186 = vrot.lane.b32.xlu0 %v1683, 64
  %v2187 = vpop.permute.xlu0 %2186
  %2188 = vrot.lane.b32.xlu0 %v1684, 64
  %v2189 = vpop.permute.xlu0 %2188
  %2190 = vrot.lane.b32.xlu0 %v1685, 64
  %v2191 = vpop.permute.xlu0 %2190
  %2192 = vrot.lane.b32.xlu0 %v1686, 64
  %v2193 = vpop.permute.xlu0 %2192
  %2194 = vrot.lane.b32.xlu0 %v1687, 64
  %v2195 = vpop.permute.xlu0 %2194
  %2196 = vrot.lane.b32.xlu0 %v1688, 64
  %v2197 = vpop.permute.xlu0 %2196
  %2198 = vrot.lane.b32.xlu0 %v1689, 64
  %v2199 = vpop.permute.xlu0 %2198
  %2200 = vrot.lane.b32.xlu0 %v1690, 64
  %v2201 = vpop.permute.xlu0 %2200
  %2202 = vrot.lane.b32.xlu0 %v1691, 64
  %v2203 = vpop.permute.xlu0 %2202
  %2204 = vrot.lane.b32.xlu0 %v1692, 64
  %v2205 = vpop.permute.xlu0 %2204
  %2206 = vrot.lane.b32.xlu0 %v1693, 64
  %v2207 = vpop.permute.xlu0 %2206
  %2208 = vrot.lane.b32.xlu0 %v1694, 64
  %v2209 = vpop.permute.xlu0 %2208
  %2210 = vrot.lane.b32.xlu0 %v1695, 64
  %v2211 = vpop.permute.xlu0 %2210
  %2212 = vrot.lane.b32.xlu0 %v1696, 64
  %v2213 = vpop.permute.xlu0 %2212
  %2214 = vrot.lane.b32.xlu0 %v1697, 64
  %v2215 = vpop.permute.xlu0 %2214
  %2216 = vrot.lane.b32.xlu0 %v1698, 64
  %v2217 = vpop.permute.xlu0 %2216
  %2218 = vrot.lane.b32.xlu0 %v2042, 64
  %v2219 = vpop.permute.xlu0 %2218
  %2220 = vrot.lane.b32.xlu0 %v2043, 64
  %v2221 = vpop.permute.xlu0 %2220
  %2222 = vrot.lane.b32.xlu0 %v2044, 64
  %v2223 = vpop.permute.xlu0 %2222
  %2224 = vrot.lane.b32.xlu0 %v2045, 64
  %v2225 = vpop.permute.xlu0 %2224
  %2226 = vrot.lane.b32.xlu0 %v2046, 64
  %v2227 = vpop.permute.xlu0 %2226
  %2228 = vrot.lane.b32.xlu0 %v2047, 64
  %v2229 = vpop.permute.xlu0 %2228
  %2230 = vrot.lane.b32.xlu0 %v2048, 64
  %v2231 = vpop.permute.xlu0 %2230
  %2232 = vrot.lane.b32.xlu0 %v2049, 64
  %v2233 = vpop.permute.xlu0 %2232
  %2234 = vrot.lane.b32.xlu0 %v2050, 64
  %v2235 = vpop.permute.xlu0 %2234
  %2236 = vrot.lane.b32.xlu0 %v2051, 64
  %v2237 = vpop.permute.xlu0 %2236
  %2238 = vrot.lane.b32.xlu0 %v2052, 64
  %v2239 = vpop.permute.xlu0 %2238
  %2240 = vrot.lane.b32.xlu0 %v2053, 64
  %v2241 = vpop.permute.xlu0 %2240
  %2242 = vrot.lane.b32.xlu0 %v2054, 64
  %v2243 = vpop.permute.xlu0 %2242
  %2244 = vrot.lane.b32.xlu0 %v2055, 64
  %v2245 = vpop.permute.xlu0 %2244
  %2246 = vrot.lane.b32.xlu0 %v2056, 64
  %v2247 = vpop.permute.xlu0 %2246
  %2248 = vrot.lane.b32.xlu0 %v2057, 64
  %v2249 = vpop.permute.xlu0 %2248
  %2314 = vmatpush.msra.mxu0 %v2153
  %2315 = vmatpush.msra.mxu0 %v2151
  %2316 = vmatpush.msra.mxu0 %v2149
  %2317 = vmatpush.msra.mxu0 %v2147
  %2318 = vmatpush.msra.mxu0 %v2145
  %2319 = vmatpush.msra.mxu0 %v2143
  %2320 = vmatpush.msra.mxu0 %v2141
  %2321 = vmatpush.msra.mxu0 %v2139
  %2322 = vmatpush.msra.mxu0 %v2137
  %2323 = vmatpush.msra.mxu0 %v2135
  %2324 = vmatpush.msra.mxu0 %v2133
  %2325 = vmatpush.msra.mxu0 %v2131
  %2326 = vmatpush.msra.mxu0 %v2129
  %2327 = vmatpush.msra.mxu0 %v2127
  %2328 = vmatpush.msra.mxu0 %v2125
  %2329 = vmatpush.msra.mxu0 %v2123
  %2330 = vmatmul.f32.gmra.mxu0 %v943
  %v2331 = vpop.f32.mrf.mxu0
  %v2332 = vadd.f32 0.0, %v2331
  %2333 = vmatmul.f32.gmra.mxu0 %v944
  %v2334 = vpop.f32.mrf.mxu0
  %v2335 = vadd.f32 0.0, %v2334
  %2336 = vmatmul.f32.gmra.mxu0 %v945
  %v2337 = vpop.f32.mrf.mxu0
  %v2338 = vadd.f32 0.0, %v2337
  %2339 = vmatmul.f32.gmra.mxu0 %v946
  %v2340 = vpop.f32.mrf.mxu0
  %v2341 = vadd.f32 0.0, %v2340
  %2342 = vmatmul.f32.gmra.mxu0 %v947
  %v2343 = vpop.f32.mrf.mxu0
  %v2344 = vadd.f32 0.0, %v2343
  %2345 = vmatmul.f32.gmra.mxu0 %v948
  %v2346 = vpop.f32.mrf.mxu0
  %v2347 = vadd.f32 0.0, %v2346
  %2348 = vmatmul.f32.gmra.mxu0 %v949
  %v2349 = vpop.f32.mrf.mxu0
  %v2350 = vadd.f32 0.0, %v2349
  %2351 = vmatmul.f32.gmra.mxu0 %v950
  %v2352 = vpop.f32.mrf.mxu0
  %v2353 = vadd.f32 0.0, %v2352
  %2354 = vmatmul.f32.gmra.mxu0 %v951
  %v2355 = vpop.f32.mrf.mxu0
  %v2356 = vadd.f32 0.0, %v2355
  %2357 = vmatmul.f32.gmra.mxu0 %v952
  %v2358 = vpop.f32.mrf.mxu0
  %v2359 = vadd.f32 0.0, %v2358
  %2360 = vmatmul.f32.gmra.mxu0 %v953
  %v2361 = vpop.f32.mrf.mxu0
  %v2362 = vadd.f32 0.0, %v2361
  %2363 = vmatmul.f32.gmra.mxu0 %v954
  %v2364 = vpop.f32.mrf.mxu0
  %v2365 = vadd.f32 0.0, %v2364
  %2366 = vmatmul.f32.gmra.mxu0 %v955
  %v2367 = vpop.f32.mrf.mxu0
  %v2368 = vadd.f32 0.0, %v2367
  %2369 = vmatmul.f32.gmra.mxu0 %v956
  %v2370 = vpop.f32.mrf.mxu0
  %v2371 = vadd.f32 0.0, %v2370
  %2372 = vmatmul.f32.gmra.mxu0 %v957
  %v2373 = vpop.f32.mrf.mxu0
  %v2374 = vadd.f32 0.0, %v2373
  %2375 = vmatmul.f32.gmra.mxu0 %v958
  %v2376 = vpop.f32.mrf.mxu0
  %v2377 = vadd.f32 0.0, %v2376
  %2378 = vdwg.mxu0
  %2379 = vmatpush.msra.mxu0 %v2185
  %2380 = vmatpush.msra.mxu0 %v2183
  %2381 = vmatpush.msra.mxu0 %v2181
  %2382 = vmatpush.msra.mxu0 %v2179
  %2383 = vmatpush.msra.mxu0 %v2177
  %2384 = vmatpush.msra.mxu0 %v2175
  %2385 = vmatpush.msra.mxu0 %v2173
  %2386 = vmatpush.msra.mxu0 %v2171
  %2387 = vmatpush.msra.mxu0 %v2169
  %2388 = vmatpush.msra.mxu0 %v2167
  %2389 = vmatpush.msra.mxu0 %v2165
  %2390 = vmatpush.msra.mxu0 %v2163
  %2391 = vmatpush.msra.mxu0 %v2161
  %2392 = vmatpush.msra.mxu0 %v2159
  %2393 = vmatpush.msra.mxu0 %v2157
  %2394 = vmatpush.msra.mxu0 %v2155
  %2395 = vmatmul.f32.gmra.mxu0 %v1302
  %v2396 = vpop.f32.mrf.mxu0
  %v2397 = vadd.f32 %v2332, %v2396
  %2398 = vmatmul.f32.gmra.mxu0 %v1303
  %v2399 = vpop.f32.mrf.mxu0
  %v2400 = vadd.f32 %v2335, %v2399
  %2401 = vmatmul.f32.gmra.mxu0 %v1304
  %v2402 = vpop.f32.mrf.mxu0
  %v2403 = vadd.f32 %v2338, %v2402
  %2404 = vmatmul.f32.gmra.mxu0 %v1305
  %v2405 = vpop.f32.mrf.mxu0
  %v2406 = vadd.f32 %v2341, %v2405
  %2407 = vmatmul.f32.gmra.mxu0 %v1306
  %v2408 = vpop.f32.mrf.mxu0
  %v2409 = vadd.f32 %v2344, %v2408
  %2410 = vmatmul.f32.gmra.mxu0 %v1307
  %v2411 = vpop.f32.mrf.mxu0
  %v2412 = vadd.f32 %v2347, %v2411
  %2413 = vmatmul.f32.gmra.mxu0 %v1308
  %v2414 = vpop.f32.mrf.mxu0
  %v2415 = vadd.f32 %v2350, %v2414
  %2416 = vmatmul.f32.gmra.mxu0 %v1309
  %v2417 = vpop.f32.mrf.mxu0
  %v2418 = vadd.f32 %v2353, %v2417
  %2419 = vmatmul.f32.gmra.mxu0 %v1310
  %v2420 = vpop.f32.mrf.mxu0
  %v2421 = vadd.f32 %v2356, %v2420
  %2422 = vmatmul.f32.gmra.mxu0 %v1311
  %v2423 = vpop.f32.mrf.mxu0
  %v2424 = vadd.f32 %v2359, %v2423
  %2425 = vmatmul.f32.gmra.mxu0 %v1312
  %v2426 = vpop.f32.mrf.mxu0
  %v2427 = vadd.f32 %v2362, %v2426
  %2428 = vmatmul.f32.gmra.mxu0 %v1313
  %v2429 = vpop.f32.mrf.mxu0
  %v2430 = vadd.f32 %v2365, %v2429
  %2431 = vmatmul.f32.gmra.mxu0 %v1314
  %v2432 = vpop.f32.mrf.mxu0
  %v2433 = vadd.f32 %v2368, %v2432
  %2434 = vmatmul.f32.gmra.mxu0 %v1315
  %v2435 = vpop.f32.mrf.mxu0
  %v2436 = vadd.f32 %v2371, %v2435
  %2437 = vmatmul.f32.gmra.mxu0 %v1316
  %v2438 = vpop.f32.mrf.mxu0
  %v2439 = vadd.f32 %v2374, %v2438
  %2440 = vmatmul.f32.gmra.mxu0 %v1317
  %v2441 = vpop.f32.mrf.mxu0
  %v2442 = vadd.f32 %v2377, %v2441
  %2443 = vdwg.mxu0
  %2444 = vmatpush.msra.mxu0 %v2217
  %2445 = vmatpush.msra.mxu0 %v2215
  %2446 = vmatpush.msra.mxu0 %v2213
  %2447 = vmatpush.msra.mxu0 %v2211
  %2448 = vmatpush.msra.mxu0 %v2209
  %2449 = vmatpush.msra.mxu0 %v2207
  %2450 = vmatpush.msra.mxu0 %v2205
  %2451 = vmatpush.msra.mxu0 %v2203
  %2452 = vmatpush.msra.mxu0 %v2201
  %2453 = vmatpush.msra.mxu0 %v2199
  %2454 = vmatpush.msra.mxu0 %v2197
  %2455 = vmatpush.msra.mxu0 %v2195
  %2456 = vmatpush.msra.mxu0 %v2193
  %2457 = vmatpush.msra.mxu0 %v2191
  %2458 = vmatpush.msra.mxu0 %v2189
  %2459 = vmatpush.msra.mxu0 %v2187
  %2460 = vmatmul.f32.gmra.mxu0 %v1661
  %v2461 = vpop.f32.mrf.mxu0
  %v2462 = vadd.f32 %v2397, %v2461
  %2463 = vmatmul.f32.gmra.mxu0 %v1662
  %v2464 = vpop.f32.mrf.mxu0
  %v2465 = vadd.f32 %v2400, %v2464
  %2466 = vmatmul.f32.gmra.mxu0 %v1663
  %v2467 = vpop.f32.mrf.mxu0
  %v2468 = vadd.f32 %v2403, %v2467
  %2469 = vmatmul.f32.gmra.mxu0 %v1664
  %v2470 = vpop.f32.mrf.mxu0
  %v2471 = vadd.f32 %v2406, %v2470
  %2472 = vmatmul.f32.gmra.mxu0 %v1665
  %v2473 = vpop.f32.mrf.mxu0
  %v2474 = vadd.f32 %v2409, %v2473
  %2475 = vmatmul.f32.gmra.mxu0 %v1666
  %v2476 = vpop.f32.mrf.mxu0
  %v2477 = vadd.f32 %v2412, %v2476
  %2478 = vmatmul.f32.gmra.mxu0 %v1667
  %v2479 = vpop.f32.mrf.mxu0
  %v2480 = vadd.f32 %v2415, %v2479
  %2481 = vmatmul.f32.gmra.mxu0 %v1668
  %v2482 = vpop.f32.mrf.mxu0
  %v2483 = vadd.f32 %v2418, %v2482
  %2484 = vmatmul.f32.gmra.mxu0 %v1669
  %v2485 = vpop.f32.mrf.mxu0
  %v2486 = vadd.f32 %v2421, %v2485
  %2487 = vmatmul.f32.gmra.mxu0 %v1670
  %v2488 = vpop.f32.mrf.mxu0
  %v2489 = vadd.f32 %v2424, %v2488
  %2490 = vmatmul.f32.gmra.mxu0 %v1671
  %v2491 = vpop.f32.mrf.mxu0
  %v2492 = vadd.f32 %v2427, %v2491
  %2493 = vmatmul.f32.gmra.mxu0 %v1672
  %v2494 = vpop.f32.mrf.mxu0
  %v2495 = vadd.f32 %v2430, %v2494
  %2496 = vmatmul.f32.gmra.mxu0 %v1673
  %v2497 = vpop.f32.mrf.mxu0
  %v2498 = vadd.f32 %v2433, %v2497
  %2499 = vmatmul.f32.gmra.mxu0 %v1674
  %v2500 = vpop.f32.mrf.mxu0
  %v2501 = vadd.f32 %v2436, %v2500
  %2502 = vmatmul.f32.gmra.mxu0 %v1675
  %v2503 = vpop.f32.mrf.mxu0
  %v2504 = vadd.f32 %v2439, %v2503
  %2505 = vmatmul.f32.gmra.mxu0 %v1676
  %v2506 = vpop.f32.mrf.mxu0
  %v2507 = vadd.f32 %v2442, %v2506
  %2508 = vdwg.mxu0
  %2509 = vmatpush.msra.mxu0 %v2249
  %2510 = vmatpush.msra.mxu0 %v2247
  %2511 = vmatpush.msra.mxu0 %v2245
  %2512 = vmatpush.msra.mxu0 %v2243
  %2513 = vmatpush.msra.mxu0 %v2241
  %2514 = vmatpush.msra.mxu0 %v2239
  %2515 = vmatpush.msra.mxu0 %v2237
  %2516 = vmatpush.msra.mxu0 %v2235
  %2517 = vmatpush.msra.mxu0 %v2233
  %2518 = vmatpush.msra.mxu0 %v2231
  %2519 = vmatpush.msra.mxu0 %v2229
  %2520 = vmatpush.msra.mxu0 %v2227
  %2521 = vmatpush.msra.mxu0 %v2225
  %2522 = vmatpush.msra.mxu0 %v2223
  %2523 = vmatpush.msra.mxu0 %v2221
  %2524 = vmatpush.msra.mxu0 %v2219
  %2525 = vmatmul.f32.gmra.mxu0 %v2020
  %v2526 = vpop.f32.mrf.mxu0
  %v2527 = vadd.f32 %v2462, %v2526
  %2528 = vmatmul.f32.gmra.mxu0 %v2021
  %v2529 = vpop.f32.mrf.mxu0
  %v2530 = vadd.f32 %v2465, %v2529
  %2531 = vmatmul.f32.gmra.mxu0 %v2022
  %v2532 = vpop.f32.mrf.mxu0
  %v2533 = vadd.f32 %v2468, %v2532
  %2534 = vmatmul.f32.gmra.mxu0 %v2023
  %v2535 = vpop.f32.mrf.mxu0
  %v2536 = vadd.f32 %v2471, %v2535
  %2537 = vmatmul.f32.gmra.mxu0 %v2024
  %v2538 = vpop.f32.mrf.mxu0
  %v2539 = vadd.f32 %v2474, %v2538
  %2540 = vmatmul.f32.gmra.mxu0 %v2025
  %v2541 = vpop.f32.mrf.mxu0
  %v2542 = vadd.f32 %v2477, %v2541
  %2543 = vmatmul.f32.gmra.mxu0 %v2026
  %v2544 = vpop.f32.mrf.mxu0
  %v2545 = vadd.f32 %v2480, %v2544
  %2546 = vmatmul.f32.gmra.mxu0 %v2027
  %v2547 = vpop.f32.mrf.mxu0
  %v2548 = vadd.f32 %v2483, %v2547
  %2549 = vmatmul.f32.gmra.mxu0 %v2028
  %v2550 = vpop.f32.mrf.mxu0
  %v2551 = vadd.f32 %v2486, %v2550
  %2552 = vmatmul.f32.gmra.mxu0 %v2029
  %v2553 = vpop.f32.mrf.mxu0
  %v2554 = vadd.f32 %v2489, %v2553
  %2555 = vmatmul.f32.gmra.mxu0 %v2030
  %v2556 = vpop.f32.mrf.mxu0
  %v2557 = vadd.f32 %v2492, %v2556
  %2558 = vmatmul.f32.gmra.mxu0 %v2031
  %v2559 = vpop.f32.mrf.mxu0
  %v2560 = vadd.f32 %v2495, %v2559
  %2561 = vmatmul.f32.gmra.mxu0 %v2032
  %v2562 = vpop.f32.mrf.mxu0
  %v2563 = vadd.f32 %v2498, %v2562
  %2564 = vmatmul.f32.gmra.mxu0 %v2033
  %v2565 = vpop.f32.mrf.mxu0
  %v2566 = vadd.f32 %v2501, %v2565
  %2567 = vmatmul.f32.gmra.mxu0 %v2034
  %v2568 = vpop.f32.mrf.mxu0
  %v2569 = vadd.f32 %v2504, %v2568
  %2570 = vmatmul.f32.gmra.mxu0 %v2035
  %v2571 = vpop.f32.mrf.mxu0
  %v2572 = vadd.f32 %v2507, %v2571
  %2573 = vdwg.mxu0
  %v2574 = vld [vmem:[%s6] sm:$0xff]
  %v2575 = vld [vmem:[%s6 + $0x8] sm:$0xff]
  %v2576 = vld [vmem:[%s6 + $0x10] sm:$0xff]
  %v2577 = vld [vmem:[%s6 + $0x18] sm:$0xff]
  %v2579 = vsel %vm74, %v2527, 0
  %v2582 = vsel %vm74, %v2530, 0
  %v2585 = vsel %vm74, %v2533, 0
  %v2588 = vsel %vm74, %v2536, 0
  %v2591 = vsel %vm74, %v2539, 0
  %v2594 = vsel %vm74, %v2542, 0
  %v2597 = vsel %vm74, %v2545, 0
  %v2600 = vsel %vm74, %v2548, 0
  %v2603 = vsel %vm74, %v2551, 0
  %v2606 = vsel %vm74, %v2554, 0
  %v2609 = vsel %vm74, %v2557, 0
  %v2612 = vsel %vm74, %v2560, 0
  %v2615 = vsel %vm74, %v2563, 0
  %v2618 = vsel %vm74, %v2566, 0
  %v2621 = vsel %vm74, %v2569, 0
  %v2624 = vsel %vm74, %v2572, 0
  %2626 = vmatpush.msra.mxu0 0.0
  %2627 = vmatpush.msra.mxu0 0.0
  %2628 = vmatpush.msra.mxu0 0.0
  %2629 = vmatpush.msra.mxu0 0.0
  %2630 = vmatpush.msra.mxu0 0.0
  %2631 = vmatpush.msra.mxu0 0.0
  %2632 = vmatpush.msra.mxu0 0.0
  %2633 = vmatpush.msra.mxu0 0.0
  %2634 = vmatpush.msra.mxu0 0.0
  %2635 = vmatpush.msra.mxu0 0.0
  %2636 = vmatpush.msra.mxu0 0.0
  %2637 = vmatpush.msra.mxu0 0.0
  %2638 = vmatpush.msra.mxu0 %v2577
  %2639 = vmatpush.msra.mxu0 %v2576
  %2640 = vmatpush.msra.mxu0 %v2575
  %2641 = vmatpush.msra.mxu0 %v2574
  %2642 = vmatmul.f32.gmra.mxu0 %v2579
  %v2643 = vpop.f32.mrf.mxu0
  %v2644 = vadd.f32 0.0, %v2643
  %2645 = vmatmul.f32.gmra.mxu0 %v2582
  %v2646 = vpop.f32.mrf.mxu0
  %v2647 = vadd.f32 0.0, %v2646
  %2648 = vmatmul.f32.gmra.mxu0 %v2585
  %v2649 = vpop.f32.mrf.mxu0
  %v2650 = vadd.f32 0.0, %v2649
  %2651 = vmatmul.f32.gmra.mxu0 %v2588
  %v2652 = vpop.f32.mrf.mxu0
  %v2653 = vadd.f32 0.0, %v2652
  %2654 = vmatmul.f32.gmra.mxu0 %v2591
  %v2655 = vpop.f32.mrf.mxu0
  %v2656 = vadd.f32 0.0, %v2655
  %2657 = vmatmul.f32.gmra.mxu0 %v2594
  %v2658 = vpop.f32.mrf.mxu0
  %v2659 = vadd.f32 0.0, %v2658
  %2660 = vmatmul.f32.gmra.mxu0 %v2597
  %v2661 = vpop.f32.mrf.mxu0
  %v2662 = vadd.f32 0.0, %v2661
  %2663 = vmatmul.f32.gmra.mxu0 %v2600
  %v2664 = vpop.f32.mrf.mxu0
  %v2665 = vadd.f32 0.0, %v2664
  %2666 = vmatmul.f32.gmra.mxu0 %v2603
  %v2667 = vpop.f32.mrf.mxu0
  %v2668 = vadd.f32 0.0, %v2667
  %2669 = vmatmul.f32.gmra.mxu0 %v2606
  %v2670 = vpop.f32.mrf.mxu0
  %v2671 = vadd.f32 0.0, %v2670
  %2672 = vmatmul.f32.gmra.mxu0 %v2609
  %v2673 = vpop.f32.mrf.mxu0
  %v2674 = vadd.f32 0.0, %v2673
  %2675 = vmatmul.f32.gmra.mxu0 %v2612
  %v2676 = vpop.f32.mrf.mxu0
  %v2677 = vadd.f32 0.0, %v2676
  %2678 = vmatmul.f32.gmra.mxu0 %v2615
  %v2679 = vpop.f32.mrf.mxu0
  %v2680 = vadd.f32 0.0, %v2679
  %2681 = vmatmul.f32.gmra.mxu0 %v2618
  %v2682 = vpop.f32.mrf.mxu0
  %v2683 = vadd.f32 0.0, %v2682
  %2684 = vmatmul.f32.gmra.mxu0 %v2621
  %v2685 = vpop.f32.mrf.mxu0
  %v2686 = vadd.f32 0.0, %v2685
  %2687 = vmatmul.f32.gmra.mxu0 %v2624
  %v2688 = vpop.f32.mrf.mxu0
  %v2689 = vadd.f32 0.0, %v2688
  %2690 = vdwg.mxu0
  %v2691 = vadd.f32 %v56, %v2644
  %v2692 = vadd.f32 %v57, %v2647
  %v2693 = vadd.f32 %v58, %v2650
  %v2694 = vadd.f32 %v59, %v2653
  %v2695 = vadd.f32 %v60, %v2656
  %v2696 = vadd.f32 %v61, %v2659
  %v2697 = vadd.f32 %v62, %v2662
  %v2698 = vadd.f32 %v63, %v2665
  %v2699 = vadd.f32 %v64, %v2668
  %v2700 = vadd.f32 %v65, %v2671
  %v2701 = vadd.f32 %v66, %v2674
  %v2702 = vadd.f32 %v67, %v2677
  %v2703 = vadd.f32 %v68, %v2680
  %v2704 = vadd.f32 %v69, %v2683
  %v2705 = vadd.f32 %v70, %v2686
  %v2706 = vadd.f32 %v71, %v2689
  %v2707 = vld [vmem:[%s7] sm:$0x1]
  %v2709 = vperm.slane %v2707, 0
  %v2711 = vadd.f32 %v2691, %v2709
  %v2712 = vadd.f32 %v2692, %v2709
  %v2713 = vadd.f32 %v2693, %v2709
  %v2714 = vadd.f32 %v2694, %v2709
  %v2715 = vadd.f32 %v2695, %v2709
  %v2716 = vadd.f32 %v2696, %v2709
  %v2717 = vadd.f32 %v2697, %v2709
  %v2718 = vadd.f32 %v2698, %v2709
  %v2719 = vadd.f32 %v2699, %v2709
  %v2720 = vadd.f32 %v2700, %v2709
  %v2721 = vadd.f32 %v2701, %v2709
  %v2722 = vadd.f32 %v2702, %v2709
  %v2723 = vadd.f32 %v2703, %v2709
  %v2724 = vadd.f32 %v2704, %v2709
  %v2725 = vadd.f32 %v2705, %v2709
  %v2726 = vadd.f32 %v2706, %v2709
  %v2727 = vld [vmem:[%s8] sm:$0x1]
  %v2728 = vld [vmem:[%s9] sm:$0x1]
  %v2729 = vsel %vm74, %v2711, 0.0
  %2730 = vadd.xlane.f32.xlu0 %v2729
  %v2731 = vpop.xlane.xlu0 %2730
  %v2732 = vsel %vm74, %v2712, 0.0
  %2733 = vadd.xlane.f32.xlu0 %v2732
  %v2734 = vpop.xlane.xlu0 %2733
  %v2735 = vsel %vm74, %v2713, 0.0
  %2736 = vadd.xlane.f32.xlu0 %v2735
  %v2737 = vpop.xlane.xlu0 %2736
  %v2738 = vsel %vm74, %v2714, 0.0
  %2739 = vadd.xlane.f32.xlu0 %v2738
  %v2740 = vpop.xlane.xlu0 %2739
  %v2741 = vsel %vm74, %v2715, 0.0
  %2742 = vadd.xlane.f32.xlu0 %v2741
  %v2743 = vpop.xlane.xlu0 %2742
  %v2744 = vsel %vm74, %v2716, 0.0
  %2745 = vadd.xlane.f32.xlu0 %v2744
  %v2746 = vpop.xlane.xlu0 %2745
  %v2747 = vsel %vm74, %v2717, 0.0
  %2748 = vadd.xlane.f32.xlu0 %v2747
  %v2749 = vpop.xlane.xlu0 %2748
  %v2750 = vsel %vm74, %v2718, 0.0
  %2751 = vadd.xlane.f32.xlu0 %v2750
  %v2752 = vpop.xlane.xlu0 %2751
  %v2753 = vsel %vm74, %v2719, 0.0
  %2754 = vadd.xlane.f32.xlu0 %v2753
  %v2755 = vpop.xlane.xlu0 %2754
  %v2756 = vsel %vm74, %v2720, 0.0
  %2757 = vadd.xlane.f32.xlu0 %v2756
  %v2758 = vpop.xlane.xlu0 %2757
  %v2759 = vsel %vm74, %v2721, 0.0
  %2760 = vadd.xlane.f32.xlu0 %v2759
  %v2761 = vpop.xlane.xlu0 %2760
  %v2762 = vsel %vm74, %v2722, 0.0
  %2763 = vadd.xlane.f32.xlu0 %v2762
  %v2764 = vpop.xlane.xlu0 %2763
  %v2765 = vsel %vm74, %v2723, 0.0
  %2766 = vadd.xlane.f32.xlu0 %v2765
  %v2767 = vpop.xlane.xlu0 %2766
  %v2768 = vsel %vm74, %v2724, 0.0
  %2769 = vadd.xlane.f32.xlu0 %v2768
  %v2770 = vpop.xlane.xlu0 %2769
  %v2771 = vsel %vm74, %v2725, 0.0
  %2772 = vadd.xlane.f32.xlu0 %v2771
  %v2773 = vpop.xlane.xlu0 %2772
  %v2774 = vsel %vm74, %v2726, 0.0
  %2775 = vadd.xlane.f32.xlu0 %v2774
  %v2776 = vpop.xlane.xlu0 %2775
  %v2777 = vmul.f32 %v2731, %v129
  %v2778 = vmul.f32 %v2734, %v129
  %v2779 = vmul.f32 %v2737, %v129
  %v2780 = vmul.f32 %v2740, %v129
  %v2781 = vmul.f32 %v2743, %v129
  %v2782 = vmul.f32 %v2746, %v129
  %v2783 = vmul.f32 %v2749, %v129
  %v2784 = vmul.f32 %v2752, %v129
  %v2785 = vmul.f32 %v2755, %v129
  %v2786 = vmul.f32 %v2758, %v129
  %v2787 = vmul.f32 %v2761, %v129
  %v2788 = vmul.f32 %v2764, %v129
  %v2789 = vmul.f32 %v2767, %v129
  %v2790 = vmul.f32 %v2770, %v129
  %v2791 = vmul.f32 %v2773, %v129
  %v2792 = vmul.f32 %v2776, %v129
  %v2793 = vmul.f32 %v2711, %v2711
  %v2794 = vmul.f32 %v2712, %v2712
  %v2795 = vmul.f32 %v2713, %v2713
  %v2796 = vmul.f32 %v2714, %v2714
  %v2797 = vmul.f32 %v2715, %v2715
  %v2798 = vmul.f32 %v2716, %v2716
  %v2799 = vmul.f32 %v2717, %v2717
  %v2800 = vmul.f32 %v2718, %v2718
  %v2801 = vmul.f32 %v2719, %v2719
  %v2802 = vmul.f32 %v2720, %v2720
  %v2803 = vmul.f32 %v2721, %v2721
  %v2804 = vmul.f32 %v2722, %v2722
  %v2805 = vmul.f32 %v2723, %v2723
  %v2806 = vmul.f32 %v2724, %v2724
  %v2807 = vmul.f32 %v2725, %v2725
  %v2808 = vmul.f32 %v2726, %v2726
  %v2809 = vsel %vm74, %v2793, 0.0
  %2810 = vadd.xlane.f32.xlu0 %v2809
  %v2811 = vpop.xlane.xlu0 %2810
  %v2812 = vsel %vm74, %v2794, 0.0
  %2813 = vadd.xlane.f32.xlu0 %v2812
  %v2814 = vpop.xlane.xlu0 %2813
  %v2815 = vsel %vm74, %v2795, 0.0
  %2816 = vadd.xlane.f32.xlu0 %v2815
  %v2817 = vpop.xlane.xlu0 %2816
  %v2818 = vsel %vm74, %v2796, 0.0
  %2819 = vadd.xlane.f32.xlu0 %v2818
  %v2820 = vpop.xlane.xlu0 %2819
  %v2821 = vsel %vm74, %v2797, 0.0
  %2822 = vadd.xlane.f32.xlu0 %v2821
  %v2823 = vpop.xlane.xlu0 %2822
  %v2824 = vsel %vm74, %v2798, 0.0
  %2825 = vadd.xlane.f32.xlu0 %v2824
  %v2826 = vpop.xlane.xlu0 %2825
  %v2827 = vsel %vm74, %v2799, 0.0
  %2828 = vadd.xlane.f32.xlu0 %v2827
  %v2829 = vpop.xlane.xlu0 %2828
  %v2830 = vsel %vm74, %v2800, 0.0
  %2831 = vadd.xlane.f32.xlu0 %v2830
  %v2832 = vpop.xlane.xlu0 %2831
  %v2833 = vsel %vm74, %v2801, 0.0
  %2834 = vadd.xlane.f32.xlu0 %v2833
  %v2835 = vpop.xlane.xlu0 %2834
  %v2836 = vsel %vm74, %v2802, 0.0
  %2837 = vadd.xlane.f32.xlu0 %v2836
  %v2838 = vpop.xlane.xlu0 %2837
  %v2839 = vsel %vm74, %v2803, 0.0
  %2840 = vadd.xlane.f32.xlu0 %v2839
  %v2841 = vpop.xlane.xlu0 %2840
  %v2842 = vsel %vm74, %v2804, 0.0
  %2843 = vadd.xlane.f32.xlu0 %v2842
  %v2844 = vpop.xlane.xlu0 %2843
  %v2845 = vsel %vm74, %v2805, 0.0
  %2846 = vadd.xlane.f32.xlu0 %v2845
  %v2847 = vpop.xlane.xlu0 %2846
  %v2848 = vsel %vm74, %v2806, 0.0
  %2849 = vadd.xlane.f32.xlu0 %v2848
  %v2850 = vpop.xlane.xlu0 %2849
  %v2851 = vsel %vm74, %v2807, 0.0
  %2852 = vadd.xlane.f32.xlu0 %v2851
  %v2853 = vpop.xlane.xlu0 %2852
  %v2854 = vsel %vm74, %v2808, 0.0
  %2855 = vadd.xlane.f32.xlu0 %v2854
  %v2856 = vpop.xlane.xlu0 %2855
  %v2857 = vmul.f32 %v2811, %v129
  %v2858 = vmul.f32 %v2814, %v129
  %v2859 = vmul.f32 %v2817, %v129
  %v2860 = vmul.f32 %v2820, %v129
  %v2861 = vmul.f32 %v2823, %v129
  %v2862 = vmul.f32 %v2826, %v129
  %v2863 = vmul.f32 %v2829, %v129
  %v2864 = vmul.f32 %v2832, %v129
  %v2865 = vmul.f32 %v2835, %v129
  %v2866 = vmul.f32 %v2838, %v129
  %v2867 = vmul.f32 %v2841, %v129
  %v2868 = vmul.f32 %v2844, %v129
  %v2869 = vmul.f32 %v2847, %v129
  %v2870 = vmul.f32 %v2850, %v129
  %v2871 = vmul.f32 %v2853, %v129
  %v2872 = vmul.f32 %v2856, %v129
  %v2873 = vmul.f32 %v2777, %v2777
  %v2874 = vmul.f32 %v2778, %v2778
  %v2875 = vmul.f32 %v2779, %v2779
  %v2876 = vmul.f32 %v2780, %v2780
  %v2877 = vmul.f32 %v2781, %v2781
  %v2878 = vmul.f32 %v2782, %v2782
  %v2879 = vmul.f32 %v2783, %v2783
  %v2880 = vmul.f32 %v2784, %v2784
  %v2881 = vmul.f32 %v2785, %v2785
  %v2882 = vmul.f32 %v2786, %v2786
  %v2883 = vmul.f32 %v2787, %v2787
  %v2884 = vmul.f32 %v2788, %v2788
  %v2885 = vmul.f32 %v2789, %v2789
  %v2886 = vmul.f32 %v2790, %v2790
  %v2887 = vmul.f32 %v2791, %v2791
  %v2888 = vmul.f32 %v2792, %v2792
  %v2889 = vsub.f32 %v2857, %v2873
  %v2890 = vsub.f32 %v2858, %v2874
  %v2891 = vsub.f32 %v2859, %v2875
  %v2892 = vsub.f32 %v2860, %v2876
  %v2893 = vsub.f32 %v2861, %v2877
  %v2894 = vsub.f32 %v2862, %v2878
  %v2895 = vsub.f32 %v2863, %v2879
  %v2896 = vsub.f32 %v2864, %v2880
  %v2897 = vsub.f32 %v2865, %v2881
  %v2898 = vsub.f32 %v2866, %v2882
  %v2899 = vsub.f32 %v2867, %v2883
  %v2900 = vsub.f32 %v2868, %v2884
  %v2901 = vsub.f32 %v2869, %v2885
  %v2902 = vsub.f32 %v2870, %v2886
  %v2903 = vsub.f32 %v2871, %v2887
  %v2904 = vsub.f32 %v2872, %v2888
  %v2905 = vsub.f32 %v2711, %v2777
  %v2906 = vsub.f32 %v2712, %v2778
  %v2907 = vsub.f32 %v2713, %v2779
  %v2908 = vsub.f32 %v2714, %v2780
  %v2909 = vsub.f32 %v2715, %v2781
  %v2910 = vsub.f32 %v2716, %v2782
  %v2911 = vsub.f32 %v2717, %v2783
  %v2912 = vsub.f32 %v2718, %v2784
  %v2913 = vsub.f32 %v2719, %v2785
  %v2914 = vsub.f32 %v2720, %v2786
  %v2915 = vsub.f32 %v2721, %v2787
  %v2916 = vsub.f32 %v2722, %v2788
  %v2917 = vsub.f32 %v2723, %v2789
  %v2918 = vsub.f32 %v2724, %v2790
  %v2919 = vsub.f32 %v2725, %v2791
  %v2920 = vsub.f32 %v2726, %v2792
  %v2921 = vadd.f32 %v2889, 1e-05
  %v2922 = vadd.f32 %v2890, 1e-05
  %v2923 = vadd.f32 %v2891, 1e-05
  %v2924 = vadd.f32 %v2892, 1e-05
  %v2925 = vadd.f32 %v2893, 1e-05
  %v2926 = vadd.f32 %v2894, 1e-05
  %v2927 = vadd.f32 %v2895, 1e-05
  %v2928 = vadd.f32 %v2896, 1e-05
  %v2929 = vadd.f32 %v2897, 1e-05
  %v2930 = vadd.f32 %v2898, 1e-05
  %v2931 = vadd.f32 %v2899, 1e-05
  %v2932 = vadd.f32 %v2900, 1e-05
  %v2933 = vadd.f32 %v2901, 1e-05
  %v2934 = vadd.f32 %v2902, 1e-05
  %v2935 = vadd.f32 %v2903, 1e-05
  %v2936 = vadd.f32 %v2904, 1e-05
  %v2937 = vrsqrt.pop %v2921
  %v2938 = vmul.f32 %v2937, %v2921
  %v2939 = vmul.f32 %v2938, %v2937
  %v2940 = vmul.f32 0.5, %v2939
  %v2941 = vsub.f32 1.5, %v2940
  %v2942 = vmul.f32 %v2937, %v2941
  %vm2943 = vweird.f32 %v2921
  %vm2944 = vweird.f32 %v2937
  %vm2945 = vmor %vm2943, %vm2944
  %v2946 = vsel %vm2945, %v2937, %v2942
  %v2947 = vrsqrt.pop %v2922
  %v2948 = vmul.f32 %v2947, %v2922
  %v2949 = vmul.f32 %v2948, %v2947
  %v2950 = vmul.f32 0.5, %v2949
  %v2951 = vsub.f32 1.5, %v2950
  %v2952 = vmul.f32 %v2947, %v2951
  %vm2953 = vweird.f32 %v2922
  %vm2954 = vweird.f32 %v2947
  %vm2955 = vmor %vm2953, %vm2954
  %v2956 = vsel %vm2955, %v2947, %v2952
  %v2957 = vrsqrt.pop %v2923
  %v2958 = vmul.f32 %v2957, %v2923
  %v2959 = vmul.f32 %v2958, %v2957
  %v2960 = vmul.f32 0.5, %v2959
  %v2961 = vsub.f32 1.5, %v2960
  %v2962 = vmul.f32 %v2957, %v2961
  %vm2963 = vweird.f32 %v2923
  %vm2964 = vweird.f32 %v2957
  %vm2965 = vmor %vm2963, %vm2964
  %v2966 = vsel %vm2965, %v2957, %v2962
  %v2967 = vrsqrt.pop %v2924
  %v2968 = vmul.f32 %v2967, %v2924
  %v2969 = vmul.f32 %v2968, %v2967
  %v2970 = vmul.f32 0.5, %v2969
  %v2971 = vsub.f32 1.5, %v2970
  %v2972 = vmul.f32 %v2967, %v2971
  %vm2973 = vweird.f32 %v2924
  %vm2974 = vweird.f32 %v2967
  %vm2975 = vmor %vm2973, %vm2974
  %v2976 = vsel %vm2975, %v2967, %v2972
  %v2977 = vrsqrt.pop %v2925
  %v2978 = vmul.f32 %v2977, %v2925
  %v2979 = vmul.f32 %v2978, %v2977
  %v2980 = vmul.f32 0.5, %v2979
  %v2981 = vsub.f32 1.5, %v2980
  %v2982 = vmul.f32 %v2977, %v2981
  %vm2983 = vweird.f32 %v2925
  %vm2984 = vweird.f32 %v2977
  %vm2985 = vmor %vm2983, %vm2984
  %v2986 = vsel %vm2985, %v2977, %v2982
  %v2987 = vrsqrt.pop %v2926
  %v2988 = vmul.f32 %v2987, %v2926
  %v2989 = vmul.f32 %v2988, %v2987
  %v2990 = vmul.f32 0.5, %v2989
  %v2991 = vsub.f32 1.5, %v2990
  %v2992 = vmul.f32 %v2987, %v2991
  %vm2993 = vweird.f32 %v2926
  %vm2994 = vweird.f32 %v2987
  %vm2995 = vmor %vm2993, %vm2994
  %v2996 = vsel %vm2995, %v2987, %v2992
  %v2997 = vrsqrt.pop %v2927
  %v2998 = vmul.f32 %v2997, %v2927
  %v2999 = vmul.f32 %v2998, %v2997
  %v3000 = vmul.f32 0.5, %v2999
  %v3001 = vsub.f32 1.5, %v3000
  %v3002 = vmul.f32 %v2997, %v3001
  %vm3003 = vweird.f32 %v2927
  %vm3004 = vweird.f32 %v2997
  %vm3005 = vmor %vm3003, %vm3004
  %v3006 = vsel %vm3005, %v2997, %v3002
  %v3007 = vrsqrt.pop %v2928
  %v3008 = vmul.f32 %v3007, %v2928
  %v3009 = vmul.f32 %v3008, %v3007
  %v3010 = vmul.f32 0.5, %v3009
  %v3011 = vsub.f32 1.5, %v3010
  %v3012 = vmul.f32 %v3007, %v3011
  %vm3013 = vweird.f32 %v2928
  %vm3014 = vweird.f32 %v3007
  %vm3015 = vmor %vm3013, %vm3014
  %v3016 = vsel %vm3015, %v3007, %v3012
  %v3017 = vrsqrt.pop %v2929
  %v3018 = vmul.f32 %v3017, %v2929
  %v3019 = vmul.f32 %v3018, %v3017
  %v3020 = vmul.f32 0.5, %v3019
  %v3021 = vsub.f32 1.5, %v3020
  %v3022 = vmul.f32 %v3017, %v3021
  %vm3023 = vweird.f32 %v2929
  %vm3024 = vweird.f32 %v3017
  %vm3025 = vmor %vm3023, %vm3024
  %v3026 = vsel %vm3025, %v3017, %v3022
  %v3027 = vrsqrt.pop %v2930
  %v3028 = vmul.f32 %v3027, %v2930
  %v3029 = vmul.f32 %v3028, %v3027
  %v3030 = vmul.f32 0.5, %v3029
  %v3031 = vsub.f32 1.5, %v3030
  %v3032 = vmul.f32 %v3027, %v3031
  %vm3033 = vweird.f32 %v2930
  %vm3034 = vweird.f32 %v3027
  %vm3035 = vmor %vm3033, %vm3034
  %v3036 = vsel %vm3035, %v3027, %v3032
  %v3037 = vrsqrt.pop %v2931
  %v3038 = vmul.f32 %v3037, %v2931
  %v3039 = vmul.f32 %v3038, %v3037
  %v3040 = vmul.f32 0.5, %v3039
  %v3041 = vsub.f32 1.5, %v3040
  %v3042 = vmul.f32 %v3037, %v3041
  %vm3043 = vweird.f32 %v2931
  %vm3044 = vweird.f32 %v3037
  %vm3045 = vmor %vm3043, %vm3044
  %v3046 = vsel %vm3045, %v3037, %v3042
  %v3047 = vrsqrt.pop %v2932
  %v3048 = vmul.f32 %v3047, %v2932
  %v3049 = vmul.f32 %v3048, %v3047
  %v3050 = vmul.f32 0.5, %v3049
  %v3051 = vsub.f32 1.5, %v3050
  %v3052 = vmul.f32 %v3047, %v3051
  %vm3053 = vweird.f32 %v2932
  %vm3054 = vweird.f32 %v3047
  %vm3055 = vmor %vm3053, %vm3054
  %v3056 = vsel %vm3055, %v3047, %v3052
  %v3057 = vrsqrt.pop %v2933
  %v3058 = vmul.f32 %v3057, %v2933
  %v3059 = vmul.f32 %v3058, %v3057
  %v3060 = vmul.f32 0.5, %v3059
  %v3061 = vsub.f32 1.5, %v3060
  %v3062 = vmul.f32 %v3057, %v3061
  %vm3063 = vweird.f32 %v2933
  %vm3064 = vweird.f32 %v3057
  %vm3065 = vmor %vm3063, %vm3064
  %v3066 = vsel %vm3065, %v3057, %v3062
  %v3067 = vrsqrt.pop %v2934
  %v3068 = vmul.f32 %v3067, %v2934
  %v3069 = vmul.f32 %v3068, %v3067
  %v3070 = vmul.f32 0.5, %v3069
  %v3071 = vsub.f32 1.5, %v3070
  %v3072 = vmul.f32 %v3067, %v3071
  %vm3073 = vweird.f32 %v2934
  %vm3074 = vweird.f32 %v3067
  %vm3075 = vmor %vm3073, %vm3074
  %v3076 = vsel %vm3075, %v3067, %v3072
  %v3077 = vrsqrt.pop %v2935
  %v3078 = vmul.f32 %v3077, %v2935
  %v3079 = vmul.f32 %v3078, %v3077
  %v3080 = vmul.f32 0.5, %v3079
  %v3081 = vsub.f32 1.5, %v3080
  %v3082 = vmul.f32 %v3077, %v3081
  %vm3083 = vweird.f32 %v2935
  %vm3084 = vweird.f32 %v3077
  %vm3085 = vmor %vm3083, %vm3084
  %v3086 = vsel %vm3085, %v3077, %v3082
  %v3087 = vrsqrt.pop %v2936
  %v3088 = vmul.f32 %v3087, %v2936
  %v3089 = vmul.f32 %v3088, %v3087
  %v3090 = vmul.f32 0.5, %v3089
  %v3091 = vsub.f32 1.5, %v3090
  %v3092 = vmul.f32 %v3087, %v3091
  %vm3093 = vweird.f32 %v2936
  %vm3094 = vweird.f32 %v3087
  %vm3095 = vmor %vm3093, %vm3094
  %v3096 = vsel %vm3095, %v3087, %v3092
  %v3097 = vmul.f32 %v2905, %v2946
  %v3098 = vmul.f32 %v2906, %v2956
  %v3099 = vmul.f32 %v2907, %v2966
  %v3100 = vmul.f32 %v2908, %v2976
  %v3101 = vmul.f32 %v2909, %v2986
  %v3102 = vmul.f32 %v2910, %v2996
  %v3103 = vmul.f32 %v2911, %v3006
  %v3104 = vmul.f32 %v2912, %v3016
  %v3105 = vmul.f32 %v2913, %v3026
  %v3106 = vmul.f32 %v2914, %v3036
  %v3107 = vmul.f32 %v2915, %v3046
  %v3108 = vmul.f32 %v2916, %v3056
  %v3109 = vmul.f32 %v2917, %v3066
  %v3110 = vmul.f32 %v2918, %v3076
  %v3111 = vmul.f32 %v2919, %v3086
  %v3112 = vmul.f32 %v2920, %v3096
  %v3114 = vperm.slane %v2727, 0
  %v3116 = vmul.f32 %v3097, %v3114
  %v3117 = vmul.f32 %v3098, %v3114
  %v3118 = vmul.f32 %v3099, %v3114
  %v3119 = vmul.f32 %v3100, %v3114
  %v3120 = vmul.f32 %v3101, %v3114
  %v3121 = vmul.f32 %v3102, %v3114
  %v3122 = vmul.f32 %v3103, %v3114
  %v3123 = vmul.f32 %v3104, %v3114
  %v3124 = vmul.f32 %v3105, %v3114
  %v3125 = vmul.f32 %v3106, %v3114
  %v3126 = vmul.f32 %v3107, %v3114
  %v3127 = vmul.f32 %v3108, %v3114
  %v3128 = vmul.f32 %v3109, %v3114
  %v3129 = vmul.f32 %v3110, %v3114
  %v3130 = vmul.f32 %v3111, %v3114
  %v3131 = vmul.f32 %v3112, %v3114
  %v3133 = vperm.slane %v2728, 0
  %v3135 = vadd.f32 %v3116, %v3133
  %v3136 = vadd.f32 %v3117, %v3133
  %v3137 = vadd.f32 %v3118, %v3133
  %v3138 = vadd.f32 %v3119, %v3133
  %v3139 = vadd.f32 %v3120, %v3133
  %v3140 = vadd.f32 %v3121, %v3133
  %v3141 = vadd.f32 %v3122, %v3133
  %v3142 = vadd.f32 %v3123, %v3133
  %v3143 = vadd.f32 %v3124, %v3133
  %v3144 = vadd.f32 %v3125, %v3133
  %v3145 = vadd.f32 %v3126, %v3133
  %v3146 = vadd.f32 %v3127, %v3133
  %v3147 = vadd.f32 %v3128, %v3133
  %v3148 = vadd.f32 %v3129, %v3133
  %v3149 = vadd.f32 %v3130, %v3133
  %v3150 = vadd.f32 %v3131, %v3133
  %v3151 = vld [vmem:[%s10] sm:$0xff]
  %v3152 = vld [vmem:[%s10 + $0x8] sm:$0xff]
  %v3153 = vld [vmem:[%s10 + $0x10] sm:$0xff]
  %v3154 = vld [vmem:[%s10 + $0x18] sm:$0xff]
  %v3155 = vld [vmem:[%s11] sm:$0x1]
  %v3157 = vperm.slane %v3155, 0
  %v3160 = vsel %vm74, %v3135, 0
  %v3163 = vsel %vm74, %v3136, 0
  %v3166 = vsel %vm74, %v3137, 0
  %v3169 = vsel %vm74, %v3138, 0
  %v3172 = vsel %vm74, %v3139, 0
  %v3175 = vsel %vm74, %v3140, 0
  %v3178 = vsel %vm74, %v3141, 0
  %v3181 = vsel %vm74, %v3142, 0
  %v3184 = vsel %vm74, %v3143, 0
  %v3187 = vsel %vm74, %v3144, 0
  %v3190 = vsel %vm74, %v3145, 0
  %v3193 = vsel %vm74, %v3146, 0
  %v3196 = vsel %vm74, %v3147, 0
  %v3199 = vsel %vm74, %v3148, 0
  %v3202 = vsel %vm74, %v3149, 0
  %v3205 = vsel %vm74, %v3150, 0
  %3207 = vmatpush.msra.mxu0 0.0
  %3208 = vmatpush.msra.mxu0 0.0
  %3209 = vmatpush.msra.mxu0 0.0
  %3210 = vmatpush.msra.mxu0 0.0
  %3211 = vmatpush.msra.mxu0 0.0
  %3212 = vmatpush.msra.mxu0 0.0
  %3213 = vmatpush.msra.mxu0 0.0
  %3214 = vmatpush.msra.mxu0 0.0
  %3215 = vmatpush.msra.mxu0 0.0
  %3216 = vmatpush.msra.mxu0 0.0
  %3217 = vmatpush.msra.mxu0 0.0
  %3218 = vmatpush.msra.mxu0 0.0
  %3219 = vmatpush.msra.mxu0 %v3154
  %3220 = vmatpush.msra.mxu0 %v3153
  %3221 = vmatpush.msra.mxu0 %v3152
  %3222 = vmatpush.msra.mxu0 %v3151
  %3223 = vmatmul.f32.gmra.mxu0 %v3160
  %v3224 = vpop.f32.mrf.mxu0
  %v3225 = vadd.f32 %v3157, %v3224
  %3226 = vmatmul.f32.gmra.mxu0 %v3163
  %v3227 = vpop.f32.mrf.mxu0
  %v3228 = vadd.f32 %v3157, %v3227
  %3229 = vmatmul.f32.gmra.mxu0 %v3166
  %v3230 = vpop.f32.mrf.mxu0
  %v3231 = vadd.f32 %v3157, %v3230
  %3232 = vmatmul.f32.gmra.mxu0 %v3169
  %v3233 = vpop.f32.mrf.mxu0
  %v3234 = vadd.f32 %v3157, %v3233
  %3235 = vmatmul.f32.gmra.mxu0 %v3172
  %v3236 = vpop.f32.mrf.mxu0
  %v3237 = vadd.f32 %v3157, %v3236
  %3238 = vmatmul.f32.gmra.mxu0 %v3175
  %v3239 = vpop.f32.mrf.mxu0
  %v3240 = vadd.f32 %v3157, %v3239
  %3241 = vmatmul.f32.gmra.mxu0 %v3178
  %v3242 = vpop.f32.mrf.mxu0
  %v3243 = vadd.f32 %v3157, %v3242
  %3244 = vmatmul.f32.gmra.mxu0 %v3181
  %v3245 = vpop.f32.mrf.mxu0
  %v3246 = vadd.f32 %v3157, %v3245
  %3247 = vmatmul.f32.gmra.mxu0 %v3184
  %v3248 = vpop.f32.mrf.mxu0
  %v3249 = vadd.f32 %v3157, %v3248
  %3250 = vmatmul.f32.gmra.mxu0 %v3187
  %v3251 = vpop.f32.mrf.mxu0
  %v3252 = vadd.f32 %v3157, %v3251
  %3253 = vmatmul.f32.gmra.mxu0 %v3190
  %v3254 = vpop.f32.mrf.mxu0
  %v3255 = vadd.f32 %v3157, %v3254
  %3256 = vmatmul.f32.gmra.mxu0 %v3193
  %v3257 = vpop.f32.mrf.mxu0
  %v3258 = vadd.f32 %v3157, %v3257
  %3259 = vmatmul.f32.gmra.mxu0 %v3196
  %v3260 = vpop.f32.mrf.mxu0
  %v3261 = vadd.f32 %v3157, %v3260
  %3262 = vmatmul.f32.gmra.mxu0 %v3199
  %v3263 = vpop.f32.mrf.mxu0
  %v3264 = vadd.f32 %v3157, %v3263
  %3265 = vmatmul.f32.gmra.mxu0 %v3202
  %v3266 = vpop.f32.mrf.mxu0
  %v3267 = vadd.f32 %v3157, %v3266
  %3268 = vmatmul.f32.gmra.mxu0 %v3205
  %v3269 = vpop.f32.mrf.mxu0
  %v3270 = vadd.f32 %v3157, %v3269
  %3271 = vdwg.mxu0
  %v3272 = vld [vmem:[%s13 + $0x4] sm:$0x1]
  %v3273 = vperm.slane %v3272, 0
  %v3274 = vmul.f32 %v3225, %v3273
  %v3275 = vmul.f32 %v3228, %v3273
  %v3276 = vmul.f32 %v3231, %v3273
  %v3277 = vmul.f32 %v3234, %v3273
  %v3278 = vmul.f32 %v3237, %v3273
  %v3279 = vmul.f32 %v3240, %v3273
  %v3280 = vmul.f32 %v3243, %v3273
  %v3281 = vmul.f32 %v3246, %v3273
  %v3282 = vmul.f32 %v3249, %v3273
  %v3283 = vmul.f32 %v3252, %v3273
  %v3284 = vmul.f32 %v3255, %v3273
  %v3285 = vmul.f32 %v3258, %v3273
  %v3286 = vmul.f32 %v3261, %v3273
  %v3287 = vmul.f32 %v3264, %v3273
  %v3288 = vmul.f32 %v3267, %v3273
  %v3289 = vmul.f32 %v3270, %v3273
  %v3290 = vrot.slane %v3225, 7
  %v3291 = vrot.slane %v3228, 7
  %v3292 = vrot.slane %v3231, 7
  %v3293 = vrot.slane %v3234, 7
  %v3294 = vrot.slane %v3237, 7
  %v3295 = vrot.slane %v3240, 7
  %v3296 = vrot.slane %v3243, 7
  %v3297 = vrot.slane %v3246, 7
  %v3298 = vrot.slane %v3249, 7
  %v3299 = vrot.slane %v3252, 7
  %v3300 = vrot.slane %v3255, 7
  %v3301 = vrot.slane %v3258, 7
  %v3302 = vrot.slane %v3261, 7
  %v3303 = vrot.slane %v3264, 7
  %v3304 = vrot.slane %v3267, 7
  %v3305 = vrot.slane %v3270, 7
  %v3306 = vlaneseq
  %v3307 = vshrl.u32 %v3306, 7
  %vm3308 = vcmp.lt.s32.totalorder %v3307, 1
  %v3309 = vsel %vm3308, %v3304, %v3305
  %v3310 = vsel %vm3308, %v3303, %v3304
  %v3311 = vsel %vm3308, %v3302, %v3303
  %v3312 = vsel %vm3308, %v3301, %v3302
  %v3313 = vsel %vm3308, %v3300, %v3301
  %v3314 = vsel %vm3308, %v3299, %v3300
  %v3315 = vsel %vm3308, %v3298, %v3299
  %v3316 = vsel %vm3308, %v3297, %v3298
  %v3317 = vsel %vm3308, %v3296, %v3297
  %v3318 = vsel %vm3308, %v3295, %v3296
  %v3319 = vsel %vm3308, %v3294, %v3295
  %v3320 = vsel %vm3308, %v3293, %v3294
  %v3321 = vsel %vm3308, %v3292, %v3293
  %v3322 = vsel %vm3308, %v3291, %v3292
  %v3323 = vsel %vm3308, %v3290, %v3291
  %v3324 = vsel %vm3308, %v3305, %v3290
  %v3325 = vld [vmem:[%s12] sm:$0xff]
  %v3326 = vld [vmem:[%s12 + $0x8] sm:$0xff]
  %v3327 = vld [vmem:[%s12 + $0x10] sm:$0xff]
  %v3328 = vld [vmem:[%s12 + $0x18] sm:$0xff]
  %v3329 = vld [vmem:[%s12 + $0x20] sm:$0xff]
  %v3330 = vld [vmem:[%s12 + $0x28] sm:$0xff]
  %v3331 = vld [vmem:[%s12 + $0x30] sm:$0xff]
  %v3332 = vld [vmem:[%s12 + $0x38] sm:$0xff]
  %v3333 = vld [vmem:[%s12 + $0x40] sm:$0xff]
  %v3334 = vld [vmem:[%s12 + $0x48] sm:$0xff]
  %v3335 = vld [vmem:[%s12 + $0x50] sm:$0xff]
  %v3336 = vld [vmem:[%s12 + $0x58] sm:$0xff]
  %v3337 = vld [vmem:[%s12 + $0x60] sm:$0xff]
  %v3338 = vld [vmem:[%s12 + $0x68] sm:$0xff]
  %v3339 = vld [vmem:[%s12 + $0x70] sm:$0xff]
  %v3340 = vld [vmem:[%s12 + $0x78] sm:$0xff]
  %3342 = vset.pattern.permute.xlu0 0
  %3343 = vperm.xlu0 %3342, %v3325
  %v3344 = vpop.permute.xlu0 %3343
  %3347 = vset.pattern.permute.xlu0 0
  %3348 = vperm.xlu0 %3347, %v3326
  %v3349 = vpop.permute.xlu0 %3348
  %3352 = vset.pattern.permute.xlu0 0
  %3353 = vperm.xlu0 %3352, %v3327
  %v3354 = vpop.permute.xlu0 %3353
  %3357 = vset.pattern.permute.xlu0 0
  %3358 = vperm.xlu0 %3357, %v3328
  %v3359 = vpop.permute.xlu0 %3358
  %3362 = vset.pattern.permute.xlu0 0
  %3363 = vperm.xlu0 %3362, %v3329
  %v3364 = vpop.permute.xlu0 %3363
  %3367 = vset.pattern.permute.xlu0 0
  %3368 = vperm.xlu0 %3367, %v3330
  %v3369 = vpop.permute.xlu0 %3368
  %3372 = vset.pattern.permute.xlu0 0
  %3373 = vperm.xlu0 %3372, %v3331
  %v3374 = vpop.permute.xlu0 %3373
  %3377 = vset.pattern.permute.xlu0 0
  %3378 = vperm.xlu0 %3377, %v3332
  %v3379 = vpop.permute.xlu0 %3378
  %3382 = vset.pattern.permute.xlu0 0
  %3383 = vperm.xlu0 %3382, %v3333
  %v3384 = vpop.permute.xlu0 %3383
  %3387 = vset.pattern.permute.xlu0 0
  %3388 = vperm.xlu0 %3387, %v3334
  %v3389 = vpop.permute.xlu0 %3388
  %3392 = vset.pattern.permute.xlu0 0
  %3393 = vperm.xlu0 %3392, %v3335
  %v3394 = vpop.permute.xlu0 %3393
  %3397 = vset.pattern.permute.xlu0 0
  %3398 = vperm.xlu0 %3397, %v3336
  %v3399 = vpop.permute.xlu0 %3398
  %3402 = vset.pattern.permute.xlu0 0
  %3403 = vperm.xlu0 %3402, %v3337
  %v3404 = vpop.permute.xlu0 %3403
  %3407 = vset.pattern.permute.xlu0 0
  %3408 = vperm.xlu0 %3407, %v3338
  %v3409 = vpop.permute.xlu0 %3408
  %3412 = vset.pattern.permute.xlu0 0
  %3413 = vperm.xlu0 %3412, %v3339
  %v3414 = vpop.permute.xlu0 %3413
  %3417 = vset.pattern.permute.xlu0 0
  %3418 = vperm.xlu0 %3417, %v3340
  %v3419 = vpop.permute.xlu0 %3418
  %v3421 = vmul.f32 %v3309, %v3344
  %v3422 = vmul.f32 %v3324, %v3349
  %v3423 = vmul.f32 %v3323, %v3354
  %v3424 = vmul.f32 %v3322, %v3359
  %v3425 = vmul.f32 %v3321, %v3364
  %v3426 = vmul.f32 %v3320, %v3369
  %v3427 = vmul.f32 %v3319, %v3374
  %v3428 = vmul.f32 %v3318, %v3379
  %v3429 = vmul.f32 %v3317, %v3384
  %v3430 = vmul.f32 %v3316, %v3389
  %v3431 = vmul.f32 %v3315, %v3394
  %v3432 = vmul.f32 %v3314, %v3399
  %v3433 = vmul.f32 %v3313, %v3404
  %v3434 = vmul.f32 %v3312, %v3409
  %v3435 = vmul.f32 %v3311, %v3414
  %v3436 = vmul.f32 %v3310, %v3419
  %v3437 = vld [vmem:[%s13] sm:$0x1]
  %v3438 = vperm.slane %v3437, 0
  %v3439 = vmul.f32 %v3421, %v3438
  %v3440 = vmul.f32 %v3422, %v3438
  %v3441 = vmul.f32 %v3423, %v3438
  %v3442 = vmul.f32 %v3424, %v3438
  %v3443 = vmul.f32 %v3425, %v3438
  %v3444 = vmul.f32 %v3426, %v3438
  %v3445 = vmul.f32 %v3427, %v3438
  %v3446 = vmul.f32 %v3428, %v3438
  %v3447 = vmul.f32 %v3429, %v3438
  %v3448 = vmul.f32 %v3430, %v3438
  %v3449 = vmul.f32 %v3431, %v3438
  %v3450 = vmul.f32 %v3432, %v3438
  %v3451 = vmul.f32 %v3433, %v3438
  %v3452 = vmul.f32 %v3434, %v3438
  %v3453 = vmul.f32 %v3435, %v3438
  %v3454 = vmul.f32 %v3436, %v3438
  %v3455 = vadd.f32 %v3274, %v3439
  %v3456 = vadd.f32 %v3275, %v3440
  %v3457 = vadd.f32 %v3276, %v3441
  %v3458 = vadd.f32 %v3277, %v3442
  %v3459 = vadd.f32 %v3278, %v3443
  %v3460 = vadd.f32 %v3279, %v3444
  %v3461 = vadd.f32 %v3280, %v3445
  %v3462 = vadd.f32 %v3281, %v3446
  %v3463 = vadd.f32 %v3282, %v3447
  %v3464 = vadd.f32 %v3283, %v3448
  %v3465 = vadd.f32 %v3284, %v3449
  %v3466 = vadd.f32 %v3285, %v3450
  %v3467 = vadd.f32 %v3286, %v3451
  %v3468 = vadd.f32 %v3287, %v3452
  %v3469 = vadd.f32 %v3288, %v3453
  %v3470 = vadd.f32 %v3289, %v3454
  %3471 = vset.pattern.permute.xlu0 1
  %3472 = vperm.xlu0 %3471, %v3325
  %v3473 = vpop.permute.xlu0 %3472
  %3475 = vset.pattern.permute.xlu0 1
  %3476 = vperm.xlu0 %3475, %v3326
  %v3477 = vpop.permute.xlu0 %3476
  %3479 = vset.pattern.permute.xlu0 1
  %3480 = vperm.xlu0 %3479, %v3327
  %v3481 = vpop.permute.xlu0 %3480
  %3483 = vset.pattern.permute.xlu0 1
  %3484 = vperm.xlu0 %3483, %v3328
  %v3485 = vpop.permute.xlu0 %3484
  %3487 = vset.pattern.permute.xlu0 1
  %3488 = vperm.xlu0 %3487, %v3329
  %v3489 = vpop.permute.xlu0 %3488
  %3491 = vset.pattern.permute.xlu0 1
  %3492 = vperm.xlu0 %3491, %v3330
  %v3493 = vpop.permute.xlu0 %3492
  %3495 = vset.pattern.permute.xlu0 1
  %3496 = vperm.xlu0 %3495, %v3331
  %v3497 = vpop.permute.xlu0 %3496
  %3499 = vset.pattern.permute.xlu0 1
  %3500 = vperm.xlu0 %3499, %v3332
  %v3501 = vpop.permute.xlu0 %3500
  %3503 = vset.pattern.permute.xlu0 1
  %3504 = vperm.xlu0 %3503, %v3333
  %v3505 = vpop.permute.xlu0 %3504
  %3507 = vset.pattern.permute.xlu0 1
  %3508 = vperm.xlu0 %3507, %v3334
  %v3509 = vpop.permute.xlu0 %3508
  %3511 = vset.pattern.permute.xlu0 1
  %3512 = vperm.xlu0 %3511, %v3335
  %v3513 = vpop.permute.xlu0 %3512
  %3515 = vset.pattern.permute.xlu0 1
  %3516 = vperm.xlu0 %3515, %v3336
  %v3517 = vpop.permute.xlu0 %3516
  %3519 = vset.pattern.permute.xlu0 1
  %3520 = vperm.xlu0 %3519, %v3337
  %v3521 = vpop.permute.xlu0 %3520
  %3523 = vset.pattern.permute.xlu0 1
  %3524 = vperm.xlu0 %3523, %v3338
  %v3525 = vpop.permute.xlu0 %3524
  %3527 = vset.pattern.permute.xlu0 1
  %3528 = vperm.xlu0 %3527, %v3339
  %v3529 = vpop.permute.xlu0 %3528
  %3531 = vset.pattern.permute.xlu0 1
  %3532 = vperm.xlu0 %3531, %v3340
  %v3533 = vpop.permute.xlu0 %3532
  %v3535 = vmul.f32 %v3270, %v3473
  %v3536 = vmul.f32 %v3225, %v3477
  %v3537 = vmul.f32 %v3228, %v3481
  %v3538 = vmul.f32 %v3231, %v3485
  %v3539 = vmul.f32 %v3234, %v3489
  %v3540 = vmul.f32 %v3237, %v3493
  %v3541 = vmul.f32 %v3240, %v3497
  %v3542 = vmul.f32 %v3243, %v3501
  %v3543 = vmul.f32 %v3246, %v3505
  %v3544 = vmul.f32 %v3249, %v3509
  %v3545 = vmul.f32 %v3252, %v3513
  %v3546 = vmul.f32 %v3255, %v3517
  %v3547 = vmul.f32 %v3258, %v3521
  %v3548 = vmul.f32 %v3261, %v3525
  %v3549 = vmul.f32 %v3264, %v3529
  %v3550 = vmul.f32 %v3267, %v3533
  %v3551 = vld [vmem:[%s13 + $0x1] sm:$0x1]
  %v3552 = vperm.slane %v3551, 0
  %v3553 = vmul.f32 %v3535, %v3552
  %v3554 = vmul.f32 %v3536, %v3552
  %v3555 = vmul.f32 %v3537, %v3552
  %v3556 = vmul.f32 %v3538, %v3552
  %v3557 = vmul.f32 %v3539, %v3552
  %v3558 = vmul.f32 %v3540, %v3552
  %v3559 = vmul.f32 %v3541, %v3552
  %v3560 = vmul.f32 %v3542, %v3552
  %v3561 = vmul.f32 %v3543, %v3552
  %v3562 = vmul.f32 %v3544, %v3552
  %v3563 = vmul.f32 %v3545, %v3552
  %v3564 = vmul.f32 %v3546, %v3552
  %v3565 = vmul.f32 %v3547, %v3552
  %v3566 = vmul.f32 %v3548, %v3552
  %v3567 = vmul.f32 %v3549, %v3552
  %v3568 = vmul.f32 %v3550, %v3552
  %v3569 = vadd.f32 %v3455, %v3553
  %v3570 = vadd.f32 %v3456, %v3554
  %v3571 = vadd.f32 %v3457, %v3555
  %v3572 = vadd.f32 %v3458, %v3556
  %v3573 = vadd.f32 %v3459, %v3557
  %v3574 = vadd.f32 %v3460, %v3558
  %v3575 = vadd.f32 %v3461, %v3559
  %v3576 = vadd.f32 %v3462, %v3560
  %v3577 = vadd.f32 %v3463, %v3561
  %v3578 = vadd.f32 %v3464, %v3562
  %v3579 = vadd.f32 %v3465, %v3563
  %v3580 = vadd.f32 %v3466, %v3564
  %v3581 = vadd.f32 %v3467, %v3565
  %v3582 = vadd.f32 %v3468, %v3566
  %v3583 = vadd.f32 %v3469, %v3567
  %v3584 = vadd.f32 %v3470, %v3568
  %v3585 = vrot.slane %v3225, 1
  %v3586 = vrot.slane %v3228, 1
  %v3587 = vrot.slane %v3231, 1
  %v3588 = vrot.slane %v3234, 1
  %v3589 = vrot.slane %v3237, 1
  %v3590 = vrot.slane %v3240, 1
  %v3591 = vrot.slane %v3243, 1
  %v3592 = vrot.slane %v3246, 1
  %v3593 = vrot.slane %v3249, 1
  %v3594 = vrot.slane %v3252, 1
  %v3595 = vrot.slane %v3255, 1
  %v3596 = vrot.slane %v3258, 1
  %v3597 = vrot.slane %v3261, 1
  %v3598 = vrot.slane %v3264, 1
  %v3599 = vrot.slane %v3267, 1
  %v3600 = vrot.slane %v3270, 1
  %vm3601 = vcmp.lt.s32.totalorder %v3307, 7
  %v3602 = vsel %vm3601, %v3599, %v3600
  %v3603 = vsel %vm3601, %v3598, %v3599
  %v3604 = vsel %vm3601, %v3597, %v3598
  %v3605 = vsel %vm3601, %v3596, %v3597
  %v3606 = vsel %vm3601, %v3595, %v3596
  %v3607 = vsel %vm3601, %v3594, %v3595
  %v3608 = vsel %vm3601, %v3593, %v3594
  %v3609 = vsel %vm3601, %v3592, %v3593
  %v3610 = vsel %vm3601, %v3591, %v3592
  %v3611 = vsel %vm3601, %v3590, %v3591
  %v3612 = vsel %vm3601, %v3589, %v3590
  %v3613 = vsel %vm3601, %v3588, %v3589
  %v3614 = vsel %vm3601, %v3587, %v3588
  %v3615 = vsel %vm3601, %v3586, %v3587
  %v3616 = vsel %vm3601, %v3585, %v3586
  %v3617 = vsel %vm3601, %v3600, %v3585
  %3618 = vset.pattern.permute.xlu0 2
  %3619 = vperm.xlu0 %3618, %v3325
  %v3620 = vpop.permute.xlu0 %3619
  %3622 = vset.pattern.permute.xlu0 2
  %3623 = vperm.xlu0 %3622, %v3326
  %v3624 = vpop.permute.xlu0 %3623
  %3626 = vset.pattern.permute.xlu0 2
  %3627 = vperm.xlu0 %3626, %v3327
  %v3628 = vpop.permute.xlu0 %3627
  %3630 = vset.pattern.permute.xlu0 2
  %3631 = vperm.xlu0 %3630, %v3328
  %v3632 = vpop.permute.xlu0 %3631
  %3634 = vset.pattern.permute.xlu0 2
  %3635 = vperm.xlu0 %3634, %v3329
  %v3636 = vpop.permute.xlu0 %3635
  %3638 = vset.pattern.permute.xlu0 2
  %3639 = vperm.xlu0 %3638, %v3330
  %v3640 = vpop.permute.xlu0 %3639
  %3642 = vset.pattern.permute.xlu0 2
  %3643 = vperm.xlu0 %3642, %v3331
  %v3644 = vpop.permute.xlu0 %3643
  %3646 = vset.pattern.permute.xlu0 2
  %3647 = vperm.xlu0 %3646, %v3332
  %v3648 = vpop.permute.xlu0 %3647
  %3650 = vset.pattern.permute.xlu0 2
  %3651 = vperm.xlu0 %3650, %v3333
  %v3652 = vpop.permute.xlu0 %3651
  %3654 = vset.pattern.permute.xlu0 2
  %3655 = vperm.xlu0 %3654, %v3334
  %v3656 = vpop.permute.xlu0 %3655
  %3658 = vset.pattern.permute.xlu0 2
  %3659 = vperm.xlu0 %3658, %v3335
  %v3660 = vpop.permute.xlu0 %3659
  %3662 = vset.pattern.permute.xlu0 2
  %3663 = vperm.xlu0 %3662, %v3336
  %v3664 = vpop.permute.xlu0 %3663
  %3666 = vset.pattern.permute.xlu0 2
  %3667 = vperm.xlu0 %3666, %v3337
  %v3668 = vpop.permute.xlu0 %3667
  %3670 = vset.pattern.permute.xlu0 2
  %3671 = vperm.xlu0 %3670, %v3338
  %v3672 = vpop.permute.xlu0 %3671
  %3674 = vset.pattern.permute.xlu0 2
  %3675 = vperm.xlu0 %3674, %v3339
  %v3676 = vpop.permute.xlu0 %3675
  %3678 = vset.pattern.permute.xlu0 2
  %3679 = vperm.xlu0 %3678, %v3340
  %v3680 = vpop.permute.xlu0 %3679
  %v3682 = vmul.f32 %v3617, %v3620
  %v3683 = vmul.f32 %v3616, %v3624
  %v3684 = vmul.f32 %v3615, %v3628
  %v3685 = vmul.f32 %v3614, %v3632
  %v3686 = vmul.f32 %v3613, %v3636
  %v3687 = vmul.f32 %v3612, %v3640
  %v3688 = vmul.f32 %v3611, %v3644
  %v3689 = vmul.f32 %v3610, %v3648
  %v3690 = vmul.f32 %v3609, %v3652
  %v3691 = vmul.f32 %v3608, %v3656
  %v3692 = vmul.f32 %v3607, %v3660
  %v3693 = vmul.f32 %v3606, %v3664
  %v3694 = vmul.f32 %v3605, %v3668
  %v3695 = vmul.f32 %v3604, %v3672
  %v3696 = vmul.f32 %v3603, %v3676
  %v3697 = vmul.f32 %v3602, %v3680
  %v3698 = vld [vmem:[%s13 + $0x2] sm:$0x1]
  %v3699 = vperm.slane %v3698, 0
  %v3700 = vmul.f32 %v3682, %v3699
  %v3701 = vmul.f32 %v3683, %v3699
  %v3702 = vmul.f32 %v3684, %v3699
  %v3703 = vmul.f32 %v3685, %v3699
  %v3704 = vmul.f32 %v3686, %v3699
  %v3705 = vmul.f32 %v3687, %v3699
  %v3706 = vmul.f32 %v3688, %v3699
  %v3707 = vmul.f32 %v3689, %v3699
  %v3708 = vmul.f32 %v3690, %v3699
  %v3709 = vmul.f32 %v3691, %v3699
  %v3710 = vmul.f32 %v3692, %v3699
  %v3711 = vmul.f32 %v3693, %v3699
  %v3712 = vmul.f32 %v3694, %v3699
  %v3713 = vmul.f32 %v3695, %v3699
  %v3714 = vmul.f32 %v3696, %v3699
  %v3715 = vmul.f32 %v3697, %v3699
  %v3716 = vadd.f32 %v3569, %v3700
  %v3717 = vadd.f32 %v3570, %v3701
  %v3718 = vadd.f32 %v3571, %v3702
  %v3719 = vadd.f32 %v3572, %v3703
  %v3720 = vadd.f32 %v3573, %v3704
  %v3721 = vadd.f32 %v3574, %v3705
  %v3722 = vadd.f32 %v3575, %v3706
  %v3723 = vadd.f32 %v3576, %v3707
  %v3724 = vadd.f32 %v3577, %v3708
  %v3725 = vadd.f32 %v3578, %v3709
  %v3726 = vadd.f32 %v3579, %v3710
  %v3727 = vadd.f32 %v3580, %v3711
  %v3728 = vadd.f32 %v3581, %v3712
  %v3729 = vadd.f32 %v3582, %v3713
  %v3730 = vadd.f32 %v3583, %v3714
  %v3731 = vadd.f32 %v3584, %v3715
  %3732 = vset.pattern.permute.xlu0 3
  %3733 = vperm.xlu0 %3732, %v3325
  %v3734 = vpop.permute.xlu0 %3733
  %3736 = vset.pattern.permute.xlu0 3
  %3737 = vperm.xlu0 %3736, %v3326
  %v3738 = vpop.permute.xlu0 %3737
  %3740 = vset.pattern.permute.xlu0 3
  %3741 = vperm.xlu0 %3740, %v3327
  %v3742 = vpop.permute.xlu0 %3741
  %3744 = vset.pattern.permute.xlu0 3
  %3745 = vperm.xlu0 %3744, %v3328
  %v3746 = vpop.permute.xlu0 %3745
  %3748 = vset.pattern.permute.xlu0 3
  %3749 = vperm.xlu0 %3748, %v3329
  %v3750 = vpop.permute.xlu0 %3749
  %3752 = vset.pattern.permute.xlu0 3
  %3753 = vperm.xlu0 %3752, %v3330
  %v3754 = vpop.permute.xlu0 %3753
  %3756 = vset.pattern.permute.xlu0 3
  %3757 = vperm.xlu0 %3756, %v3331
  %v3758 = vpop.permute.xlu0 %3757
  %3760 = vset.pattern.permute.xlu0 3
  %3761 = vperm.xlu0 %3760, %v3332
  %v3762 = vpop.permute.xlu0 %3761
  %3764 = vset.pattern.permute.xlu0 3
  %3765 = vperm.xlu0 %3764, %v3333
  %v3766 = vpop.permute.xlu0 %3765
  %3768 = vset.pattern.permute.xlu0 3
  %3769 = vperm.xlu0 %3768, %v3334
  %v3770 = vpop.permute.xlu0 %3769
  %3772 = vset.pattern.permute.xlu0 3
  %3773 = vperm.xlu0 %3772, %v3335
  %v3774 = vpop.permute.xlu0 %3773
  %3776 = vset.pattern.permute.xlu0 3
  %3777 = vperm.xlu0 %3776, %v3336
  %v3778 = vpop.permute.xlu0 %3777
  %3780 = vset.pattern.permute.xlu0 3
  %3781 = vperm.xlu0 %3780, %v3337
  %v3782 = vpop.permute.xlu0 %3781
  %3784 = vset.pattern.permute.xlu0 3
  %3785 = vperm.xlu0 %3784, %v3338
  %v3786 = vpop.permute.xlu0 %3785
  %3788 = vset.pattern.permute.xlu0 3
  %3789 = vperm.xlu0 %3788, %v3339
  %v3790 = vpop.permute.xlu0 %3789
  %3792 = vset.pattern.permute.xlu0 3
  %3793 = vperm.xlu0 %3792, %v3340
  %v3794 = vpop.permute.xlu0 %3793
  %v3796 = vmul.f32 %v3324, %v3734
  %v3797 = vmul.f32 %v3323, %v3738
  %v3798 = vmul.f32 %v3322, %v3742
  %v3799 = vmul.f32 %v3321, %v3746
  %v3800 = vmul.f32 %v3320, %v3750
  %v3801 = vmul.f32 %v3319, %v3754
  %v3802 = vmul.f32 %v3318, %v3758
  %v3803 = vmul.f32 %v3317, %v3762
  %v3804 = vmul.f32 %v3316, %v3766
  %v3805 = vmul.f32 %v3315, %v3770
  %v3806 = vmul.f32 %v3314, %v3774
  %v3807 = vmul.f32 %v3313, %v3778
  %v3808 = vmul.f32 %v3312, %v3782
  %v3809 = vmul.f32 %v3311, %v3786
  %v3810 = vmul.f32 %v3310, %v3790
  %v3811 = vmul.f32 %v3309, %v3794
  %v3812 = vld [vmem:[%s13 + $0x3] sm:$0x1]
  %v3813 = vperm.slane %v3812, 0
  %v3814 = vmul.f32 %v3796, %v3813
  %v3815 = vmul.f32 %v3797, %v3813
  %v3816 = vmul.f32 %v3798, %v3813
  %v3817 = vmul.f32 %v3799, %v3813
  %v3818 = vmul.f32 %v3800, %v3813
  %v3819 = vmul.f32 %v3801, %v3813
  %v3820 = vmul.f32 %v3802, %v3813
  %v3821 = vmul.f32 %v3803, %v3813
  %v3822 = vmul.f32 %v3804, %v3813
  %v3823 = vmul.f32 %v3805, %v3813
  %v3824 = vmul.f32 %v3806, %v3813
  %v3825 = vmul.f32 %v3807, %v3813
  %v3826 = vmul.f32 %v3808, %v3813
  %v3827 = vmul.f32 %v3809, %v3813
  %v3828 = vmul.f32 %v3810, %v3813
  %v3829 = vmul.f32 %v3811, %v3813
  %v3830 = vadd.f32 %v3716, %v3814
  %v3831 = vadd.f32 %v3717, %v3815
  %v3832 = vadd.f32 %v3718, %v3816
  %v3833 = vadd.f32 %v3719, %v3817
  %v3834 = vadd.f32 %v3720, %v3818
  %v3835 = vadd.f32 %v3721, %v3819
  %v3836 = vadd.f32 %v3722, %v3820
  %v3837 = vadd.f32 %v3723, %v3821
  %v3838 = vadd.f32 %v3724, %v3822
  %v3839 = vadd.f32 %v3725, %v3823
  %v3840 = vadd.f32 %v3726, %v3824
  %v3841 = vadd.f32 %v3727, %v3825
  %v3842 = vadd.f32 %v3728, %v3826
  %v3843 = vadd.f32 %v3729, %v3827
  %v3844 = vadd.f32 %v3730, %v3828
  %v3845 = vadd.f32 %v3731, %v3829
  %3846 = vset.pattern.permute.xlu0 5
  %3847 = vperm.xlu0 %3846, %v3325
  %v3848 = vpop.permute.xlu0 %3847
  %3850 = vset.pattern.permute.xlu0 5
  %3851 = vperm.xlu0 %3850, %v3326
  %v3852 = vpop.permute.xlu0 %3851
  %3854 = vset.pattern.permute.xlu0 5
  %3855 = vperm.xlu0 %3854, %v3327
  %v3856 = vpop.permute.xlu0 %3855
  %3858 = vset.pattern.permute.xlu0 5
  %3859 = vperm.xlu0 %3858, %v3328
  %v3860 = vpop.permute.xlu0 %3859
  %3862 = vset.pattern.permute.xlu0 5
  %3863 = vperm.xlu0 %3862, %v3329
  %v3864 = vpop.permute.xlu0 %3863
  %3866 = vset.pattern.permute.xlu0 5
  %3867 = vperm.xlu0 %3866, %v3330
  %v3868 = vpop.permute.xlu0 %3867
  %3870 = vset.pattern.permute.xlu0 5
  %3871 = vperm.xlu0 %3870, %v3331
  %v3872 = vpop.permute.xlu0 %3871
  %3874 = vset.pattern.permute.xlu0 5
  %3875 = vperm.xlu0 %3874, %v3332
  %v3876 = vpop.permute.xlu0 %3875
  %3878 = vset.pattern.permute.xlu0 5
  %3879 = vperm.xlu0 %3878, %v3333
  %v3880 = vpop.permute.xlu0 %3879
  %3882 = vset.pattern.permute.xlu0 5
  %3883 = vperm.xlu0 %3882, %v3334
  %v3884 = vpop.permute.xlu0 %3883
  %3886 = vset.pattern.permute.xlu0 5
  %3887 = vperm.xlu0 %3886, %v3335
  %v3888 = vpop.permute.xlu0 %3887
  %3890 = vset.pattern.permute.xlu0 5
  %3891 = vperm.xlu0 %3890, %v3336
  %v3892 = vpop.permute.xlu0 %3891
  %3894 = vset.pattern.permute.xlu0 5
  %3895 = vperm.xlu0 %3894, %v3337
  %v3896 = vpop.permute.xlu0 %3895
  %3898 = vset.pattern.permute.xlu0 5
  %3899 = vperm.xlu0 %3898, %v3338
  %v3900 = vpop.permute.xlu0 %3899
  %3902 = vset.pattern.permute.xlu0 5
  %3903 = vperm.xlu0 %3902, %v3339
  %v3904 = vpop.permute.xlu0 %3903
  %3906 = vset.pattern.permute.xlu0 5
  %3907 = vperm.xlu0 %3906, %v3340
  %v3908 = vpop.permute.xlu0 %3907
  %v3910 = vmul.f32 %v3616, %v3848
  %v3911 = vmul.f32 %v3615, %v3852
  %v3912 = vmul.f32 %v3614, %v3856
  %v3913 = vmul.f32 %v3613, %v3860
  %v3914 = vmul.f32 %v3612, %v3864
  %v3915 = vmul.f32 %v3611, %v3868
  %v3916 = vmul.f32 %v3610, %v3872
  %v3917 = vmul.f32 %v3609, %v3876
  %v3918 = vmul.f32 %v3608, %v3880
  %v3919 = vmul.f32 %v3607, %v3884
  %v3920 = vmul.f32 %v3606, %v3888
  %v3921 = vmul.f32 %v3605, %v3892
  %v3922 = vmul.f32 %v3604, %v3896
  %v3923 = vmul.f32 %v3603, %v3900
  %v3924 = vmul.f32 %v3602, %v3904
  %v3925 = vmul.f32 %v3617, %v3908
  %v3926 = vld [vmem:[%s13 + $0x5] sm:$0x1]
  %v3927 = vperm.slane %v3926, 0
  %v3928 = vmul.f32 %v3910, %v3927
  %v3929 = vmul.f32 %v3911, %v3927
  %v3930 = vmul.f32 %v3912, %v3927
  %v3931 = vmul.f32 %v3913, %v3927
  %v3932 = vmul.f32 %v3914, %v3927
  %v3933 = vmul.f32 %v3915, %v3927
  %v3934 = vmul.f32 %v3916, %v3927
  %v3935 = vmul.f32 %v3917, %v3927
  %v3936 = vmul.f32 %v3918, %v3927
  %v3937 = vmul.f32 %v3919, %v3927
  %v3938 = vmul.f32 %v3920, %v3927
  %v3939 = vmul.f32 %v3921, %v3927
  %v3940 = vmul.f32 %v3922, %v3927
  %v3941 = vmul.f32 %v3923, %v3927
  %v3942 = vmul.f32 %v3924, %v3927
  %v3943 = vmul.f32 %v3925, %v3927
  %v3944 = vadd.f32 %v3830, %v3928
  %v3945 = vadd.f32 %v3831, %v3929
  %v3946 = vadd.f32 %v3832, %v3930
  %v3947 = vadd.f32 %v3833, %v3931
  %v3948 = vadd.f32 %v3834, %v3932
  %v3949 = vadd.f32 %v3835, %v3933
  %v3950 = vadd.f32 %v3836, %v3934
  %v3951 = vadd.f32 %v3837, %v3935
  %v3952 = vadd.f32 %v3838, %v3936
  %v3953 = vadd.f32 %v3839, %v3937
  %v3954 = vadd.f32 %v3840, %v3938
  %v3955 = vadd.f32 %v3841, %v3939
  %v3956 = vadd.f32 %v3842, %v3940
  %v3957 = vadd.f32 %v3843, %v3941
  %v3958 = vadd.f32 %v3844, %v3942
  %v3959 = vadd.f32 %v3845, %v3943
  %3960 = vset.pattern.permute.xlu0 6
  %3961 = vperm.xlu0 %3960, %v3325
  %v3962 = vpop.permute.xlu0 %3961
  %3964 = vset.pattern.permute.xlu0 6
  %3965 = vperm.xlu0 %3964, %v3326
  %v3966 = vpop.permute.xlu0 %3965
  %3968 = vset.pattern.permute.xlu0 6
  %3969 = vperm.xlu0 %3968, %v3327
  %v3970 = vpop.permute.xlu0 %3969
  %3972 = vset.pattern.permute.xlu0 6
  %3973 = vperm.xlu0 %3972, %v3328
  %v3974 = vpop.permute.xlu0 %3973
  %3976 = vset.pattern.permute.xlu0 6
  %3977 = vperm.xlu0 %3976, %v3329
  %v3978 = vpop.permute.xlu0 %3977
  %3980 = vset.pattern.permute.xlu0 6
  %3981 = vperm.xlu0 %3980, %v3330
  %v3982 = vpop.permute.xlu0 %3981
  %3984 = vset.pattern.permute.xlu0 6
  %3985 = vperm.xlu0 %3984, %v3331
  %v3986 = vpop.permute.xlu0 %3985
  %3988 = vset.pattern.permute.xlu0 6
  %3989 = vperm.xlu0 %3988, %v3332
  %v3990 = vpop.permute.xlu0 %3989
  %3992 = vset.pattern.permute.xlu0 6
  %3993 = vperm.xlu0 %3992, %v3333
  %v3994 = vpop.permute.xlu0 %3993
  %3996 = vset.pattern.permute.xlu0 6
  %3997 = vperm.xlu0 %3996, %v3334
  %v3998 = vpop.permute.xlu0 %3997
  %4000 = vset.pattern.permute.xlu0 6
  %4001 = vperm.xlu0 %4000, %v3335
  %v4002 = vpop.permute.xlu0 %4001
  %4004 = vset.pattern.permute.xlu0 6
  %4005 = vperm.xlu0 %4004, %v3336
  %v4006 = vpop.permute.xlu0 %4005
  %4008 = vset.pattern.permute.xlu0 6
  %4009 = vperm.xlu0 %4008, %v3337
  %v4010 = vpop.permute.xlu0 %4009
  %4012 = vset.pattern.permute.xlu0 6
  %4013 = vperm.xlu0 %4012, %v3338
  %v4014 = vpop.permute.xlu0 %4013
  %4016 = vset.pattern.permute.xlu0 6
  %4017 = vperm.xlu0 %4016, %v3339
  %v4018 = vpop.permute.xlu0 %4017
  %4020 = vset.pattern.permute.xlu0 6
  %4021 = vperm.xlu0 %4020, %v3340
  %v4022 = vpop.permute.xlu0 %4021
  %v4024 = vmul.f32 %v3323, %v3962
  %v4025 = vmul.f32 %v3322, %v3966
  %v4026 = vmul.f32 %v3321, %v3970
  %v4027 = vmul.f32 %v3320, %v3974
  %v4028 = vmul.f32 %v3319, %v3978
  %v4029 = vmul.f32 %v3318, %v3982
  %v4030 = vmul.f32 %v3317, %v3986
  %v4031 = vmul.f32 %v3316, %v3990
  %v4032 = vmul.f32 %v3315, %v3994
  %v4033 = vmul.f32 %v3314, %v3998
  %v4034 = vmul.f32 %v3313, %v4002
  %v4035 = vmul.f32 %v3312, %v4006
  %v4036 = vmul.f32 %v3311, %v4010
  %v4037 = vmul.f32 %v3310, %v4014
  %v4038 = vmul.f32 %v3309, %v4018
  %v4039 = vmul.f32 %v3324, %v4022
  %v4040 = vld [vmem:[%s13 + $0x6] sm:$0x1]
  %v4041 = vperm.slane %v4040, 0
  %v4042 = vmul.f32 %v4024, %v4041
  %v4043 = vmul.f32 %v4025, %v4041
  %v4044 = vmul.f32 %v4026, %v4041
  %v4045 = vmul.f32 %v4027, %v4041
  %v4046 = vmul.f32 %v4028, %v4041
  %v4047 = vmul.f32 %v4029, %v4041
  %v4048 = vmul.f32 %v4030, %v4041
  %v4049 = vmul.f32 %v4031, %v4041
  %v4050 = vmul.f32 %v4032, %v4041
  %v4051 = vmul.f32 %v4033, %v4041
  %v4052 = vmul.f32 %v4034, %v4041
  %v4053 = vmul.f32 %v4035, %v4041
  %v4054 = vmul.f32 %v4036, %v4041
  %v4055 = vmul.f32 %v4037, %v4041
  %v4056 = vmul.f32 %v4038, %v4041
  %v4057 = vmul.f32 %v4039, %v4041
  %v4058 = vadd.f32 %v3944, %v4042
  %v4059 = vadd.f32 %v3945, %v4043
  %v4060 = vadd.f32 %v3946, %v4044
  %v4061 = vadd.f32 %v3947, %v4045
  %v4062 = vadd.f32 %v3948, %v4046
  %v4063 = vadd.f32 %v3949, %v4047
  %v4064 = vadd.f32 %v3950, %v4048
  %v4065 = vadd.f32 %v3951, %v4049
  %v4066 = vadd.f32 %v3952, %v4050
  %v4067 = vadd.f32 %v3953, %v4051
  %v4068 = vadd.f32 %v3954, %v4052
  %v4069 = vadd.f32 %v3955, %v4053
  %v4070 = vadd.f32 %v3956, %v4054
  %v4071 = vadd.f32 %v3957, %v4055
  %v4072 = vadd.f32 %v3958, %v4056
  %v4073 = vadd.f32 %v3959, %v4057
  %4074 = vset.pattern.permute.xlu0 7
  %4075 = vperm.xlu0 %4074, %v3325
  %v4076 = vpop.permute.xlu0 %4075
  %4078 = vset.pattern.permute.xlu0 7
  %4079 = vperm.xlu0 %4078, %v3326
  %v4080 = vpop.permute.xlu0 %4079
  %4082 = vset.pattern.permute.xlu0 7
  %4083 = vperm.xlu0 %4082, %v3327
  %v4084 = vpop.permute.xlu0 %4083
  %4086 = vset.pattern.permute.xlu0 7
  %4087 = vperm.xlu0 %4086, %v3328
  %v4088 = vpop.permute.xlu0 %4087
  %4090 = vset.pattern.permute.xlu0 7
  %4091 = vperm.xlu0 %4090, %v3329
  %v4092 = vpop.permute.xlu0 %4091
  %4094 = vset.pattern.permute.xlu0 7
  %4095 = vperm.xlu0 %4094, %v3330
  %v4096 = vpop.permute.xlu0 %4095
  %4098 = vset.pattern.permute.xlu0 7
  %4099 = vperm.xlu0 %4098, %v3331
  %v4100 = vpop.permute.xlu0 %4099
  %4102 = vset.pattern.permute.xlu0 7
  %4103 = vperm.xlu0 %4102, %v3332
  %v4104 = vpop.permute.xlu0 %4103
  %4106 = vset.pattern.permute.xlu0 7
  %4107 = vperm.xlu0 %4106, %v3333
  %v4108 = vpop.permute.xlu0 %4107
  %4110 = vset.pattern.permute.xlu0 7
  %4111 = vperm.xlu0 %4110, %v3334
  %v4112 = vpop.permute.xlu0 %4111
  %4114 = vset.pattern.permute.xlu0 7
  %4115 = vperm.xlu0 %4114, %v3335
  %v4116 = vpop.permute.xlu0 %4115
  %4118 = vset.pattern.permute.xlu0 7
  %4119 = vperm.xlu0 %4118, %v3336
  %v4120 = vpop.permute.xlu0 %4119
  %4122 = vset.pattern.permute.xlu0 7
  %4123 = vperm.xlu0 %4122, %v3337
  %v4124 = vpop.permute.xlu0 %4123
  %4126 = vset.pattern.permute.xlu0 7
  %4127 = vperm.xlu0 %4126, %v3338
  %v4128 = vpop.permute.xlu0 %4127
  %4130 = vset.pattern.permute.xlu0 7
  %4131 = vperm.xlu0 %4130, %v3339
  %v4132 = vpop.permute.xlu0 %4131
  %4134 = vset.pattern.permute.xlu0 7
  %4135 = vperm.xlu0 %4134, %v3340
  %v4136 = vpop.permute.xlu0 %4135
  %v4138 = vmul.f32 %v3228, %v4076
  %v4139 = vmul.f32 %v3231, %v4080
  %v4140 = vmul.f32 %v3234, %v4084
  %v4141 = vmul.f32 %v3237, %v4088
  %v4142 = vmul.f32 %v3240, %v4092
  %v4143 = vmul.f32 %v3243, %v4096
  %v4144 = vmul.f32 %v3246, %v4100
  %v4145 = vmul.f32 %v3249, %v4104
  %v4146 = vmul.f32 %v3252, %v4108
  %v4147 = vmul.f32 %v3255, %v4112
  %v4148 = vmul.f32 %v3258, %v4116
  %v4149 = vmul.f32 %v3261, %v4120
  %v4150 = vmul.f32 %v3264, %v4124
  %v4151 = vmul.f32 %v3267, %v4128
  %v4152 = vmul.f32 %v3270, %v4132
  %v4153 = vmul.f32 %v3225, %v4136
  %v4154 = vld [vmem:[%s13 + $0x7] sm:$0x1]
  %v4155 = vperm.slane %v4154, 0
  %v4156 = vmul.f32 %v4138, %v4155
  %v4157 = vmul.f32 %v4139, %v4155
  %v4158 = vmul.f32 %v4140, %v4155
  %v4159 = vmul.f32 %v4141, %v4155
  %v4160 = vmul.f32 %v4142, %v4155
  %v4161 = vmul.f32 %v4143, %v4155
  %v4162 = vmul.f32 %v4144, %v4155
  %v4163 = vmul.f32 %v4145, %v4155
  %v4164 = vmul.f32 %v4146, %v4155
  %v4165 = vmul.f32 %v4147, %v4155
  %v4166 = vmul.f32 %v4148, %v4155
  %v4167 = vmul.f32 %v4149, %v4155
  %v4168 = vmul.f32 %v4150, %v4155
  %v4169 = vmul.f32 %v4151, %v4155
  %v4170 = vmul.f32 %v4152, %v4155
  %v4171 = vmul.f32 %v4153, %v4155
  %v4172 = vadd.f32 %v4058, %v4156
  %v4173 = vadd.f32 %v4059, %v4157
  %v4174 = vadd.f32 %v4060, %v4158
  %v4175 = vadd.f32 %v4061, %v4159
  %v4176 = vadd.f32 %v4062, %v4160
  %v4177 = vadd.f32 %v4063, %v4161
  %v4178 = vadd.f32 %v4064, %v4162
  %v4179 = vadd.f32 %v4065, %v4163
  %v4180 = vadd.f32 %v4066, %v4164
  %v4181 = vadd.f32 %v4067, %v4165
  %v4182 = vadd.f32 %v4068, %v4166
  %v4183 = vadd.f32 %v4069, %v4167
  %v4184 = vadd.f32 %v4070, %v4168
  %v4185 = vadd.f32 %v4071, %v4169
  %v4186 = vadd.f32 %v4072, %v4170
  %v4187 = vadd.f32 %v4073, %v4171
  %4188 = vset.pattern.permute.xlu0 8
  %4189 = vperm.xlu0 %4188, %v3325
  %v4190 = vpop.permute.xlu0 %4189
  %4192 = vset.pattern.permute.xlu0 8
  %4193 = vperm.xlu0 %4192, %v3326
  %v4194 = vpop.permute.xlu0 %4193
  %4196 = vset.pattern.permute.xlu0 8
  %4197 = vperm.xlu0 %4196, %v3327
  %v4198 = vpop.permute.xlu0 %4197
  %4200 = vset.pattern.permute.xlu0 8
  %4201 = vperm.xlu0 %4200, %v3328
  %v4202 = vpop.permute.xlu0 %4201
  %4204 = vset.pattern.permute.xlu0 8
  %4205 = vperm.xlu0 %4204, %v3329
  %v4206 = vpop.permute.xlu0 %4205
  %4208 = vset.pattern.permute.xlu0 8
  %4209 = vperm.xlu0 %4208, %v3330
  %v4210 = vpop.permute.xlu0 %4209
  %4212 = vset.pattern.permute.xlu0 8
  %4213 = vperm.xlu0 %4212, %v3331
  %v4214 = vpop.permute.xlu0 %4213
  %4216 = vset.pattern.permute.xlu0 8
  %4217 = vperm.xlu0 %4216, %v3332
  %v4218 = vpop.permute.xlu0 %4217
  %4220 = vset.pattern.permute.xlu0 8
  %4221 = vperm.xlu0 %4220, %v3333
  %v4222 = vpop.permute.xlu0 %4221
  %4224 = vset.pattern.permute.xlu0 8
  %4225 = vperm.xlu0 %4224, %v3334
  %v4226 = vpop.permute.xlu0 %4225
  %4228 = vset.pattern.permute.xlu0 8
  %4229 = vperm.xlu0 %4228, %v3335
  %v4230 = vpop.permute.xlu0 %4229
  %4232 = vset.pattern.permute.xlu0 8
  %4233 = vperm.xlu0 %4232, %v3336
  %v4234 = vpop.permute.xlu0 %4233
  %4236 = vset.pattern.permute.xlu0 8
  %4237 = vperm.xlu0 %4236, %v3337
  %v4238 = vpop.permute.xlu0 %4237
  %4240 = vset.pattern.permute.xlu0 8
  %4241 = vperm.xlu0 %4240, %v3338
  %v4242 = vpop.permute.xlu0 %4241
  %4244 = vset.pattern.permute.xlu0 8
  %4245 = vperm.xlu0 %4244, %v3339
  %v4246 = vpop.permute.xlu0 %4245
  %4248 = vset.pattern.permute.xlu0 8
  %4249 = vperm.xlu0 %4248, %v3340
  %v4250 = vpop.permute.xlu0 %4249
  %v4252 = vmul.f32 %v3615, %v4190
  %v4253 = vmul.f32 %v3614, %v4194
  %v4254 = vmul.f32 %v3613, %v4198
  %v4255 = vmul.f32 %v3612, %v4202
  %v4256 = vmul.f32 %v3611, %v4206
  %v4257 = vmul.f32 %v3610, %v4210
  %v4258 = vmul.f32 %v3609, %v4214
  %v4259 = vmul.f32 %v3608, %v4218
  %v4260 = vmul.f32 %v3607, %v4222
  %v4261 = vmul.f32 %v3606, %v4226
  %v4262 = vmul.f32 %v3605, %v4230
  %v4263 = vmul.f32 %v3604, %v4234
  %v4264 = vmul.f32 %v3603, %v4238
  %v4265 = vmul.f32 %v3602, %v4242
  %v4266 = vmul.f32 %v3617, %v4246
  %v4267 = vmul.f32 %v3616, %v4250
  %v4268 = vld [vmem:[%s13 + $0x8] sm:$0x1]
  %v4269 = vperm.slane %v4268, 0
  %v4270 = vmul.f32 %v4252, %v4269
  %v4271 = vmul.f32 %v4253, %v4269
  %v4272 = vmul.f32 %v4254, %v4269
  %v4273 = vmul.f32 %v4255, %v4269
  %v4274 = vmul.f32 %v4256, %v4269
  %v4275 = vmul.f32 %v4257, %v4269
  %v4276 = vmul.f32 %v4258, %v4269
  %v4277 = vmul.f32 %v4259, %v4269
  %v4278 = vmul.f32 %v4260, %v4269
  %v4279 = vmul.f32 %v4261, %v4269
  %v4280 = vmul.f32 %v4262, %v4269
  %v4281 = vmul.f32 %v4263, %v4269
  %v4282 = vmul.f32 %v4264, %v4269
  %v4283 = vmul.f32 %v4265, %v4269
  %v4284 = vmul.f32 %v4266, %v4269
  %v4285 = vmul.f32 %v4267, %v4269
  %v4286 = vadd.f32 %v4172, %v4270
  %v4287 = vadd.f32 %v4173, %v4271
  %v4288 = vadd.f32 %v4174, %v4272
  %v4289 = vadd.f32 %v4175, %v4273
  %v4290 = vadd.f32 %v4176, %v4274
  %v4291 = vadd.f32 %v4177, %v4275
  %v4292 = vadd.f32 %v4178, %v4276
  %v4293 = vadd.f32 %v4179, %v4277
  %v4294 = vadd.f32 %v4180, %v4278
  %v4295 = vadd.f32 %v4181, %v4279
  %v4296 = vadd.f32 %v4182, %v4280
  %v4297 = vadd.f32 %v4183, %v4281
  %v4298 = vadd.f32 %v4184, %v4282
  %v4299 = vadd.f32 %v4185, %v4283
  %v4300 = vadd.f32 %v4186, %v4284
  %v4301 = vadd.f32 %v4187, %v4285
  %v4302 = vld [vmem:[%s14] sm:$0x1]
  %v4304 = vperm.slane %v4302, 0
  %v4306 = vadd.f32 %v4286, %v4304
  %v4307 = vadd.f32 %v4287, %v4304
  %v4308 = vadd.f32 %v4288, %v4304
  %v4309 = vadd.f32 %v4289, %v4304
  %v4310 = vadd.f32 %v4290, %v4304
  %v4311 = vadd.f32 %v4291, %v4304
  %v4312 = vadd.f32 %v4292, %v4304
  %v4313 = vadd.f32 %v4293, %v4304
  %v4314 = vadd.f32 %v4294, %v4304
  %v4315 = vadd.f32 %v4295, %v4304
  %v4316 = vadd.f32 %v4296, %v4304
  %v4317 = vadd.f32 %v4297, %v4304
  %v4318 = vadd.f32 %v4298, %v4304
  %v4319 = vadd.f32 %v4299, %v4304
  %v4320 = vadd.f32 %v4300, %v4304
  %v4321 = vadd.f32 %v4301, %v4304
  %v4322 = vmul.f32 %v4306, 0.5
  %v4323 = vmul.f32 %v4307, 0.5
  %v4324 = vmul.f32 %v4308, 0.5
  %v4325 = vmul.f32 %v4309, 0.5
  %v4326 = vmul.f32 %v4310, 0.5
  %v4327 = vmul.f32 %v4311, 0.5
  %v4328 = vmul.f32 %v4312, 0.5
  %v4329 = vmul.f32 %v4313, 0.5
  %v4330 = vmul.f32 %v4314, 0.5
  %v4331 = vmul.f32 %v4315, 0.5
  %v4332 = vmul.f32 %v4316, 0.5
  %v4333 = vmul.f32 %v4317, 0.5
  %v4334 = vmul.f32 %v4318, 0.5
  %v4335 = vmul.f32 %v4319, 0.5
  %v4336 = vmul.f32 %v4320, 0.5
  %v4337 = vmul.f32 %v4321, 0.5
  %v4338 = vmul.f32 %v4306, 0.044715
  %v4339 = vmul.f32 %v4307, 0.044715
  %v4340 = vmul.f32 %v4308, 0.044715
  %v4341 = vmul.f32 %v4309, 0.044715
  %v4342 = vmul.f32 %v4310, 0.044715
  %v4343 = vmul.f32 %v4311, 0.044715
  %v4344 = vmul.f32 %v4312, 0.044715
  %v4345 = vmul.f32 %v4313, 0.044715
  %v4346 = vmul.f32 %v4314, 0.044715
  %v4347 = vmul.f32 %v4315, 0.044715
  %v4348 = vmul.f32 %v4316, 0.044715
  %v4349 = vmul.f32 %v4317, 0.044715
  %v4350 = vmul.f32 %v4318, 0.044715
  %v4351 = vmul.f32 %v4319, 0.044715
  %v4352 = vmul.f32 %v4320, 0.044715
  %v4353 = vmul.f32 %v4321, 0.044715
  %v4354 = vmul.f32 %v4338, %v4306
  %v4355 = vmul.f32 %v4339, %v4307
  %v4356 = vmul.f32 %v4340, %v4308
  %v4357 = vmul.f32 %v4341, %v4309
  %v4358 = vmul.f32 %v4342, %v4310
  %v4359 = vmul.f32 %v4343, %v4311
  %v4360 = vmul.f32 %v4344, %v4312
  %v4361 = vmul.f32 %v4345, %v4313
  %v4362 = vmul.f32 %v4346, %v4314
  %v4363 = vmul.f32 %v4347, %v4315
  %v4364 = vmul.f32 %v4348, %v4316
  %v4365 = vmul.f32 %v4349, %v4317
  %v4366 = vmul.f32 %v4350, %v4318
  %v4367 = vmul.f32 %v4351, %v4319
  %v4368 = vmul.f32 %v4352, %v4320
  %v4369 = vmul.f32 %v4353, %v4321
  %v4370 = vmul.f32 %v4354, %v4306
  %v4371 = vmul.f32 %v4355, %v4307
  %v4372 = vmul.f32 %v4356, %v4308
  %v4373 = vmul.f32 %v4357, %v4309
  %v4374 = vmul.f32 %v4358, %v4310
  %v4375 = vmul.f32 %v4359, %v4311
  %v4376 = vmul.f32 %v4360, %v4312
  %v4377 = vmul.f32 %v4361, %v4313
  %v4378 = vmul.f32 %v4362, %v4314
  %v4379 = vmul.f32 %v4363, %v4315
  %v4380 = vmul.f32 %v4364, %v4316
  %v4381 = vmul.f32 %v4365, %v4317
  %v4382 = vmul.f32 %v4366, %v4318
  %v4383 = vmul.f32 %v4367, %v4319
  %v4384 = vmul.f32 %v4368, %v4320
  %v4385 = vmul.f32 %v4369, %v4321
  %v4386 = vadd.f32 %v4306, %v4370
  %v4387 = vadd.f32 %v4307, %v4371
  %v4388 = vadd.f32 %v4308, %v4372
  %v4389 = vadd.f32 %v4309, %v4373
  %v4390 = vadd.f32 %v4310, %v4374
  %v4391 = vadd.f32 %v4311, %v4375
  %v4392 = vadd.f32 %v4312, %v4376
  %v4393 = vadd.f32 %v4313, %v4377
  %v4394 = vadd.f32 %v4314, %v4378
  %v4395 = vadd.f32 %v4315, %v4379
  %v4396 = vadd.f32 %v4316, %v4380
  %v4397 = vadd.f32 %v4317, %v4381
  %v4398 = vadd.f32 %v4318, %v4382
  %v4399 = vadd.f32 %v4319, %v4383
  %v4400 = vadd.f32 %v4320, %v4384
  %v4401 = vadd.f32 %v4321, %v4385
  %v4402 = vmul.f32 %v4386, 0.7978846
  %v4403 = vmul.f32 %v4387, 0.7978846
  %v4404 = vmul.f32 %v4388, 0.7978846
  %v4405 = vmul.f32 %v4389, 0.7978846
  %v4406 = vmul.f32 %v4390, 0.7978846
  %v4407 = vmul.f32 %v4391, 0.7978846
  %v4408 = vmul.f32 %v4392, 0.7978846
  %v4409 = vmul.f32 %v4393, 0.7978846
  %v4410 = vmul.f32 %v4394, 0.7978846
  %v4411 = vmul.f32 %v4395, 0.7978846
  %v4412 = vmul.f32 %v4396, 0.7978846
  %v4413 = vmul.f32 %v4397, 0.7978846
  %v4414 = vmul.f32 %v4398, 0.7978846
  %v4415 = vmul.f32 %v4399, 0.7978846
  %v4416 = vmul.f32 %v4400, 0.7978846
  %v4417 = vmul.f32 %v4401, 0.7978846
  %v4418 = vtanh.pop %v4402
  %v4419 = vtanh.pop %v4403
  %v4420 = vtanh.pop %v4404
  %v4421 = vtanh.pop %v4405
  %v4422 = vtanh.pop %v4406
  %v4423 = vtanh.pop %v4407
  %v4424 = vtanh.pop %v4408
  %v4425 = vtanh.pop %v4409
  %v4426 = vtanh.pop %v4410
  %v4427 = vtanh.pop %v4411
  %v4428 = vtanh.pop %v4412
  %v4429 = vtanh.pop %v4413
  %v4430 = vtanh.pop %v4414
  %v4431 = vtanh.pop %v4415
  %v4432 = vtanh.pop %v4416
  %v4433 = vtanh.pop %v4417
  %v4434 = vadd.f32 %v4418, 1.0
  %v4435 = vadd.f32 %v4419, 1.0
  %v4436 = vadd.f32 %v4420, 1.0
  %v4437 = vadd.f32 %v4421, 1.0
  %v4438 = vadd.f32 %v4422, 1.0
  %v4439 = vadd.f32 %v4423, 1.0
  %v4440 = vadd.f32 %v4424, 1.0
  %v4441 = vadd.f32 %v4425, 1.0
  %v4442 = vadd.f32 %v4426, 1.0
  %v4443 = vadd.f32 %v4427, 1.0
  %v4444 = vadd.f32 %v4428, 1.0
  %v4445 = vadd.f32 %v4429, 1.0
  %v4446 = vadd.f32 %v4430, 1.0
  %v4447 = vadd.f32 %v4431, 1.0
  %v4448 = vadd.f32 %v4432, 1.0
  %v4449 = vadd.f32 %v4433, 1.0
  %v4450 = vmul.f32 %v4322, %v4434
  %v4451 = vmul.f32 %v4323, %v4435
  %v4452 = vmul.f32 %v4324, %v4436
  %v4453 = vmul.f32 %v4325, %v4437
  %v4454 = vmul.f32 %v4326, %v4438
  %v4455 = vmul.f32 %v4327, %v4439
  %v4456 = vmul.f32 %v4328, %v4440
  %v4457 = vmul.f32 %v4329, %v4441
  %v4458 = vmul.f32 %v4330, %v4442
  %v4459 = vmul.f32 %v4331, %v4443
  %v4460 = vmul.f32 %v4332, %v4444
  %v4461 = vmul.f32 %v4333, %v4445
  %v4462 = vmul.f32 %v4334, %v4446
  %v4463 = vmul.f32 %v4335, %v4447
  %v4464 = vmul.f32 %v4336, %v4448
  %v4465 = vmul.f32 %v4337, %v4449
  %v4466 = vld [vmem:[%s15] sm:$0xff]
  %v4467 = vld [vmem:[%s15 + $0x8] sm:$0xff]
  %v4468 = vld [vmem:[%s15 + $0x10] sm:$0xff]
  %v4469 = vld [vmem:[%s15 + $0x18] sm:$0xff]
  %v4470 = vld [vmem:[%s15 + $0x20] sm:$0xff]
  %v4471 = vld [vmem:[%s15 + $0x28] sm:$0xff]
  %v4472 = vld [vmem:[%s15 + $0x30] sm:$0xff]
  %v4473 = vld [vmem:[%s15 + $0x38] sm:$0xff]
  %v4474 = vld [vmem:[%s15 + $0x40] sm:$0xff]
  %v4475 = vld [vmem:[%s15 + $0x48] sm:$0xff]
  %v4476 = vld [vmem:[%s15 + $0x50] sm:$0xff]
  %v4477 = vld [vmem:[%s15 + $0x58] sm:$0xff]
  %v4478 = vld [vmem:[%s15 + $0x60] sm:$0xff]
  %v4479 = vld [vmem:[%s15 + $0x68] sm:$0xff]
  %v4480 = vld [vmem:[%s15 + $0x70] sm:$0xff]
  %v4481 = vld [vmem:[%s15 + $0x78] sm:$0xff]
  %v4482 = vld [vmem:[%s16] sm:$0x1]
  %v4484 = vperm.slane %v4482, 0
  %4486 = vmatpush.msra.mxu0 %v4481
  %4487 = vmatpush.msra.mxu0 %v4480
  %4488 = vmatpush.msra.mxu0 %v4479
  %4489 = vmatpush.msra.mxu0 %v4478
  %4490 = vmatpush.msra.mxu0 %v4477
  %4491 = vmatpush.msra.mxu0 %v4476
  %4492 = vmatpush.msra.mxu0 %v4475
  %4493 = vmatpush.msra.mxu0 %v4474
  %4494 = vmatpush.msra.mxu0 %v4473
  %4495 = vmatpush.msra.mxu0 %v4472
  %4496 = vmatpush.msra.mxu0 %v4471
  %4497 = vmatpush.msra.mxu0 %v4470
  %4498 = vmatpush.msra.mxu0 %v4469
  %4499 = vmatpush.msra.mxu0 %v4468
  %4500 = vmatpush.msra.mxu0 %v4467
  %4501 = vmatpush.msra.mxu0 %v4466
  %4502 = vmatmul.f32.gmra.mxu0 %v4450
  %v4503 = vpop.f32.mrf.mxu0
  %v4504 = vadd.f32 %v4484, %v4503
  %4505 = vmatmul.f32.gmra.mxu0 %v4451
  %v4506 = vpop.f32.mrf.mxu0
  %v4507 = vadd.f32 %v4484, %v4506
  %4508 = vmatmul.f32.gmra.mxu0 %v4452
  %v4509 = vpop.f32.mrf.mxu0
  %v4510 = vadd.f32 %v4484, %v4509
  %4511 = vmatmul.f32.gmra.mxu0 %v4453
  %v4512 = vpop.f32.mrf.mxu0
  %v4513 = vadd.f32 %v4484, %v4512
  %4514 = vmatmul.f32.gmra.mxu0 %v4454
  %v4515 = vpop.f32.mrf.mxu0
  %v4516 = vadd.f32 %v4484, %v4515
  %4517 = vmatmul.f32.gmra.mxu0 %v4455
  %v4518 = vpop.f32.mrf.mxu0
  %v4519 = vadd.f32 %v4484, %v4518
  %4520 = vmatmul.f32.gmra.mxu0 %v4456
  %v4521 = vpop.f32.mrf.mxu0
  %v4522 = vadd.f32 %v4484, %v4521
  %4523 = vmatmul.f32.gmra.mxu0 %v4457
  %v4524 = vpop.f32.mrf.mxu0
  %v4525 = vadd.f32 %v4484, %v4524
  %4526 = vmatmul.f32.gmra.mxu0 %v4458
  %v4527 = vpop.f32.mrf.mxu0
  %v4528 = vadd.f32 %v4484, %v4527
  %4529 = vmatmul.f32.gmra.mxu0 %v4459
  %v4530 = vpop.f32.mrf.mxu0
  %v4531 = vadd.f32 %v4484, %v4530
  %4532 = vmatmul.f32.gmra.mxu0 %v4460
  %v4533 = vpop.f32.mrf.mxu0
  %v4534 = vadd.f32 %v4484, %v4533
  %4535 = vmatmul.f32.gmra.mxu0 %v4461
  %v4536 = vpop.f32.mrf.mxu0
  %v4537 = vadd.f32 %v4484, %v4536
  %4538 = vmatmul.f32.gmra.mxu0 %v4462
  %v4539 = vpop.f32.mrf.mxu0
  %v4540 = vadd.f32 %v4484, %v4539
  %4541 = vmatmul.f32.gmra.mxu0 %v4463
  %v4542 = vpop.f32.mrf.mxu0
  %v4543 = vadd.f32 %v4484, %v4542
  %4544 = vmatmul.f32.gmra.mxu0 %v4464
  %v4545 = vpop.f32.mrf.mxu0
  %v4546 = vadd.f32 %v4484, %v4545
  %4547 = vmatmul.f32.gmra.mxu0 %v4465
  %v4548 = vpop.f32.mrf.mxu0
  %v4549 = vadd.f32 %v4484, %v4548
  %4550 = vdwg.mxu0
  %v4551 = vadd.f32 %v2711, %v4504
  %v4552 = vadd.f32 %v2712, %v4507
  %v4553 = vadd.f32 %v2713, %v4510
  %v4554 = vadd.f32 %v2714, %v4513
  %v4555 = vadd.f32 %v2715, %v4516
  %v4556 = vadd.f32 %v2716, %v4519
  %v4557 = vadd.f32 %v2717, %v4522
  %v4558 = vadd.f32 %v2718, %v4525
  %v4559 = vadd.f32 %v2719, %v4528
  %v4560 = vadd.f32 %v2720, %v4531
  %v4561 = vadd.f32 %v2721, %v4534
  %v4562 = vadd.f32 %v2722, %v4537
  %v4563 = vadd.f32 %v2723, %v4540
  %v4564 = vadd.f32 %v2724, %v4543
  %v4565 = vadd.f32 %v2725, %v4546
  %v4566 = vadd.f32 %v2726, %v4549
  %4567 = vst.msk [vmem:[%s17] sm:$0xff] %vm74, %v4551
  %4568 = vst.msk [vmem:[%s17 + $0x8] sm:$0xff] %vm74, %v4552
  %4569 = vst.msk [vmem:[%s17 + $0x10] sm:$0xff] %vm74, %v4553
  %4570 = vst.msk [vmem:[%s17 + $0x18] sm:$0xff] %vm74, %v4554
  %4571 = vst.msk [vmem:[%s17 + $0x20] sm:$0xff] %vm74, %v4555
  %4572 = vst.msk [vmem:[%s17 + $0x28] sm:$0xff] %vm74, %v4556
  %4573 = vst.msk [vmem:[%s17 + $0x30] sm:$0xff] %vm74, %v4557
  %4574 = vst.msk [vmem:[%s17 + $0x38] sm:$0xff] %vm74, %v4558
  %4575 = vst.msk [vmem:[%s17 + $0x40] sm:$0xff] %vm74, %v4559
  %4576 = vst.msk [vmem:[%s17 + $0x48] sm:$0xff] %vm74, %v4560
  %4577 = vst.msk [vmem:[%s17 + $0x50] sm:$0xff] %vm74, %v4561
  %4578 = vst.msk [vmem:[%s17 + $0x58] sm:$0xff] %vm74, %v4562
  %4579 = vst.msk [vmem:[%s17 + $0x60] sm:$0xff] %vm74, %v4563
  %4580 = vst.msk [vmem:[%s17 + $0x68] sm:$0xff] %vm74, %v4564
  %4581 = vst.msk [vmem:[%s17 + $0x70] sm:$0xff] %vm74, %v4565
  %4582 = vst.msk [vmem:[%s17 + $0x78] sm:$0xff] %vm74, %v4566
  // Predicated region
  $region70: #{tpu_custom_call.1} parent=0 // pred_check
    _
  $region71: #{tpu_custom_call.1} parent=0 // pred_check_branch
    %4584 = sbr.rel (0) target = $region73
  $region72: #{tpu_custom_call.1} parent=0 // pred_region
    _
  $region73: #{tpu_custom_call.1} parent=0 // pred_fallthru
    _
  // Predicated region
  $region74: #{tpu_custom_call.1} parent=0 // pred_check
    _
  $region75: #{tpu_custom_call.1} parent=0 // pred_check_branch
    %4586 = sbr.rel (0) target = $region77
  $region76: #{tpu_custom_call.1} parent=0 // pred_region
    _
  $region77: #{tpu_custom_call.1} parent=0 // pred_fallthru
    _

</llo_original>
